<compile_context>
chip_gen: v5e
topology: v5e:2x2
jax: 0.10.0
libtpu: 0.0.40
codegen_flags: <defaults>
</compile_context>

<pallas_src>
import jax
import jax.numpy as jnp
from jax import lax
from jax.experimental import pallas as pl
from jax.experimental.pallas import tpu as pltpu

_SUBLANE = 8
_LANE = 128


def _round_up(x, m):
    return (x + m - 1) // m * m


# ------------------------------ fused kernel ---------------------------------
def _fused_lstm_kernel(x_ref, wih0_ref, wihr_ref, whh_ref, b_ref,
                       w1_ref, b1_ref, w2_ref, b2_ref,
                       out_ref,
                       act_scr, gx_scr, h_scr, c_scr):
    """L stacked LSTM layers over T steps + MLP head, fully VMEM-resident.

    x_ref:    (T*Bp, D)     time-major, batch-padded input
    wih0_ref: (D, 4H)       layer-0 W_ih^T, gate order (i,f,o,g)
    wihr_ref: (max(L-1,1), H, 4H) layers 1.. W_ih^T
    whh_ref:  (L, H, 4H)    W_hh^T
    b_ref:    (L, 1, 4H)    b_ih + b_hh (folded)
    w1_ref:   (H, F1p)      fc1^T lane-padded;  b1_ref: (1, F1p)
    w2_ref:   (F1p, Op)     fc2^T lane-padded;  b2_ref: (1, Op)
    out_ref:  (Bp, Op)      lane-dense output slab (only [:B, 0] meaningful)
    act_scr:  (T*Bp, H)     previous layer's outputs (layers 0..L-2 write it)
    gx_scr:   (T*Bp, 4H)    precomputed input projection for all timesteps
    h_scr, c_scr: (Bp, H)   recurrent state
    """
    Bp, H = h_scr.shape
    T = x_ref.shape[0] // Bp
    L = whh_ref.shape[0]
    H3 = 3 * H
    unroll = True if T <= 32 else 8

    for l in range(L):                      # L is small & static -> unrolled
        # Input projection (+ folded biases) for all T timesteps in one MXU
        # matmul, off the serial critical path.  Layer 0 reads x_ref directly
        # (no prologue copy into act_scr).
        if l == 0:
            gx_scr[...] = jnp.dot(x_ref[...], wih0_ref[...],
                                  preferred_element_type=jnp.float32) + b_ref[0]
        else:
            gx_scr[...] = jnp.dot(act_scr[...], wihr_ref[l - 1],
                                  preferred_element_type=jnp.float32) + b_ref[l]

        h_scr[...] = jnp.zeros_like(h_scr)
        c_scr[...] = jnp.zeros_like(c_scr)
        # Hoist the (H,4H) recurrent weight out of the time loop (4 vregs at H=32).
        # TODO(synk): at H >= 128 keep the matmul reading whh_ref[l] directly to
        # avoid vreg spills, or hold W_hh MXU-resident via pltpu.matmul_push_rhs.
        whh_l = whh_ref[l]
        write_act = l < L - 1               # last layer's per-step writes are dead

        def step(t, carry, whh_l=whh_l, write_act=write_act):
            row = pl.multiple_of(t * Bp, Bp)
            gates = gx_scr[pl.ds(row, Bp), :] + jnp.dot(
                h_scr[...], whh_l, preferred_element_type=jnp.float32)
            # Gate order pre-permuted to (i, f, o, g): one sigmoid + one tanh.
            sig = jax.nn.sigmoid(gates[:, :H3])
            g_g = jnp.tanh(gates[:, H3:])
            i_g = sig[:, 0 * H:1 * H]
            f_g = sig[:, 1 * H:2 * H]
            o_g = sig[:, 2 * H:H3]
            c_new = f_g * c_scr[...] + i_g * g_g
            h_new = o_g * jnp.tanh(c_new)
            c_scr[...] = c_new
            h_scr[...] = h_new
            if write_act:                   # becomes next layer's input
                act_scr[pl.ds(row, Bp), :] = h_new
            return carry

        lax.fori_loop(0, T, step, None, unroll=unroll)

    # ----- MLP head fused onto the last step (dropout = eval-mode identity) --
    h_last = h_scr[...]                                           # (Bp, H)
    z = jnp.maximum(
        jnp.dot(h_last, w1_ref[...], preferred_element_type=jnp.float32)
        + b1_ref[...], 0.0)                                       # relu(fc1)
    out_ref[...] = (jnp.dot(z, w2_ref[...],
                            preferred_element_type=jnp.float32) + b2_ref[...])


# --------------------------- one-time weight prep -----------------------------
def _reorder_ifgo_to_ifog(w, H):
    """Permute last-dim gate columns from PyTorch (i,f,g,o) to (i,f,o,g)."""
    return jnp.concatenate(
        [w[..., :2 * H], w[..., 3 * H:4 * H], w[..., 2 * H:3 * H]], axis=-1)


def prepare_params(params):
    """Transpose / gate-reorder / pad / stack weights once, outside the fwd path."""
    H = params["lstm"][0][1].shape[1]

    wih_list, whh_list, b_list = [], [], []
    for (w_ih, w_hh, b_ih, b_hh) in params["lstm"]:
        wih_list.append(_reorder_ifgo_to_ifog(w_ih.T.astype(jnp.float32), H))
        whh_list.append(_reorder_ifgo_to_ifog(w_hh.T.astype(jnp.float32), H))
        b_list.append(_reorder_ifgo_to_ifog(
            (b_ih + b_hh).astype(jnp.float32).reshape(1, 4 * H), H))

    wih0 = wih_list[0]                                         # (D, 4H)
    if len(wih_list) > 1:
        wihr = jnp.stack(wih_list[1:])                         # (L-1, H, 4H)
    else:
        wihr = jnp.zeros((1, H, 4 * H), jnp.float32)           # dummy, never read

    w1, b1 = params["fc1"]                 # (F1, H), (F1,)
    w2, b2 = params["fc2"]                 # (1, F1), (1,)
    F1 = w1.shape[0]
    F1p = _round_up(F1, _LANE)             # lane-pad fc1 output
    OUTp = _LANE                           # lane-dense final output slab
    w1p = jnp.zeros((H, F1p), jnp.float32).at[:, :F1].set(w1.T)
    b1p = jnp.zeros((1, F1p), jnp.float32).at[0, :F1].set(b1)
    w2p = jnp.zeros((F1p, OUTp), jnp.float32).at[:F1, 0].set(w2[0])
    b2p = jnp.zeros((1, OUTp), jnp.float32).at[0, 0].set(b2[0])

    return dict(wih0=wih0, wihr=wihr,
                whh=jnp.stack(whh_list),       # (L, H, 4H)
                b=jnp.stack(b_list),           # (L, 1, 4H)
                w1=w1p, b1=b1p, w2=w2p, b2=b2p)


# -------------------------------- full forward --------------------------------
@jax.jit
def lstm_model_forward(x, prep):
    """x: (B, T, D) batch_first, like the PyTorch module; prep: prepare_params()."""
    wih0, wihr, whh, b = prep["wih0"], prep["wihr"], prep["whh"], prep["b"]
    w1, b1, w2, b2 = prep["w1"], prep["b1"], prep["w2"], prep["b2"]
    B, T, D = x.shape
    L, H, G = whh.shape                    # G == 4*H
    F1p = w1.shape[1]
    OUTp = w2.shape[1]
    Bp = _round_up(B, _SUBLANE)            # full sublanes, no masked rows

    # time-major, batch padded to Bp: one transpose + one pad + free reshape
    xt = jnp.transpose(x.astype(jnp.float32), (1, 0, 2))          # (T, B, D)
    x_flat = jnp.pad(xt, ((0, 0), (0, Bp - B), (0, 0))).reshape(T * Bp, D)

    out_padded = pl.pallas_call(
        _fused_lstm_kernel,
        out_shape=jax.ShapeDtypeStruct((Bp, OUTp), jnp.float32),
        in_specs=[
            pl.BlockSpec((T * Bp, D), lambda: (0, 0)),
            pl.BlockSpec((D, G), lambda: (0, 0)),
            pl.BlockSpec(wihr.shape, lambda: (0, 0, 0)),
            pl.BlockSpec((L, H, G), lambda: (0, 0, 0)),
            pl.BlockSpec((L, 1, G), lambda: (0, 0, 0)),
            pl.BlockSpec((H, F1p), lambda: (0, 0)),
            pl.BlockSpec((1, F1p), lambda: (0, 0)),
            pl.BlockSpec((F1p, OUTp), lambda: (0, 0)),
            pl.BlockSpec((1, OUTp), lambda: (0, 0)),
        ],
        out_specs=pl.BlockSpec((Bp, OUTp), lambda: (0, 0)),
        scratch_shapes=[
            pltpu.VMEM((T * Bp, H), jnp.float32),   # layer-output activation slab
            pltpu.VMEM((T * Bp, G), jnp.float32),   # precomputed input projection
            pltpu.VMEM((Bp, H), jnp.float32),       # h state
            pltpu.VMEM((Bp, H), jnp.float32),       # c state
        ],
    )(x_flat, wih0, wihr, whh, b, w1, b1, w2, b2)
    # TODO(synk): for scaled-up H/T/B (esp. v7x 64 MiB VMEM) time-block the gx
    # precompute, set pltpu.CompilerParams(vmem_limit_bytes=...), and add a
    # batch-block grid axis marked "parallel" to engage the second TensorCore.
    return out_padded[:B, :1]


# ------------------------------- pure-JAX reference ----------------------------
def lstm_model_ref(x, params):
    B = x.shape[0]
    h_seq = jnp.transpose(x, (1, 0, 2)).astype(jnp.float32)
    for (w_ih, w_hh, b_ih, b_hh) in params["lstm"]:
        H = w_hh.shape[1]

        def step(carry, x_t, w_ih=w_ih, w_hh=w_hh, b_ih=b_ih, b_hh=b_hh):
            h, c = carry
            gates = x_t @ w_ih.T + b_ih + h @ w_hh.T + b_hh
            i, f, g, o = jnp.split(gates, 4, axis=-1)
            i = jax.nn.sigmoid(i); f = jax.nn.sigmoid(f)
            g = jnp.tanh(g); o = jax.nn.sigmoid(o)
            c = f * c + i * g
            h = o * jnp.tanh(c)
            return (h, c), h

        init = (jnp.zeros((B, H), jnp.float32), jnp.zeros((B, H), jnp.float32))
        _, h_seq = lax.scan(step, init, h_seq)
    h_last = h_seq[-1]
    w1, b1 = params["fc1"]
    w2, b2 = params["fc2"]
    z = jnp.maximum(h_last @ w1.T + b1, 0.0)
    return z @ w2.T + b2


# ------------------------------- param init ------------------------------------
def init_params(key, input_dim, hidden_dim, num_layers):
    params = {"lstm": []}
    k = 1.0 / jnp.sqrt(jnp.float32(hidden_dim))
    for layer in range(num_layers):
        d_in = input_dim if layer == 0 else hidden_dim
        key, k1, k2, k3, k4 = jax.random.split(key, 5)
        w_ih = jax.random.uniform(k1, (4 * hidden_dim, d_in), jnp.float32, -k, k)
        w_hh = jax.random.uniform(k2, (4 * hidden_dim, hidden_dim), jnp.float32, -k, k)
        b_ih = jax.random.uniform(k3, (4 * hidden_dim,), jnp.float32, -k, k)
        b_hh = jax.random.uniform(k4, (4 * hidden_dim,), jnp.float32, -k, k)
        params["lstm"].append((w_ih, w_hh, b_ih, b_hh))
    key, k1, k2, k3, k4 = jax.random.split(key, 5)
    kf1 = 1.0 / jnp.sqrt(jnp.float32(hidden_dim))
    params["fc1"] = (jax.random.uniform(k1, (25, hidden_dim), jnp.float32, -kf1, kf1),
                     jax.random.uniform(k2, (25,), jnp.float32, -kf1, kf1))
    kf2 = 1.0 / jnp.sqrt(jnp.float32(25))
    params["fc2"] = (jax.random.uniform(k3, (1, 25), jnp.float32, -kf2, kf2),
                     jax.random.uniform(k4, (1,), jnp.float32, -kf2, kf2))
    return params


if __name__ == "__main__":
    B, T, D, H, L = 2, 8, 8, 32, 3   # small shapes: batch=2, seq=8, input=8, hidden=32
    key = jax.random.PRNGKey(0)
    key_x, key_p = jax.random.split(key)
    x = jax.random.normal(key_x, (B, T, D), jnp.float32)
    params = init_params(key_p, D, H, L)

    prep = prepare_params(params)            # one-time weight prep (outside fwd)
    out = lstm_model_forward(x, prep)
    out = jax.block_until_ready(out)

    ref = lstm_model_ref(x, params)
    assert out.shape == (B, 1), out.shape
    assert jnp.allclose(out, ref, rtol=1e-3, atol=1e-3), (out, ref)

    print("KERNEL_OK")
</pallas_src>

<mosaic_0001>
module attributes {stable_mosaic.version = 11 : i64} {
  func.func @_fused_lstm_kernel(%arg0: memref<64x8xf32, #tpu.memory_space<vmem>>, %arg1: memref<8x128xf32, #tpu.memory_space<vmem>>, %arg2: memref<2x32x128xf32, #tpu.memory_space<vmem>>, %arg3: memref<3x32x128xf32, #tpu.memory_space<vmem>>, %arg4: memref<3x1x128xf32, #tpu.memory_space<vmem>>, %arg5: memref<32x128xf32, #tpu.memory_space<vmem>>, %arg6: memref<1x128xf32, #tpu.memory_space<vmem>>, %arg7: memref<128x128xf32, #tpu.memory_space<vmem>>, %arg8: memref<1x128xf32, #tpu.memory_space<vmem>>, %arg9: memref<8x128xf32, #tpu.memory_space<vmem>>, %arg10: memref<64x32xf32, #tpu.memory_space<vmem>>, %arg11: memref<64x128xf32, #tpu.memory_space<vmem>>, %arg12: memref<8x32xf32, #tpu.memory_space<vmem>>, %arg13: memref<8x32xf32, #tpu.memory_space<vmem>>) attributes {dimension_semantics = [], scalar_prefetch = 0 : i64, scratch_operands = 4 : i64, tpu.core_type = #tpu.core_type<tc>} {
    %c0 = arith.constant 0 : index
    %c0_0 = arith.constant 0 : index
    %0 = vector.load %arg0[%c0, %c0_0] : memref<64x8xf32, #tpu.memory_space<vmem>>, vector<64x8xf32>
    %c0_1 = arith.constant 0 : index
    %c0_2 = arith.constant 0 : index
    %1 = vector.load %arg1[%c0_1, %c0_2] : memref<8x128xf32, #tpu.memory_space<vmem>>, vector<8x128xf32>
    %cst = arith.constant dense<0.000000e+00> : vector<64x128xf32>
    %2 = tpu.matmul %0, %1, %cst {dimension_numbers = #tpu.dot_dimension_numbers<[1], [0], [0], [1], [0, 0, 1, 1], [], []>} : vector<64x8xf32>, vector<8x128xf32>, vector<64x128xf32> -> vector<64x128xf32>
    %c0_3 = arith.constant 0 : index
    %c0_4 = arith.constant 0 : index
    %c0_5 = arith.constant 0 : index
    %3 = vector.load %arg4[%c0_3, %c0_4, %c0_5] : memref<3x1x128xf32, #tpu.memory_space<vmem>>, vector<1x1x128xf32>
    %4 = vector.shape_cast %3 : vector<1x1x128xf32> to vector<1x128xf32>
    %5 = vector.broadcast %4 : vector<1x128xf32> to vector<64x128xf32>
    %6 = arith.addf %2, %5 : vector<64x128xf32>
    %c0_6 = arith.constant 0 : index
    %c0_7 = arith.constant 0 : index
    %7 = vector.load %arg11[%c0_6, %c0_7] : memref<64x128xf32, #tpu.memory_space<vmem>>, vector<64x128xf32>
    tpu.vector_store %arg11[%c0_6, %c0_7], %6 {strides = array<i32>} : memref<64x128xf32, #tpu.memory_space<vmem>>, vector<64x128xf32>,
    %cst_8 = arith.constant 0.000000e+00 : f32
    %8 = vector.broadcast %cst_8 : f32 to vector<8x32xf32>
    %c0_9 = arith.constant 0 : index
    %c0_10 = arith.constant 0 : index
    %9 = vector.load %arg12[%c0_9, %c0_10] : memref<8x32xf32, #tpu.memory_space<vmem>>, vector<8x32xf32>
    tpu.vector_store %arg12[%c0_9, %c0_10], %8 {strides = array<i32>} : memref<8x32xf32, #tpu.memory_space<vmem>>, vector<8x32xf32>,
    %cst_11 = arith.constant 0.000000e+00 : f32
    %10 = vector.broadcast %cst_11 : f32 to vector<8x32xf32>
    %c0_12 = arith.constant 0 : index
    %c0_13 = arith.constant 0 : index
    %11 = vector.load %arg13[%c0_12, %c0_13] : memref<8x32xf32, #tpu.memory_space<vmem>>, vector<8x32xf32>
    tpu.vector_store %arg13[%c0_12, %c0_13], %10 {strides = array<i32>} : memref<8x32xf32, #tpu.memory_space<vmem>>, vector<8x32xf32>,
    %c0_14 = arith.constant 0 : index
    %c0_15 = arith.constant 0 : index
    %c0_16 = arith.constant 0 : index
    %12 = vector.load %arg3[%c0_14, %c0_15, %c0_16] : memref<3x32x128xf32, #tpu.memory_space<vmem>>, vector<1x32x128xf32>
    %13 = vector.shape_cast %12 : vector<1x32x128xf32> to vector<32x128xf32>
    %c0_i32 = arith.constant 0 : i32
    %c8_i32 = arith.constant 8 : i32
    %14 = arith.muli %c0_i32, %c8_i32 : i32
    %15 = tpu.assume_multiple %14, 8 : i32
    %16 = arith.index_cast %15 : i32 to index
    %c0_17 = arith.constant 0 : index
    %17 = vector.load %arg11[%16, %c0_17] : memref<64x128xf32, #tpu.memory_space<vmem>>, vector<8x128xf32>
    %c0_18 = arith.constant 0 : index
    %c0_19 = arith.constant 0 : index
    %18 = vector.load %arg12[%c0_18, %c0_19] : memref<8x32xf32, #tpu.memory_space<vmem>>, vector<8x32xf32>
    %cst_20 = arith.constant dense<0.000000e+00> : vector<8x128xf32>
    %19 = tpu.matmul %18, %13, %cst_20 {dimension_numbers = #tpu.dot_dimension_numbers<[1], [0], [0], [1], [0, 0, 1, 1], [], []>} : vector<8x32xf32>, vector<32x128xf32>, vector<8x128xf32> -> vector<8x128xf32>
    %20 = arith.addf %17, %19 : vector<8x128xf32>
    %21 = vector.extract_strided_slice %20 {offsets = [0, 0], sizes = [8, 96], strides = [1, 1]} : vector<8x128xf32> to vector<8x96xf32>
    %22 = arith.negf %21 : vector<8x96xf32>
    %23 = math.exp %22 : vector<8x96xf32>
    %cst_21 = arith.constant 1.000000e+00 : f32
    %24 = vector.broadcast %cst_21 : f32 to vector<8x96xf32>
    %25 = arith.addf %24, %23 : vector<8x96xf32>
    %26 = arith.divf %24, %25 : vector<8x96xf32>
    %27 = vector.extract_strided_slice %20 {offsets = [0, 96], sizes = [8, 32], strides = [1, 1]} : vector<8x128xf32> to vector<8x32xf32>
    %28 = math.tanh %27 : vector<8x32xf32>
    %29 = vector.extract_strided_slice %26 {offsets = [0, 0], sizes = [8, 32], strides = [1, 1]} : vector<8x96xf32> to vector<8x32xf32>
    %30 = vector.extract_strided_slice %26 {offsets = [0, 32], sizes = [8, 32], strides = [1, 1]} : vector<8x96xf32> to vector<8x32xf32>
    %31 = vector.extract_strided_slice %26 {offsets = [0, 64], sizes = [8, 32], strides = [1, 1]} : vector<8x96xf32> to vector<8x32xf32>
    %c0_22 = arith.constant 0 : index
    %c0_23 = arith.constant 0 : index
    %32 = vector.load %arg13[%c0_22, %c0_23] : memref<8x32xf32, #tpu.memory_space<vmem>>, vector<8x32xf32>
    %33 = arith.mulf %30, %32 : vector<8x32xf32>
    %34 = arith.mulf %29, %28 : vector<8x32xf32>
    %35 = arith.addf %33, %34 : vector<8x32xf32>
    %36 = math.tanh %35 : vector<8x32xf32>
    %37 = arith.mulf %31, %36 : vector<8x32xf32>
    %c0_24 = arith.constant 0 : index
    %c0_25 = arith.constant 0 : index
    %38 = vector.load %arg13[%c0_24, %c0_25] : memref<8x32xf32, #tpu.memory_space<vmem>>, vector<8x32xf32>
    tpu.vector_store %arg13[%c0_24, %c0_25], %35 {strides = array<i32>} : memref<8x32xf32, #tpu.memory_space<vmem>>, vector<8x32xf32>,
    %c0_26 = arith.constant 0 : index
    %c0_27 = arith.constant 0 : index
    %39 = vector.load %arg12[%c0_26, %c0_27] : memref<8x32xf32, #tpu.memory_space<vmem>>, vector<8x32xf32>
    tpu.vector_store %arg12[%c0_26, %c0_27], %37 {strides = array<i32>} : memref<8x32xf32, #tpu.memory_space<vmem>>, vector<8x32xf32>,
    %40 = arith.index_cast %15 : i32 to index
    %c0_28 = arith.constant 0 : index
    %41 = vector.load %arg10[%40, %c0_28] : memref<64x32xf32, #tpu.memory_space<vmem>>, vector<8x32xf32>
    tpu.vector_store %arg10[%40, %c0_28], %37 {strides = array<i32>} : memref<64x32xf32, #tpu.memory_space<vmem>>, vector<8x32xf32>,
    %c1_i32 = arith.constant 1 : i32
    %c8_i32_29 = arith.constant 8 : i32
    %42 = arith.muli %c1_i32, %c8_i32_29 : i32
    %43 = tpu.assume_multiple %42, 8 : i32
    %44 = arith.index_cast %43 : i32 to index
    %c0_30 = arith.constant 0 : index
    %45 = vector.load %arg11[%44, %c0_30] : memref<64x128xf32, #tpu.memory_space<vmem>>, vector<8x128xf32>
    %c0_31 = arith.constant 0 : index
    %c0_32 = arith.constant 0 : index
    %46 = vector.load %arg12[%c0_31, %c0_32] : memref<8x32xf32, #tpu.memory_space<vmem>>, vector<8x32xf32>
    %cst_33 = arith.constant dense<0.000000e+00> : vector<8x128xf32>
    %47 = tpu.matmul %46, %13, %cst_33 {dimension_numbers = #tpu.dot_dimension_numbers<[1], [0], [0], [1], [0, 0, 1, 1], [], []>} : vector<8x32xf32>, vector<32x128xf32>, vector<8x128xf32> -> vector<8x128xf32>
    %48 = arith.addf %45, %47 : vector<8x128xf32>
    %49 = vector.extract_strided_slice %48 {offsets = [0, 0], sizes = [8, 96], strides = [1, 1]} : vector<8x128xf32> to vector<8x96xf32>
    %50 = arith.negf %49 : vector<8x96xf32>
    %51 = math.exp %50 : vector<8x96xf32>
    %cst_34 = arith.constant 1.000000e+00 : f32
    %52 = vector.broadcast %cst_34 : f32 to vector<8x96xf32>
    %53 = arith.addf %52, %51 : vector<8x96xf32>
    %54 = arith.divf %52, %53 : vector<8x96xf32>
    %55 = vector.extract_strided_slice %48 {offsets = [0, 96], sizes = [8, 32], strides = [1, 1]} : vector<8x128xf32> to vector<8x32xf32>
    %56 = math.tanh %55 : vector<8x32xf32>
    %57 = vector.extract_strided_slice %54 {offsets = [0, 0], sizes = [8, 32], strides = [1, 1]} : vector<8x96xf32> to vector<8x32xf32>
    %58 = vector.extract_strided_slice %54 {offsets = [0, 32], sizes = [8, 32], strides = [1, 1]} : vector<8x96xf32> to vector<8x32xf32>
    %59 = vector.extract_strided_slice %54 {offsets = [0, 64], sizes = [8, 32], strides = [1, 1]} : vector<8x96xf32> to vector<8x32xf32>
    %c0_35 = arith.constant 0 : index
    %c0_36 = arith.constant 0 : index
    %60 = vector.load %arg13[%c0_35, %c0_36] : memref<8x32xf32, #tpu.memory_space<vmem>>, vector<8x32xf32>
    %61 = arith.mulf %58, %60 : vector<8x32xf32>
    %62 = arith.mulf %57, %56 : vector<8x32xf32>
    %63 = arith.addf %61, %62 : vector<8x32xf32>
    %64 = math.tanh %63 : vector<8x32xf32>
    %65 = arith.mulf %59, %64 : vector<8x32xf32>
    %c0_37 = arith.constant 0 : index
    %c0_38 = arith.constant 0 : index
    %66 = vector.load %arg13[%c0_37, %c0_38] : memref<8x32xf32, #tpu.memory_space<vmem>>, vector<8x32xf32>
    tpu.vector_store %arg13[%c0_37, %c0_38], %63 {strides = array<i32>} : memref<8x32xf32, #tpu.memory_space<vmem>>, vector<8x32xf32>,
    %c0_39 = arith.constant 0 : index
    %c0_40 = arith.constant 0 : index
    %67 = vector.load %arg12[%c0_39, %c0_40] : memref<8x32xf32, #tpu.memory_space<vmem>>, vector<8x32xf32>
    tpu.vector_store %arg12[%c0_39, %c0_40], %65 {strides = array<i32>} : memref<8x32xf32, #tpu.memory_space<vmem>>, vector<8x32xf32>,
    %68 = arith.index_cast %43 : i32 to index
    %c0_41 = arith.constant 0 : index
    %69 = vector.load %arg10[%68, %c0_41] : memref<64x32xf32, #tpu.memory_space<vmem>>, vector<8x32xf32>
    tpu.vector_store %arg10[%68, %c0_41], %65 {strides = array<i32>} : memref<64x32xf32, #tpu.memory_space<vmem>>, vector<8x32xf32>,
    %c2_i32 = arith.constant 2 : i32
    %c8_i32_42 = arith.constant 8 : i32
    %70 = arith.muli %c2_i32, %c8_i32_42 : i32
    %71 = tpu.assume_multiple %70, 8 : i32
    %72 = arith.index_cast %71 : i32 to index
    %c0_43 = arith.constant 0 : index
    %73 = vector.load %arg11[%72, %c0_43] : memref<64x128xf32, #tpu.memory_space<vmem>>, vector<8x128xf32>
    %c0_44 = arith.constant 0 : index
    %c0_45 = arith.constant 0 : index
    %74 = vector.load %arg12[%c0_44, %c0_45] : memref<8x32xf32, #tpu.memory_space<vmem>>, vector<8x32xf32>
    %cst_46 = arith.constant dense<0.000000e+00> : vector<8x128xf32>
    %75 = tpu.matmul %74, %13, %cst_46 {dimension_numbers = #tpu.dot_dimension_numbers<[1], [0], [0], [1], [0, 0, 1, 1], [], []>} : vector<8x32xf32>, vector<32x128xf32>, vector<8x128xf32> -> vector<8x128xf32>
    %76 = arith.addf %73, %75 : vector<8x128xf32>
    %77 = vector.extract_strided_slice %76 {offsets = [0, 0], sizes = [8, 96], strides = [1, 1]} : vector<8x128xf32> to vector<8x96xf32>
    %78 = arith.negf %77 : vector<8x96xf32>
    %79 = math.exp %78 : vector<8x96xf32>
    %cst_47 = arith.constant 1.000000e+00 : f32
    %80 = vector.broadcast %cst_47 : f32 to vector<8x96xf32>
    %81 = arith.addf %80, %79 : vector<8x96xf32>
    %82 = arith.divf %80, %81 : vector<8x96xf32>
    %83 = vector.extract_strided_slice %76 {offsets = [0, 96], sizes = [8, 32], strides = [1, 1]} : vector<8x128xf32> to vector<8x32xf32>
    %84 = math.tanh %83 : vector<8x32xf32>
    %85 = vector.extract_strided_slice %82 {offsets = [0, 0], sizes = [8, 32], strides = [1, 1]} : vector<8x96xf32> to vector<8x32xf32>
    %86 = vector.extract_strided_slice %82 {offsets = [0, 32], sizes = [8, 32], strides = [1, 1]} : vector<8x96xf32> to vector<8x32xf32>
    %87 = vector.extract_strided_slice %82 {offsets = [0, 64], sizes = [8, 32], strides = [1, 1]} : vector<8x96xf32> to vector<8x32xf32>
    %c0_48 = arith.constant 0 : index
    %c0_49 = arith.constant 0 : index
    %88 = vector.load %arg13[%c0_48, %c0_49] : memref<8x32xf32, #tpu.memory_space<vmem>>, vector<8x32xf32>
    %89 = arith.mulf %86, %88 : vector<8x32xf32>
    %90 = arith.mulf %85, %84 : vector<8x32xf32>
    %91 = arith.addf %89, %90 : vector<8x32xf32>
    %92 = math.tanh %91 : vector<8x32xf32>
    %93 = arith.mulf %87, %92 : vector<8x32xf32>
    %c0_50 = arith.constant 0 : index
    %c0_51 = arith.constant 0 : index
    %94 = vector.load %arg13[%c0_50, %c0_51] : memref<8x32xf32, #tpu.memory_space<vmem>>, vector<8x32xf32>
    tpu.vector_store %arg13[%c0_50, %c0_51], %91 {strides = array<i32>} : memref<8x32xf32, #tpu.memory_space<vmem>>, vector<8x32xf32>,
    %c0_52 = arith.constant 0 : index
    %c0_53 = arith.constant 0 : index
    %95 = vector.load %arg12[%c0_52, %c0_53] : memref<8x32xf32, #tpu.memory_space<vmem>>, vector<8x32xf32>
    tpu.vector_store %arg12[%c0_52, %c0_53], %93 {strides = array<i32>} : memref<8x32xf32, #tpu.memory_space<vmem>>, vector<8x32xf32>,
    %96 = arith.index_cast %71 : i32 to index
    %c0_54 = arith.constant 0 : index
    %97 = vector.load %arg10[%96, %c0_54] : memref<64x32xf32, #tpu.memory_space<vmem>>, vector<8x32xf32>
    tpu.vector_store %arg10[%96, %c0_54], %93 {strides = array<i32>} : memref<64x32xf32, #tpu.memory_space<vmem>>, vector<8x32xf32>,
    %c3_i32 = arith.constant 3 : i32
    %c8_i32_55 = arith.constant 8 : i32
    %98 = arith.muli %c3_i32, %c8_i32_55 : i32
    %99 = tpu.assume_multiple %98, 8 : i32
    %100 = arith.index_cast %99 : i32 to index
    %c0_56 = arith.constant 0 : index
    %101 = vector.load %arg11[%100, %c0_56] : memref<64x128xf32, #tpu.memory_space<vmem>>, vector<8x128xf32>
    %c0_57 = arith.constant 0 : index
    %c0_58 = arith.constant 0 : index
    %102 = vector.load %arg12[%c0_57, %c0_58] : memref<8x32xf32, #tpu.memory_space<vmem>>, vector<8x32xf32>
    %cst_59 = arith.constant dense<0.000000e+00> : vector<8x128xf32>
    %103 = tpu.matmul %102, %13, %cst_59 {dimension_numbers = #tpu.dot_dimension_numbers<[1], [0], [0], [1], [0, 0, 1, 1], [], []>} : vector<8x32xf32>, vector<32x128xf32>, vector<8x128xf32> -> vector<8x128xf32>
    %104 = arith.addf %101, %103 : vector<8x128xf32>
    %105 = vector.extract_strided_slice %104 {offsets = [0, 0], sizes = [8, 96], strides = [1, 1]} : vector<8x128xf32> to vector<8x96xf32>
    %106 = arith.negf %105 : vector<8x96xf32>
    %107 = math.exp %106 : vector<8x96xf32>
    %cst_60 = arith.constant 1.000000e+00 : f32
    %108 = vector.broadcast %cst_60 : f32 to vector<8x96xf32>
    %109 = arith.addf %108, %107 : vector<8x96xf32>
    %110 = arith.divf %108, %109 : vector<8x96xf32>
    %111 = vector.extract_strided_slice %104 {offsets = [0, 96], sizes = [8, 32], strides = [1, 1]} : vector<8x128xf32> to vector<8x32xf32>
    %112 = math.tanh %111 : vector<8x32xf32>
    %113 = vector.extract_strided_slice %110 {offsets = [0, 0], sizes = [8, 32], strides = [1, 1]} : vector<8x96xf32> to vector<8x32xf32>
    %114 = vector.extract_strided_slice %110 {offsets = [0, 32], sizes = [8, 32], strides = [1, 1]} : vector<8x96xf32> to vector<8x32xf32>
    %115 = vector.extract_strided_slice %110 {offsets = [0, 64], sizes = [8, 32], strides = [1, 1]} : vector<8x96xf32> to vector<8x32xf32>
    %c0_61 = arith.constant 0 : index
    %c0_62 = arith.constant 0 : index
    %116 = vector.load %arg13[%c0_61, %c0_62] : memref<8x32xf32, #tpu.memory_space<vmem>>, vector<8x32xf32>
    %117 = arith.mulf %114, %116 : vector<8x32xf32>
    %118 = arith.mulf %113, %112 : vector<8x32xf32>
    %119 = arith.addf %117, %118 : vector<8x32xf32>
    %120 = math.tanh %119 : vector<8x32xf32>
    %121 = arith.mulf %115, %120 : vector<8x32xf32>
    %c0_63 = arith.constant 0 : index
    %c0_64 = arith.constant 0 : index
    %122 = vector.load %arg13[%c0_63, %c0_64] : memref<8x32xf32, #tpu.memory_space<vmem>>, vector<8x32xf32>
    tpu.vector_store %arg13[%c0_63, %c0_64], %119 {strides = array<i32>} : memref<8x32xf32, #tpu.memory_space<vmem>>, vector<8x32xf32>,
    %c0_65 = arith.constant 0 : index
    %c0_66 = arith.constant 0 : index
    %123 = vector.load %arg12[%c0_65, %c0_66] : memref<8x32xf32, #tpu.memory_space<vmem>>, vector<8x32xf32>
    tpu.vector_store %arg12[%c0_65, %c0_66], %121 {strides = array<i32>} : memref<8x32xf32, #tpu.memory_space<vmem>>, vector<8x32xf32>,
    %124 = arith.index_cast %99 : i32 to index
    %c0_67 = arith.constant 0 : index
    %125 = vector.load %arg10[%124, %c0_67] : memref<64x32xf32, #tpu.memory_space<vmem>>, vector<8x32xf32>
    tpu.vector_store %arg10[%124, %c0_67], %121 {strides = array<i32>} : memref<64x32xf32, #tpu.memory_space<vmem>>, vector<8x32xf32>,
    %c4_i32 = arith.constant 4 : i32
    %c8_i32_68 = arith.constant 8 : i32
    %126 = arith.muli %c4_i32, %c8_i32_68 : i32
    %127 = tpu.assume_multiple %126, 8 : i32
    %128 = arith.index_cast %127 : i32 to index
    %c0_69 = arith.constant 0 : index
    %129 = vector.load %arg11[%128, %c0_69] : memref<64x128xf32, #tpu.memory_space<vmem>>, vector<8x128xf32>
    %c0_70 = arith.constant 0 : index
    %c0_71 = arith.constant 0 : index
    %130 = vector.load %arg12[%c0_70, %c0_71] : memref<8x32xf32, #tpu.memory_space<vmem>>, vector<8x32xf32>
    %cst_72 = arith.constant dense<0.000000e+00> : vector<8x128xf32>
    %131 = tpu.matmul %130, %13, %cst_72 {dimension_numbers = #tpu.dot_dimension_numbers<[1], [0], [0], [1], [0, 0, 1, 1], [], []>} : vector<8x32xf32>, vector<32x128xf32>, vector<8x128xf32> -> vector<8x128xf32>
    %132 = arith.addf %129, %131 : vector<8x128xf32>
    %133 = vector.extract_strided_slice %132 {offsets = [0, 0], sizes = [8, 96], strides = [1, 1]} : vector<8x128xf32> to vector<8x96xf32>
    %134 = arith.negf %133 : vector<8x96xf32>
    %135 = math.exp %134 : vector<8x96xf32>
    %cst_73 = arith.constant 1.000000e+00 : f32
    %136 = vector.broadcast %cst_73 : f32 to vector<8x96xf32>
    %137 = arith.addf %136, %135 : vector<8x96xf32>
    %138 = arith.divf %136, %137 : vector<8x96xf32>
    %139 = vector.extract_strided_slice %132 {offsets = [0, 96], sizes = [8, 32], strides = [1, 1]} : vector<8x128xf32> to vector<8x32xf32>
    %140 = math.tanh %139 : vector<8x32xf32>
    %141 = vector.extract_strided_slice %138 {offsets = [0, 0], sizes = [8, 32], strides = [1, 1]} : vector<8x96xf32> to vector<8x32xf32>
    %142 = vector.extract_strided_slice %138 {offsets = [0, 32], sizes = [8, 32], strides = [1, 1]} : vector<8x96xf32> to vector<8x32xf32>
    %143 = vector.extract_strided_slice %138 {offsets = [0, 64], sizes = [8, 32], strides = [1, 1]} : vector<8x96xf32> to vector<8x32xf32>
    %c0_74 = arith.constant 0 : index
    %c0_75 = arith.constant 0 : index
    %144 = vector.load %arg13[%c0_74, %c0_75] : memref<8x32xf32, #tpu.memory_space<vmem>>, vector<8x32xf32>
    %145 = arith.mulf %142, %144 : vector<8x32xf32>
    %146 = arith.mulf %141, %140 : vector<8x32xf32>
    %147 = arith.addf %145, %146 : vector<8x32xf32>
    %148 = math.tanh %147 : vector<8x32xf32>
    %149 = arith.mulf %143, %148 : vector<8x32xf32>
    %c0_76 = arith.constant 0 : index
    %c0_77 = arith.constant 0 : index
    %150 = vector.load %arg13[%c0_76, %c0_77] : memref<8x32xf32, #tpu.memory_space<vmem>>, vector<8x32xf32>
    tpu.vector_store %arg13[%c0_76, %c0_77], %147 {strides = array<i32>} : memref<8x32xf32, #tpu.memory_space<vmem>>, vector<8x32xf32>,
    %c0_78 = arith.constant 0 : index
    %c0_79 = arith.constant 0 : index
    %151 = vector.load %arg12[%c0_78, %c0_79] : memref<8x32xf32, #tpu.memory_space<vmem>>, vector<8x32xf32>
    tpu.vector_store %arg12[%c0_78, %c0_79], %149 {strides = array<i32>} : memref<8x32xf32, #tpu.memory_space<vmem>>, vector<8x32xf32>,
    %152 = arith.index_cast %127 : i32 to index
    %c0_80 = arith.constant 0 : index
    %153 = vector.load %arg10[%152, %c0_80] : memref<64x32xf32, #tpu.memory_space<vmem>>, vector<8x32xf32>
    tpu.vector_store %arg10[%152, %c0_80], %149 {strides = array<i32>} : memref<64x32xf32, #tpu.memory_space<vmem>>, vector<8x32xf32>,
    %c5_i32 = arith.constant 5 : i32
    %c8_i32_81 = arith.constant 8 : i32
    %154 = arith.muli %c5_i32, %c8_i32_81 : i32
    %155 = tpu.assume_multiple %154, 8 : i32
    %156 = arith.index_cast %155 : i32 to index
    %c0_82 = arith.constant 0 : index
    %157 = vector.load %arg11[%156, %c0_82] : memref<64x128xf32, #tpu.memory_space<vmem>>, vector<8x128xf32>
    %c0_83 = arith.constant 0 : index
    %c0_84 = arith.constant 0 : index
    %158 = vector.load %arg12[%c0_83, %c0_84] : memref<8x32xf32, #tpu.memory_space<vmem>>, vector<8x32xf32>
    %cst_85 = arith.constant dense<0.000000e+00> : vector<8x128xf32>
    %159 = tpu.matmul %158, %13, %cst_85 {dimension_numbers = #tpu.dot_dimension_numbers<[1], [0], [0], [1], [0, 0, 1, 1], [], []>} : vector<8x32xf32>, vector<32x128xf32>, vector<8x128xf32> -> vector<8x128xf32>
    %160 = arith.addf %157, %159 : vector<8x128xf32>
    %161 = vector.extract_strided_slice %160 {offsets = [0, 0], sizes = [8, 96], strides = [1, 1]} : vector<8x128xf32> to vector<8x96xf32>
    %162 = arith.negf %161 : vector<8x96xf32>
    %163 = math.exp %162 : vector<8x96xf32>
    %cst_86 = arith.constant 1.000000e+00 : f32
    %164 = vector.broadcast %cst_86 : f32 to vector<8x96xf32>
    %165 = arith.addf %164, %163 : vector<8x96xf32>
    %166 = arith.divf %164, %165 : vector<8x96xf32>
    %167 = vector.extract_strided_slice %160 {offsets = [0, 96], sizes = [8, 32], strides = [1, 1]} : vector<8x128xf32> to vector<8x32xf32>
    %168 = math.tanh %167 : vector<8x32xf32>
    %169 = vector.extract_strided_slice %166 {offsets = [0, 0], sizes = [8, 32], strides = [1, 1]} : vector<8x96xf32> to vector<8x32xf32>
    %170 = vector.extract_strided_slice %166 {offsets = [0, 32], sizes = [8, 32], strides = [1, 1]} : vector<8x96xf32> to vector<8x32xf32>
    %171 = vector.extract_strided_slice %166 {offsets = [0, 64], sizes = [8, 32], strides = [1, 1]} : vector<8x96xf32> to vector<8x32xf32>
    %c0_87 = arith.constant 0 : index
    %c0_88 = arith.constant 0 : index
    %172 = vector.load %arg13[%c0_87, %c0_88] : memref<8x32xf32, #tpu.memory_space<vmem>>, vector<8x32xf32>
    %173 = arith.mulf %170, %172 : vector<8x32xf32>
    %174 = arith.mulf %169, %168 : vector<8x32xf32>
    %175 = arith.addf %173, %174 : vector<8x32xf32>
    %176 = math.tanh %175 : vector<8x32xf32>
    %177 = arith.mulf %171, %176 : vector<8x32xf32>
    %c0_89 = arith.constant 0 : index
    %c0_90 = arith.constant 0 : index
    %178 = vector.load %arg13[%c0_89, %c0_90] : memref<8x32xf32, #tpu.memory_space<vmem>>, vector<8x32xf32>
    tpu.vector_store %arg13[%c0_89, %c0_90], %175 {strides = array<i32>} : memref<8x32xf32, #tpu.memory_space<vmem>>, vector<8x32xf32>,
    %c0_91 = arith.constant 0 : index
    %c0_92 = arith.constant 0 : index
    %179 = vector.load %arg12[%c0_91, %c0_92] : memref<8x32xf32, #tpu.memory_space<vmem>>, vector<8x32xf32>
    tpu.vector_store %arg12[%c0_91, %c0_92], %177 {strides = array<i32>} : memref<8x32xf32, #tpu.memory_space<vmem>>, vector<8x32xf32>,
    %180 = arith.index_cast %155 : i32 to index
    %c0_93 = arith.constant 0 : index
    %181 = vector.load %arg10[%180, %c0_93] : memref<64x32xf32, #tpu.memory_space<vmem>>, vector<8x32xf32>
    tpu.vector_store %arg10[%180, %c0_93], %177 {strides = array<i32>} : memref<64x32xf32, #tpu.memory_space<vmem>>, vector<8x32xf32>,
    %c6_i32 = arith.constant 6 : i32
    %c8_i32_94 = arith.constant 8 : i32
    %182 = arith.muli %c6_i32, %c8_i32_94 : i32
    %183 = tpu.assume_multiple %182, 8 : i32
    %184 = arith.index_cast %183 : i32 to index
    %c0_95 = arith.constant 0 : index
    %185 = vector.load %arg11[%184, %c0_95] : memref<64x128xf32, #tpu.memory_space<vmem>>, vector<8x128xf32>
    %c0_96 = arith.constant 0 : index
    %c0_97 = arith.constant 0 : index
    %186 = vector.load %arg12[%c0_96, %c0_97] : memref<8x32xf32, #tpu.memory_space<vmem>>, vector<8x32xf32>
    %cst_98 = arith.constant dense<0.000000e+00> : vector<8x128xf32>
    %187 = tpu.matmul %186, %13, %cst_98 {dimension_numbers = #tpu.dot_dimension_numbers<[1], [0], [0], [1], [0, 0, 1, 1], [], []>} : vector<8x32xf32>, vector<32x128xf32>, vector<8x128xf32> -> vector<8x128xf32>
    %188 = arith.addf %185, %187 : vector<8x128xf32>
    %189 = vector.extract_strided_slice %188 {offsets = [0, 0], sizes = [8, 96], strides = [1, 1]} : vector<8x128xf32> to vector<8x96xf32>
    %190 = arith.negf %189 : vector<8x96xf32>
    %191 = math.exp %190 : vector<8x96xf32>
    %cst_99 = arith.constant 1.000000e+00 : f32
    %192 = vector.broadcast %cst_99 : f32 to vector<8x96xf32>
    %193 = arith.addf %192, %191 : vector<8x96xf32>
    %194 = arith.divf %192, %193 : vector<8x96xf32>
    %195 = vector.extract_strided_slice %188 {offsets = [0, 96], sizes = [8, 32], strides = [1, 1]} : vector<8x128xf32> to vector<8x32xf32>
    %196 = math.tanh %195 : vector<8x32xf32>
    %197 = vector.extract_strided_slice %194 {offsets = [0, 0], sizes = [8, 32], strides = [1, 1]} : vector<8x96xf32> to vector<8x32xf32>
    %198 = vector.extract_strided_slice %194 {offsets = [0, 32], sizes = [8, 32], strides = [1, 1]} : vector<8x96xf32> to vector<8x32xf32>
    %199 = vector.extract_strided_slice %194 {offsets = [0, 64], sizes = [8, 32], strides = [1, 1]} : vector<8x96xf32> to vector<8x32xf32>
    %c0_100 = arith.constant 0 : index
    %c0_101 = arith.constant 0 : index
    %200 = vector.load %arg13[%c0_100, %c0_101] : memref<8x32xf32, #tpu.memory_space<vmem>>, vector<8x32xf32>
    %201 = arith.mulf %198, %200 : vector<8x32xf32>
    %202 = arith.mulf %197, %196 : vector<8x32xf32>
    %203 = arith.addf %201, %202 : vector<8x32xf32>
    %204 = math.tanh %203 : vector<8x32xf32>
    %205 = arith.mulf %199, %204 : vector<8x32xf32>
    %c0_102 = arith.constant 0 : index
    %c0_103 = arith.constant 0 : index
    %206 = vector.load %arg13[%c0_102, %c0_103] : memref<8x32xf32, #tpu.memory_space<vmem>>, vector<8x32xf32>
    tpu.vector_store %arg13[%c0_102, %c0_103], %203 {strides = array<i32>} : memref<8x32xf32, #tpu.memory_space<vmem>>, vector<8x32xf32>,
    %c0_104 = arith.constant 0 : index
    %c0_105 = arith.constant 0 : index
    %207 = vector.load %arg12[%c0_104, %c0_105] : memref<8x32xf32, #tpu.memory_space<vmem>>, vector<8x32xf32>
    tpu.vector_store %arg12[%c0_104, %c0_105], %205 {strides = array<i32>} : memref<8x32xf32, #tpu.memory_space<vmem>>, vector<8x32xf32>,
    %208 = arith.index_cast %183 : i32 to index
    %c0_106 = arith.constant 0 : index
    %209 = vector.load %arg10[%208, %c0_106] : memref<64x32xf32, #tpu.memory_space<vmem>>, vector<8x32xf32>
    tpu.vector_store %arg10[%208, %c0_106], %205 {strides = array<i32>} : memref<64x32xf32, #tpu.memory_space<vmem>>, vector<8x32xf32>,
    %c7_i32 = arith.constant 7 : i32
    %c8_i32_107 = arith.constant 8 : i32
    %210 = arith.muli %c7_i32, %c8_i32_107 : i32
    %211 = tpu.assume_multiple %210, 8 : i32
    %212 = arith.index_cast %211 : i32 to index
    %c0_108 = arith.constant 0 : index
    %213 = vector.load %arg11[%212, %c0_108] : memref<64x128xf32, #tpu.memory_space<vmem>>, vector<8x128xf32>
    %c0_109 = arith.constant 0 : index
    %c0_110 = arith.constant 0 : index
    %214 = vector.load %arg12[%c0_109, %c0_110] : memref<8x32xf32, #tpu.memory_space<vmem>>, vector<8x32xf32>
    %cst_111 = arith.constant dense<0.000000e+00> : vector<8x128xf32>
    %215 = tpu.matmul %214, %13, %cst_111 {dimension_numbers = #tpu.dot_dimension_numbers<[1], [0], [0], [1], [0, 0, 1, 1], [], []>} : vector<8x32xf32>, vector<32x128xf32>, vector<8x128xf32> -> vector<8x128xf32>
    %216 = arith.addf %213, %215 : vector<8x128xf32>
    %217 = vector.extract_strided_slice %216 {offsets = [0, 0], sizes = [8, 96], strides = [1, 1]} : vector<8x128xf32> to vector<8x96xf32>
    %218 = arith.negf %217 : vector<8x96xf32>
    %219 = math.exp %218 : vector<8x96xf32>
    %cst_112 = arith.constant 1.000000e+00 : f32
    %220 = vector.broadcast %cst_112 : f32 to vector<8x96xf32>
    %221 = arith.addf %220, %219 : vector<8x96xf32>
    %222 = arith.divf %220, %221 : vector<8x96xf32>
    %223 = vector.extract_strided_slice %216 {offsets = [0, 96], sizes = [8, 32], strides = [1, 1]} : vector<8x128xf32> to vector<8x32xf32>
    %224 = math.tanh %223 : vector<8x32xf32>
    %225 = vector.extract_strided_slice %222 {offsets = [0, 0], sizes = [8, 32], strides = [1, 1]} : vector<8x96xf32> to vector<8x32xf32>
    %226 = vector.extract_strided_slice %222 {offsets = [0, 32], sizes = [8, 32], strides = [1, 1]} : vector<8x96xf32> to vector<8x32xf32>
    %227 = vector.extract_strided_slice %222 {offsets = [0, 64], sizes = [8, 32], strides = [1, 1]} : vector<8x96xf32> to vector<8x32xf32>
    %c0_113 = arith.constant 0 : index
    %c0_114 = arith.constant 0 : index
    %228 = vector.load %arg13[%c0_113, %c0_114] : memref<8x32xf32, #tpu.memory_space<vmem>>, vector<8x32xf32>
    %229 = arith.mulf %226, %228 : vector<8x32xf32>
    %230 = arith.mulf %225, %224 : vector<8x32xf32>
    %231 = arith.addf %229, %230 : vector<8x32xf32>
    %232 = math.tanh %231 : vector<8x32xf32>
    %233 = arith.mulf %227, %232 : vector<8x32xf32>
    %c0_115 = arith.constant 0 : index
    %c0_116 = arith.constant 0 : index
    %234 = vector.load %arg13[%c0_115, %c0_116] : memref<8x32xf32, #tpu.memory_space<vmem>>, vector<8x32xf32>
    tpu.vector_store %arg13[%c0_115, %c0_116], %231 {strides = array<i32>} : memref<8x32xf32, #tpu.memory_space<vmem>>, vector<8x32xf32>,
    %c0_117 = arith.constant 0 : index
    %c0_118 = arith.constant 0 : index
    %235 = vector.load %arg12[%c0_117, %c0_118] : memref<8x32xf32, #tpu.memory_space<vmem>>, vector<8x32xf32>
    tpu.vector_store %arg12[%c0_117, %c0_118], %233 {strides = array<i32>} : memref<8x32xf32, #tpu.memory_space<vmem>>, vector<8x32xf32>,
    %236 = arith.index_cast %211 : i32 to index
    %c0_119 = arith.constant 0 : index
    %237 = vector.load %arg10[%236, %c0_119] : memref<64x32xf32, #tpu.memory_space<vmem>>, vector<8x32xf32>
    tpu.vector_store %arg10[%236, %c0_119], %233 {strides = array<i32>} : memref<64x32xf32, #tpu.memory_space<vmem>>, vector<8x32xf32>,
    %c8_i32_120 = arith.constant 8 : i32
    %c0_121 = arith.constant 0 : index
    %c0_122 = arith.constant 0 : index
    %238 = vector.load %arg10[%c0_121, %c0_122] : memref<64x32xf32, #tpu.memory_space<vmem>>, vector<64x32xf32>
    %c0_123 = arith.constant 0 : index
    %c0_124 = arith.constant 0 : index
    %c0_125 = arith.constant 0 : index
    %239 = vector.load %arg2[%c0_123, %c0_124, %c0_125] : memref<2x32x128xf32, #tpu.memory_space<vmem>>, vector<1x32x128xf32>
    %240 = vector.shape_cast %239 : vector<1x32x128xf32> to vector<32x128xf32>
    %cst_126 = arith.constant dense<0.000000e+00> : vector<64x128xf32>
    %241 = tpu.matmul %238, %240, %cst_126 {dimension_numbers = #tpu.dot_dimension_numbers<[1], [0], [0], [1], [0, 0, 1, 1], [], []>} : vector<64x32xf32>, vector<32x128xf32>, vector<64x128xf32> -> vector<64x128xf32>
    %c1 = arith.constant 1 : index
    %c0_127 = arith.constant 0 : index
    %c0_128 = arith.constant 0 : index
    %242 = vector.load %arg4[%c1, %c0_127, %c0_128] : memref<3x1x128xf32, #tpu.memory_space<vmem>>, vector<1x1x128xf32>
    %243 = vector.shape_cast %242 : vector<1x1x128xf32> to vector<1x128xf32>
    %244 = vector.broadcast %243 : vector<1x128xf32> to vector<64x128xf32>
    %245 = arith.addf %241, %244 : vector<64x128xf32>
    %c0_129 = arith.constant 0 : index
    %c0_130 = arith.constant 0 : index
    %246 = vector.load %arg11[%c0_129, %c0_130] : memref<64x128xf32, #tpu.memory_space<vmem>>, vector<64x128xf32>
    tpu.vector_store %arg11[%c0_129, %c0_130], %245 {strides = array<i32>} : memref<64x128xf32, #tpu.memory_space<vmem>>, vector<64x128xf32>,
    %cst_131 = arith.constant 0.000000e+00 : f32
    %247 = vector.broadcast %cst_131 : f32 to vector<8x32xf32>
    %c0_132 = arith.constant 0 : index
    %c0_133 = arith.constant 0 : index
    %248 = vector.load %arg12[%c0_132, %c0_133] : memref<8x32xf32, #tpu.memory_space<vmem>>, vector<8x32xf32>
    tpu.vector_store %arg12[%c0_132, %c0_133], %247 {strides = array<i32>} : memref<8x32xf32, #tpu.memory_space<vmem>>, vector<8x32xf32>,
    %cst_134 = arith.constant 0.000000e+00 : f32
    %249 = vector.broadcast %cst_134 : f32 to vector<8x32xf32>
    %c0_135 = arith.constant 0 : index
    %c0_136 = arith.constant 0 : index
    %250 = vector.load %arg13[%c0_135, %c0_136] : memref<8x32xf32, #tpu.memory_space<vmem>>, vector<8x32xf32>
    tpu.vector_store %arg13[%c0_135, %c0_136], %249 {strides = array<i32>} : memref<8x32xf32, #tpu.memory_space<vmem>>, vector<8x32xf32>,
    %c1_137 = arith.constant 1 : index
    %c0_138 = arith.constant 0 : index
    %c0_139 = arith.constant 0 : index
    %251 = vector.load %arg3[%c1_137, %c0_138, %c0_139] : memref<3x32x128xf32, #tpu.memory_space<vmem>>, vector<1x32x128xf32>
    %252 = vector.shape_cast %251 : vector<1x32x128xf32> to vector<32x128xf32>
    %c0_i32_140 = arith.constant 0 : i32
    %c8_i32_141 = arith.constant 8 : i32
    %253 = arith.muli %c0_i32_140, %c8_i32_141 : i32
    %254 = tpu.assume_multiple %253, 8 : i32
    %255 = arith.index_cast %254 : i32 to index
    %c0_142 = arith.constant 0 : index
    %256 = vector.load %arg11[%255, %c0_142] : memref<64x128xf32, #tpu.memory_space<vmem>>, vector<8x128xf32>
    %c0_143 = arith.constant 0 : index
    %c0_144 = arith.constant 0 : index
    %257 = vector.load %arg12[%c0_143, %c0_144] : memref<8x32xf32, #tpu.memory_space<vmem>>, vector<8x32xf32>
    %cst_145 = arith.constant dense<0.000000e+00> : vector<8x128xf32>
    %258 = tpu.matmul %257, %252, %cst_145 {dimension_numbers = #tpu.dot_dimension_numbers<[1], [0], [0], [1], [0, 0, 1, 1], [], []>} : vector<8x32xf32>, vector<32x128xf32>, vector<8x128xf32> -> vector<8x128xf32>
    %259 = arith.addf %256, %258 : vector<8x128xf32>
    %260 = vector.extract_strided_slice %259 {offsets = [0, 0], sizes = [8, 96], strides = [1, 1]} : vector<8x128xf32> to vector<8x96xf32>
    %261 = arith.negf %260 : vector<8x96xf32>
    %262 = math.exp %261 : vector<8x96xf32>
    %cst_146 = arith.constant 1.000000e+00 : f32
    %263 = vector.broadcast %cst_146 : f32 to vector<8x96xf32>
    %264 = arith.addf %263, %262 : vector<8x96xf32>
    %265 = arith.divf %263, %264 : vector<8x96xf32>
    %266 = vector.extract_strided_slice %259 {offsets = [0, 96], sizes = [8, 32], strides = [1, 1]} : vector<8x128xf32> to vector<8x32xf32>
    %267 = math.tanh %266 : vector<8x32xf32>
    %268 = vector.extract_strided_slice %265 {offsets = [0, 0], sizes = [8, 32], strides = [1, 1]} : vector<8x96xf32> to vector<8x32xf32>
    %269 = vector.extract_strided_slice %265 {offsets = [0, 32], sizes = [8, 32], strides = [1, 1]} : vector<8x96xf32> to vector<8x32xf32>
    %270 = vector.extract_strided_slice %265 {offsets = [0, 64], sizes = [8, 32], strides = [1, 1]} : vector<8x96xf32> to vector<8x32xf32>
    %c0_147 = arith.constant 0 : index
    %c0_148 = arith.constant 0 : index
    %271 = vector.load %arg13[%c0_147, %c0_148] : memref<8x32xf32, #tpu.memory_space<vmem>>, vector<8x32xf32>
    %272 = arith.mulf %269, %271 : vector<8x32xf32>
    %273 = arith.mulf %268, %267 : vector<8x32xf32>
    %274 = arith.addf %272, %273 : vector<8x32xf32>
    %275 = math.tanh %274 : vector<8x32xf32>
    %276 = arith.mulf %270, %275 : vector<8x32xf32>
    %c0_149 = arith.constant 0 : index
    %c0_150 = arith.constant 0 : index
    %277 = vector.load %arg13[%c0_149, %c0_150] : memref<8x32xf32, #tpu.memory_space<vmem>>, vector<8x32xf32>
    tpu.vector_store %arg13[%c0_149, %c0_150], %274 {strides = array<i32>} : memref<8x32xf32, #tpu.memory_space<vmem>>, vector<8x32xf32>,
    %c0_151 = arith.constant 0 : index
    %c0_152 = arith.constant 0 : index
    %278 = vector.load %arg12[%c0_151, %c0_152] : memref<8x32xf32, #tpu.memory_space<vmem>>, vector<8x32xf32>
    tpu.vector_store %arg12[%c0_151, %c0_152], %276 {strides = array<i32>} : memref<8x32xf32, #tpu.memory_space<vmem>>, vector<8x32xf32>,
    %279 = arith.index_cast %254 : i32 to index
    %c0_153 = arith.constant 0 : index
    %280 = vector.load %arg10[%279, %c0_153] : memref<64x32xf32, #tpu.memory_space<vmem>>, vector<8x32xf32>
    tpu.vector_store %arg10[%279, %c0_153], %276 {strides = array<i32>} : memref<64x32xf32, #tpu.memory_space<vmem>>, vector<8x32xf32>,
    %c1_i32_154 = arith.constant 1 : i32
    %c8_i32_155 = arith.constant 8 : i32
    %281 = arith.muli %c1_i32_154, %c8_i32_155 : i32
    %282 = tpu.assume_multiple %281, 8 : i32
    %283 = arith.index_cast %282 : i32 to index
    %c0_156 = arith.constant 0 : index
    %284 = vector.load %arg11[%283, %c0_156] : memref<64x128xf32, #tpu.memory_space<vmem>>, vector<8x128xf32>
    %c0_157 = arith.constant 0 : index
    %c0_158 = arith.constant 0 : index
    %285 = vector.load %arg12[%c0_157, %c0_158] : memref<8x32xf32, #tpu.memory_space<vmem>>, vector<8x32xf32>
    %cst_159 = arith.constant dense<0.000000e+00> : vector<8x128xf32>
    %286 = tpu.matmul %285, %252, %cst_159 {dimension_numbers = #tpu.dot_dimension_numbers<[1], [0], [0], [1], [0, 0, 1, 1], [], []>} : vector<8x32xf32>, vector<32x128xf32>, vector<8x128xf32> -> vector<8x128xf32>
    %287 = arith.addf %284, %286 : vector<8x128xf32>
    %288 = vector.extract_strided_slice %287 {offsets = [0, 0], sizes = [8, 96], strides = [1, 1]} : vector<8x128xf32> to vector<8x96xf32>
    %289 = arith.negf %288 : vector<8x96xf32>
    %290 = math.exp %289 : vector<8x96xf32>
    %cst_160 = arith.constant 1.000000e+00 : f32
    %291 = vector.broadcast %cst_160 : f32 to vector<8x96xf32>
    %292 = arith.addf %291, %290 : vector<8x96xf32>
    %293 = arith.divf %291, %292 : vector<8x96xf32>
    %294 = vector.extract_strided_slice %287 {offsets = [0, 96], sizes = [8, 32], strides = [1, 1]} : vector<8x128xf32> to vector<8x32xf32>
    %295 = math.tanh %294 : vector<8x32xf32>
    %296 = vector.extract_strided_slice %293 {offsets = [0, 0], sizes = [8, 32], strides = [1, 1]} : vector<8x96xf32> to vector<8x32xf32>
    %297 = vector.extract_strided_slice %293 {offsets = [0, 32], sizes = [8, 32], strides = [1, 1]} : vector<8x96xf32> to vector<8x32xf32>
    %298 = vector.extract_strided_slice %293 {offsets = [0, 64], sizes = [8, 32], strides = [1, 1]} : vector<8x96xf32> to vector<8x32xf32>
    %c0_161 = arith.constant 0 : index
    %c0_162 = arith.constant 0 : index
    %299 = vector.load %arg13[%c0_161, %c0_162] : memref<8x32xf32, #tpu.memory_space<vmem>>, vector<8x32xf32>
    %300 = arith.mulf %297, %299 : vector<8x32xf32>
    %301 = arith.mulf %296, %295 : vector<8x32xf32>
    %302 = arith.addf %300, %301 : vector<8x32xf32>
    %303 = math.tanh %302 : vector<8x32xf32>
    %304 = arith.mulf %298, %303 : vector<8x32xf32>
    %c0_163 = arith.constant 0 : index
    %c0_164 = arith.constant 0 : index
    %305 = vector.load %arg13[%c0_163, %c0_164] : memref<8x32xf32, #tpu.memory_space<vmem>>, vector<8x32xf32>
    tpu.vector_store %arg13[%c0_163, %c0_164], %302 {strides = array<i32>} : memref<8x32xf32, #tpu.memory_space<vmem>>, vector<8x32xf32>,
    %c0_165 = arith.constant 0 : index
    %c0_166 = arith.constant 0 : index
    %306 = vector.load %arg12[%c0_165, %c0_166] : memref<8x32xf32, #tpu.memory_space<vmem>>, vector<8x32xf32>
    tpu.vector_store %arg12[%c0_165, %c0_166], %304 {strides = array<i32>} : memref<8x32xf32, #tpu.memory_space<vmem>>, vector<8x32xf32>,
    %307 = arith.index_cast %282 : i32 to index
    %c0_167 = arith.constant 0 : index
    %308 = vector.load %arg10[%307, %c0_167] : memref<64x32xf32, #tpu.memory_space<vmem>>, vector<8x32xf32>
    tpu.vector_store %arg10[%307, %c0_167], %304 {strides = array<i32>} : memref<64x32xf32, #tpu.memory_space<vmem>>, vector<8x32xf32>,
    %c2_i32_168 = arith.constant 2 : i32
    %c8_i32_169 = arith.constant 8 : i32
    %309 = arith.muli %c2_i32_168, %c8_i32_169 : i32
    %310 = tpu.assume_multiple %309, 8 : i32
    %311 = arith.index_cast %310 : i32 to index
    %c0_170 = arith.constant 0 : index
    %312 = vector.load %arg11[%311, %c0_170] : memref<64x128xf32, #tpu.memory_space<vmem>>, vector<8x128xf32>
    %c0_171 = arith.constant 0 : index
    %c0_172 = arith.constant 0 : index
    %313 = vector.load %arg12[%c0_171, %c0_172] : memref<8x32xf32, #tpu.memory_space<vmem>>, vector<8x32xf32>
    %cst_173 = arith.constant dense<0.000000e+00> : vector<8x128xf32>
    %314 = tpu.matmul %313, %252, %cst_173 {dimension_numbers = #tpu.dot_dimension_numbers<[1], [0], [0], [1], [0, 0, 1, 1], [], []>} : vector<8x32xf32>, vector<32x128xf32>, vector<8x128xf32> -> vector<8x128xf32>
    %315 = arith.addf %312, %314 : vector<8x128xf32>
    %316 = vector.extract_strided_slice %315 {offsets = [0, 0], sizes = [8, 96], strides = [1, 1]} : vector<8x128xf32> to vector<8x96xf32>
    %317 = arith.negf %316 : vector<8x96xf32>
    %318 = math.exp %317 : vector<8x96xf32>
    %cst_174 = arith.constant 1.000000e+00 : f32
    %319 = vector.broadcast %cst_174 : f32 to vector<8x96xf32>
    %320 = arith.addf %319, %318 : vector<8x96xf32>
    %321 = arith.divf %319, %320 : vector<8x96xf32>
    %322 = vector.extract_strided_slice %315 {offsets = [0, 96], sizes = [8, 32], strides = [1, 1]} : vector<8x128xf32> to vector<8x32xf32>
    %323 = math.tanh %322 : vector<8x32xf32>
    %324 = vector.extract_strided_slice %321 {offsets = [0, 0], sizes = [8, 32], strides = [1, 1]} : vector<8x96xf32> to vector<8x32xf32>
    %325 = vector.extract_strided_slice %321 {offsets = [0, 32], sizes = [8, 32], strides = [1, 1]} : vector<8x96xf32> to vector<8x32xf32>
    %326 = vector.extract_strided_slice %321 {offsets = [0, 64], sizes = [8, 32], strides = [1, 1]} : vector<8x96xf32> to vector<8x32xf32>
    %c0_175 = arith.constant 0 : index
    %c0_176 = arith.constant 0 : index
    %327 = vector.load %arg13[%c0_175, %c0_176] : memref<8x32xf32, #tpu.memory_space<vmem>>, vector<8x32xf32>
    %328 = arith.mulf %325, %327 : vector<8x32xf32>
    %329 = arith.mulf %324, %323 : vector<8x32xf32>
    %330 = arith.addf %328, %329 : vector<8x32xf32>
    %331 = math.tanh %330 : vector<8x32xf32>
    %332 = arith.mulf %326, %331 : vector<8x32xf32>
    %c0_177 = arith.constant 0 : index
    %c0_178 = arith.constant 0 : index
    %333 = vector.load %arg13[%c0_177, %c0_178] : memref<8x32xf32, #tpu.memory_space<vmem>>, vector<8x32xf32>
    tpu.vector_store %arg13[%c0_177, %c0_178], %330 {strides = array<i32>} : memref<8x32xf32, #tpu.memory_space<vmem>>, vector<8x32xf32>,
    %c0_179 = arith.constant 0 : index
    %c0_180 = arith.constant 0 : index
    %334 = vector.load %arg12[%c0_179, %c0_180] : memref<8x32xf32, #tpu.memory_space<vmem>>, vector<8x32xf32>
    tpu.vector_store %arg12[%c0_179, %c0_180], %332 {strides = array<i32>} : memref<8x32xf32, #tpu.memory_space<vmem>>, vector<8x32xf32>,
    %335 = arith.index_cast %310 : i32 to index
    %c0_181 = arith.constant 0 : index
    %336 = vector.load %arg10[%335, %c0_181] : memref<64x32xf32, #tpu.memory_space<vmem>>, vector<8x32xf32>
    tpu.vector_store %arg10[%335, %c0_181], %332 {strides = array<i32>} : memref<64x32xf32, #tpu.memory_space<vmem>>, vector<8x32xf32>,
    %c3_i32_182 = arith.constant 3 : i32
    %c8_i32_183 = arith.constant 8 : i32
    %337 = arith.muli %c3_i32_182, %c8_i32_183 : i32
    %338 = tpu.assume_multiple %337, 8 : i32
    %339 = arith.index_cast %338 : i32 to index
    %c0_184 = arith.constant 0 : index
    %340 = vector.load %arg11[%339, %c0_184] : memref<64x128xf32, #tpu.memory_space<vmem>>, vector<8x128xf32>
    %c0_185 = arith.constant 0 : index
    %c0_186 = arith.constant 0 : index
    %341 = vector.load %arg12[%c0_185, %c0_186] : memref<8x32xf32, #tpu.memory_space<vmem>>, vector<8x32xf32>
    %cst_187 = arith.constant dense<0.000000e+00> : vector<8x128xf32>
    %342 = tpu.matmul %341, %252, %cst_187 {dimension_numbers = #tpu.dot_dimension_numbers<[1], [0], [0], [1], [0, 0, 1, 1], [], []>} : vector<8x32xf32>, vector<32x128xf32>, vector<8x128xf32> -> vector<8x128xf32>
    %343 = arith.addf %340, %342 : vector<8x128xf32>
    %344 = vector.extract_strided_slice %343 {offsets = [0, 0], sizes = [8, 96], strides = [1, 1]} : vector<8x128xf32> to vector<8x96xf32>
    %345 = arith.negf %344 : vector<8x96xf32>
    %346 = math.exp %345 : vector<8x96xf32>
    %cst_188 = arith.constant 1.000000e+00 : f32
    %347 = vector.broadcast %cst_188 : f32 to vector<8x96xf32>
    %348 = arith.addf %347, %346 : vector<8x96xf32>
    %349 = arith.divf %347, %348 : vector<8x96xf32>
    %350 = vector.extract_strided_slice %343 {offsets = [0, 96], sizes = [8, 32], strides = [1, 1]} : vector<8x128xf32> to vector<8x32xf32>
    %351 = math.tanh %350 : vector<8x32xf32>
    %352 = vector.extract_strided_slice %349 {offsets = [0, 0], sizes = [8, 32], strides = [1, 1]} : vector<8x96xf32> to vector<8x32xf32>
    %353 = vector.extract_strided_slice %349 {offsets = [0, 32], sizes = [8, 32], strides = [1, 1]} : vector<8x96xf32> to vector<8x32xf32>
    %354 = vector.extract_strided_slice %349 {offsets = [0, 64], sizes = [8, 32], strides = [1, 1]} : vector<8x96xf32> to vector<8x32xf32>
    %c0_189 = arith.constant 0 : index
    %c0_190 = arith.constant 0 : index
    %355 = vector.load %arg13[%c0_189, %c0_190] : memref<8x32xf32, #tpu.memory_space<vmem>>, vector<8x32xf32>
    %356 = arith.mulf %353, %355 : vector<8x32xf32>
    %357 = arith.mulf %352, %351 : vector<8x32xf32>
    %358 = arith.addf %356, %357 : vector<8x32xf32>
    %359 = math.tanh %358 : vector<8x32xf32>
    %360 = arith.mulf %354, %359 : vector<8x32xf32>
    %c0_191 = arith.constant 0 : index
    %c0_192 = arith.constant 0 : index
    %361 = vector.load %arg13[%c0_191, %c0_192] : memref<8x32xf32, #tpu.memory_space<vmem>>, vector<8x32xf32>
    tpu.vector_store %arg13[%c0_191, %c0_192], %358 {strides = array<i32>} : memref<8x32xf32, #tpu.memory_space<vmem>>, vector<8x32xf32>,
    %c0_193 = arith.constant 0 : index
    %c0_194 = arith.constant 0 : index
    %362 = vector.load %arg12[%c0_193, %c0_194] : memref<8x32xf32, #tpu.memory_space<vmem>>, vector<8x32xf32>
    tpu.vector_store %arg12[%c0_193, %c0_194], %360 {strides = array<i32>} : memref<8x32xf32, #tpu.memory_space<vmem>>, vector<8x32xf32>,
    %363 = arith.index_cast %338 : i32 to index
    %c0_195 = arith.constant 0 : index
    %364 = vector.load %arg10[%363, %c0_195] : memref<64x32xf32, #tpu.memory_space<vmem>>, vector<8x32xf32>
    tpu.vector_store %arg10[%363, %c0_195], %360 {strides = array<i32>} : memref<64x32xf32, #tpu.memory_space<vmem>>, vector<8x32xf32>,
    %c4_i32_196 = arith.constant 4 : i32
    %c8_i32_197 = arith.constant 8 : i32
    %365 = arith.muli %c4_i32_196, %c8_i32_197 : i32
    %366 = tpu.assume_multiple %365, 8 : i32
    %367 = arith.index_cast %366 : i32 to index
    %c0_198 = arith.constant 0 : index
    %368 = vector.load %arg11[%367, %c0_198] : memref<64x128xf32, #tpu.memory_space<vmem>>, vector<8x128xf32>
    %c0_199 = arith.constant 0 : index
    %c0_200 = arith.constant 0 : index
    %369 = vector.load %arg12[%c0_199, %c0_200] : memref<8x32xf32, #tpu.memory_space<vmem>>, vector<8x32xf32>
    %cst_201 = arith.constant dense<0.000000e+00> : vector<8x128xf32>
    %370 = tpu.matmul %369, %252, %cst_201 {dimension_numbers = #tpu.dot_dimension_numbers<[1], [0], [0], [1], [0, 0, 1, 1], [], []>} : vector<8x32xf32>, vector<32x128xf32>, vector<8x128xf32> -> vector<8x128xf32>
    %371 = arith.addf %368, %370 : vector<8x128xf32>
    %372 = vector.extract_strided_slice %371 {offsets = [0, 0], sizes = [8, 96], strides = [1, 1]} : vector<8x128xf32> to vector<8x96xf32>
    %373 = arith.negf %372 : vector<8x96xf32>
    %374 = math.exp %373 : vector<8x96xf32>
    %cst_202 = arith.constant 1.000000e+00 : f32
    %375 = vector.broadcast %cst_202 : f32 to vector<8x96xf32>
    %376 = arith.addf %375, %374 : vector<8x96xf32>
    %377 = arith.divf %375, %376 : vector<8x96xf32>
    %378 = vector.extract_strided_slice %371 {offsets = [0, 96], sizes = [8, 32], strides = [1, 1]} : vector<8x128xf32> to vector<8x32xf32>
    %379 = math.tanh %378 : vector<8x32xf32>
    %380 = vector.extract_strided_slice %377 {offsets = [0, 0], sizes = [8, 32], strides = [1, 1]} : vector<8x96xf32> to vector<8x32xf32>
    %381 = vector.extract_strided_slice %377 {offsets = [0, 32], sizes = [8, 32], strides = [1, 1]} : vector<8x96xf32> to vector<8x32xf32>
    %382 = vector.extract_strided_slice %377 {offsets = [0, 64], sizes = [8, 32], strides = [1, 1]} : vector<8x96xf32> to vector<8x32xf32>
    %c0_203 = arith.constant 0 : index
    %c0_204 = arith.constant 0 : index
    %383 = vector.load %arg13[%c0_203, %c0_204] : memref<8x32xf32, #tpu.memory_space<vmem>>, vector<8x32xf32>
    %384 = arith.mulf %381, %383 : vector<8x32xf32>
    %385 = arith.mulf %380, %379 : vector<8x32xf32>
    %386 = arith.addf %384, %385 : vector<8x32xf32>
    %387 = math.tanh %386 : vector<8x32xf32>
    %388 = arith.mulf %382, %387 : vector<8x32xf32>
    %c0_205 = arith.constant 0 : index
    %c0_206 = arith.constant 0 : index
    %389 = vector.load %arg13[%c0_205, %c0_206] : memref<8x32xf32, #tpu.memory_space<vmem>>, vector<8x32xf32>
    tpu.vector_store %arg13[%c0_205, %c0_206], %386 {strides = array<i32>} : memref<8x32xf32, #tpu.memory_space<vmem>>, vector<8x32xf32>,
    %c0_207 = arith.constant 0 : index
    %c0_208 = arith.constant 0 : index
    %390 = vector.load %arg12[%c0_207, %c0_208] : memref<8x32xf32, #tpu.memory_space<vmem>>, vector<8x32xf32>
    tpu.vector_store %arg12[%c0_207, %c0_208], %388 {strides = array<i32>} : memref<8x32xf32, #tpu.memory_space<vmem>>, vector<8x32xf32>,
    %391 = arith.index_cast %366 : i32 to index
    %c0_209 = arith.constant 0 : index
    %392 = vector.load %arg10[%391, %c0_209] : memref<64x32xf32, #tpu.memory_space<vmem>>, vector<8x32xf32>
    tpu.vector_store %arg10[%391, %c0_209], %388 {strides = array<i32>} : memref<64x32xf32, #tpu.memory_space<vmem>>, vector<8x32xf32>,
    %c5_i32_210 = arith.constant 5 : i32
    %c8_i32_211 = arith.constant 8 : i32
    %393 = arith.muli %c5_i32_210, %c8_i32_211 : i32
    %394 = tpu.assume_multiple %393, 8 : i32
    %395 = arith.index_cast %394 : i32 to index
    %c0_212 = arith.constant 0 : index
    %396 = vector.load %arg11[%395, %c0_212] : memref<64x128xf32, #tpu.memory_space<vmem>>, vector<8x128xf32>
    %c0_213 = arith.constant 0 : index
    %c0_214 = arith.constant 0 : index
    %397 = vector.load %arg12[%c0_213, %c0_214] : memref<8x32xf32, #tpu.memory_space<vmem>>, vector<8x32xf32>
    %cst_215 = arith.constant dense<0.000000e+00> : vector<8x128xf32>
    %398 = tpu.matmul %397, %252, %cst_215 {dimension_numbers = #tpu.dot_dimension_numbers<[1], [0], [0], [1], [0, 0, 1, 1], [], []>} : vector<8x32xf32>, vector<32x128xf32>, vector<8x128xf32> -> vector<8x128xf32>
    %399 = arith.addf %396, %398 : vector<8x128xf32>
    %400 = vector.extract_strided_slice %399 {offsets = [0, 0], sizes = [8, 96], strides = [1, 1]} : vector<8x128xf32> to vector<8x96xf32>
    %401 = arith.negf %400 : vector<8x96xf32>
    %402 = math.exp %401 : vector<8x96xf32>
    %cst_216 = arith.constant 1.000000e+00 : f32
    %403 = vector.broadcast %cst_216 : f32 to vector<8x96xf32>
    %404 = arith.addf %403, %402 : vector<8x96xf32>
    %405 = arith.divf %403, %404 : vector<8x96xf32>
    %406 = vector.extract_strided_slice %399 {offsets = [0, 96], sizes = [8, 32], strides = [1, 1]} : vector<8x128xf32> to vector<8x32xf32>
    %407 = math.tanh %406 : vector<8x32xf32>
    %408 = vector.extract_strided_slice %405 {offsets = [0, 0], sizes = [8, 32], strides = [1, 1]} : vector<8x96xf32> to vector<8x32xf32>
    %409 = vector.extract_strided_slice %405 {offsets = [0, 32], sizes = [8, 32], strides = [1, 1]} : vector<8x96xf32> to vector<8x32xf32>
    %410 = vector.extract_strided_slice %405 {offsets = [0, 64], sizes = [8, 32], strides = [1, 1]} : vector<8x96xf32> to vector<8x32xf32>
    %c0_217 = arith.constant 0 : index
    %c0_218 = arith.constant 0 : index
    %411 = vector.load %arg13[%c0_217, %c0_218] : memref<8x32xf32, #tpu.memory_space<vmem>>, vector<8x32xf32>
    %412 = arith.mulf %409, %411 : vector<8x32xf32>
    %413 = arith.mulf %408, %407 : vector<8x32xf32>
    %414 = arith.addf %412, %413 : vector<8x32xf32>
    %415 = math.tanh %414 : vector<8x32xf32>
    %416 = arith.mulf %410, %415 : vector<8x32xf32>
    %c0_219 = arith.constant 0 : index
    %c0_220 = arith.constant 0 : index
    %417 = vector.load %arg13[%c0_219, %c0_220] : memref<8x32xf32, #tpu.memory_space<vmem>>, vector<8x32xf32>
    tpu.vector_store %arg13[%c0_219, %c0_220], %414 {strides = array<i32>} : memref<8x32xf32, #tpu.memory_space<vmem>>, vector<8x32xf32>,
    %c0_221 = arith.constant 0 : index
    %c0_222 = arith.constant 0 : index
    %418 = vector.load %arg12[%c0_221, %c0_222] : memref<8x32xf32, #tpu.memory_space<vmem>>, vector<8x32xf32>
    tpu.vector_store %arg12[%c0_221, %c0_222], %416 {strides = array<i32>} : memref<8x32xf32, #tpu.memory_space<vmem>>, vector<8x32xf32>,
    %419 = arith.index_cast %394 : i32 to index
    %c0_223 = arith.constant 0 : index
    %420 = vector.load %arg10[%419, %c0_223] : memref<64x32xf32, #tpu.memory_space<vmem>>, vector<8x32xf32>
    tpu.vector_store %arg10[%419, %c0_223], %416 {strides = array<i32>} : memref<64x32xf32, #tpu.memory_space<vmem>>, vector<8x32xf32>,
    %c6_i32_224 = arith.constant 6 : i32
    %c8_i32_225 = arith.constant 8 : i32
    %421 = arith.muli %c6_i32_224, %c8_i32_225 : i32
    %422 = tpu.assume_multiple %421, 8 : i32
    %423 = arith.index_cast %422 : i32 to index
    %c0_226 = arith.constant 0 : index
    %424 = vector.load %arg11[%423, %c0_226] : memref<64x128xf32, #tpu.memory_space<vmem>>, vector<8x128xf32>
    %c0_227 = arith.constant 0 : index
    %c0_228 = arith.constant 0 : index
    %425 = vector.load %arg12[%c0_227, %c0_228] : memref<8x32xf32, #tpu.memory_space<vmem>>, vector<8x32xf32>
    %cst_229 = arith.constant dense<0.000000e+00> : vector<8x128xf32>
    %426 = tpu.matmul %425, %252, %cst_229 {dimension_numbers = #tpu.dot_dimension_numbers<[1], [0], [0], [1], [0, 0, 1, 1], [], []>} : vector<8x32xf32>, vector<32x128xf32>, vector<8x128xf32> -> vector<8x128xf32>
    %427 = arith.addf %424, %426 : vector<8x128xf32>
    %428 = vector.extract_strided_slice %427 {offsets = [0, 0], sizes = [8, 96], strides = [1, 1]} : vector<8x128xf32> to vector<8x96xf32>
    %429 = arith.negf %428 : vector<8x96xf32>
    %430 = math.exp %429 : vector<8x96xf32>
    %cst_230 = arith.constant 1.000000e+00 : f32
    %431 = vector.broadcast %cst_230 : f32 to vector<8x96xf32>
    %432 = arith.addf %431, %430 : vector<8x96xf32>
    %433 = arith.divf %431, %432 : vector<8x96xf32>
    %434 = vector.extract_strided_slice %427 {offsets = [0, 96], sizes = [8, 32], strides = [1, 1]} : vector<8x128xf32> to vector<8x32xf32>
    %435 = math.tanh %434 : vector<8x32xf32>
    %436 = vector.extract_strided_slice %433 {offsets = [0, 0], sizes = [8, 32], strides = [1, 1]} : vector<8x96xf32> to vector<8x32xf32>
    %437 = vector.extract_strided_slice %433 {offsets = [0, 32], sizes = [8, 32], strides = [1, 1]} : vector<8x96xf32> to vector<8x32xf32>
    %438 = vector.extract_strided_slice %433 {offsets = [0, 64], sizes = [8, 32], strides = [1, 1]} : vector<8x96xf32> to vector<8x32xf32>
    %c0_231 = arith.constant 0 : index
    %c0_232 = arith.constant 0 : index
    %439 = vector.load %arg13[%c0_231, %c0_232] : memref<8x32xf32, #tpu.memory_space<vmem>>, vector<8x32xf32>
    %440 = arith.mulf %437, %439 : vector<8x32xf32>
    %441 = arith.mulf %436, %435 : vector<8x32xf32>
    %442 = arith.addf %440, %441 : vector<8x32xf32>
    %443 = math.tanh %442 : vector<8x32xf32>
    %444 = arith.mulf %438, %443 : vector<8x32xf32>
    %c0_233 = arith.constant 0 : index
    %c0_234 = arith.constant 0 : index
    %445 = vector.load %arg13[%c0_233, %c0_234] : memref<8x32xf32, #tpu.memory_space<vmem>>, vector<8x32xf32>
    tpu.vector_store %arg13[%c0_233, %c0_234], %442 {strides = array<i32>} : memref<8x32xf32, #tpu.memory_space<vmem>>, vector<8x32xf32>,
    %c0_235 = arith.constant 0 : index
    %c0_236 = arith.constant 0 : index
    %446 = vector.load %arg12[%c0_235, %c0_236] : memref<8x32xf32, #tpu.memory_space<vmem>>, vector<8x32xf32>
    tpu.vector_store %arg12[%c0_235, %c0_236], %444 {strides = array<i32>} : memref<8x32xf32, #tpu.memory_space<vmem>>, vector<8x32xf32>,
    %447 = arith.index_cast %422 : i32 to index
    %c0_237 = arith.constant 0 : index
    %448 = vector.load %arg10[%447, %c0_237] : memref<64x32xf32, #tpu.memory_space<vmem>>, vector<8x32xf32>
    tpu.vector_store %arg10[%447, %c0_237], %444 {strides = array<i32>} : memref<64x32xf32, #tpu.memory_space<vmem>>, vector<8x32xf32>,
    %c7_i32_238 = arith.constant 7 : i32
    %c8_i32_239 = arith.constant 8 : i32
    %449 = arith.muli %c7_i32_238, %c8_i32_239 : i32
    %450 = tpu.assume_multiple %449, 8 : i32
    %451 = arith.index_cast %450 : i32 to index
    %c0_240 = arith.constant 0 : index
    %452 = vector.load %arg11[%451, %c0_240] : memref<64x128xf32, #tpu.memory_space<vmem>>, vector<8x128xf32>
    %c0_241 = arith.constant 0 : index
    %c0_242 = arith.constant 0 : index
    %453 = vector.load %arg12[%c0_241, %c0_242] : memref<8x32xf32, #tpu.memory_space<vmem>>, vector<8x32xf32>
    %cst_243 = arith.constant dense<0.000000e+00> : vector<8x128xf32>
    %454 = tpu.matmul %453, %252, %cst_243 {dimension_numbers = #tpu.dot_dimension_numbers<[1], [0], [0], [1], [0, 0, 1, 1], [], []>} : vector<8x32xf32>, vector<32x128xf32>, vector<8x128xf32> -> vector<8x128xf32>
    %455 = arith.addf %452, %454 : vector<8x128xf32>
    %456 = vector.extract_strided_slice %455 {offsets = [0, 0], sizes = [8, 96], strides = [1, 1]} : vector<8x128xf32> to vector<8x96xf32>
    %457 = arith.negf %456 : vector<8x96xf32>
    %458 = math.exp %457 : vector<8x96xf32>
    %cst_244 = arith.constant 1.000000e+00 : f32
    %459 = vector.broadcast %cst_244 : f32 to vector<8x96xf32>
    %460 = arith.addf %459, %458 : vector<8x96xf32>
    %461 = arith.divf %459, %460 : vector<8x96xf32>
    %462 = vector.extract_strided_slice %455 {offsets = [0, 96], sizes = [8, 32], strides = [1, 1]} : vector<8x128xf32> to vector<8x32xf32>
    %463 = math.tanh %462 : vector<8x32xf32>
    %464 = vector.extract_strided_slice %461 {offsets = [0, 0], sizes = [8, 32], strides = [1, 1]} : vector<8x96xf32> to vector<8x32xf32>
    %465 = vector.extract_strided_slice %461 {offsets = [0, 32], sizes = [8, 32], strides = [1, 1]} : vector<8x96xf32> to vector<8x32xf32>
    %466 = vector.extract_strided_slice %461 {offsets = [0, 64], sizes = [8, 32], strides = [1, 1]} : vector<8x96xf32> to vector<8x32xf32>
    %c0_245 = arith.constant 0 : index
    %c0_246 = arith.constant 0 : index
    %467 = vector.load %arg13[%c0_245, %c0_246] : memref<8x32xf32, #tpu.memory_space<vmem>>, vector<8x32xf32>
    %468 = arith.mulf %465, %467 : vector<8x32xf32>
    %469 = arith.mulf %464, %463 : vector<8x32xf32>
    %470 = arith.addf %468, %469 : vector<8x32xf32>
    %471 = math.tanh %470 : vector<8x32xf32>
    %472 = arith.mulf %466, %471 : vector<8x32xf32>
    %c0_247 = arith.constant 0 : index
    %c0_248 = arith.constant 0 : index
    %473 = vector.load %arg13[%c0_247, %c0_248] : memref<8x32xf32, #tpu.memory_space<vmem>>, vector<8x32xf32>
    tpu.vector_store %arg13[%c0_247, %c0_248], %470 {strides = array<i32>} : memref<8x32xf32, #tpu.memory_space<vmem>>, vector<8x32xf32>,
    %c0_249 = arith.constant 0 : index
    %c0_250 = arith.constant 0 : index
    %474 = vector.load %arg12[%c0_249, %c0_250] : memref<8x32xf32, #tpu.memory_space<vmem>>, vector<8x32xf32>
    tpu.vector_store %arg12[%c0_249, %c0_250], %472 {strides = array<i32>} : memref<8x32xf32, #tpu.memory_space<vmem>>, vector<8x32xf32>,
    %475 = arith.index_cast %450 : i32 to index
    %c0_251 = arith.constant 0 : index
    %476 = vector.load %arg10[%475, %c0_251] : memref<64x32xf32, #tpu.memory_space<vmem>>, vector<8x32xf32>
    tpu.vector_store %arg10[%475, %c0_251], %472 {strides = array<i32>} : memref<64x32xf32, #tpu.memory_space<vmem>>, vector<8x32xf32>,
    %c8_i32_252 = arith.constant 8 : i32
    %c0_253 = arith.constant 0 : index
    %c0_254 = arith.constant 0 : index
    %477 = vector.load %arg10[%c0_253, %c0_254] : memref<64x32xf32, #tpu.memory_space<vmem>>, vector<64x32xf32>
    %c1_255 = arith.constant 1 : index
    %c0_256 = arith.constant 0 : index
    %c0_257 = arith.constant 0 : index
    %478 = vector.load %arg2[%c1_255, %c0_256, %c0_257] : memref<2x32x128xf32, #tpu.memory_space<vmem>>, vector<1x32x128xf32>
    %479 = vector.shape_cast %478 : vector<1x32x128xf32> to vector<32x128xf32>
    %cst_258 = arith.constant dense<0.000000e+00> : vector<64x128xf32>
    %480 = tpu.matmul %477, %479, %cst_258 {dimension_numbers = #tpu.dot_dimension_numbers<[1], [0], [0], [1], [0, 0, 1, 1], [], []>} : vector<64x32xf32>, vector<32x128xf32>, vector<64x128xf32> -> vector<64x128xf32>
    %c2 = arith.constant 2 : index
    %c0_259 = arith.constant 0 : index
    %c0_260 = arith.constant 0 : index
    %481 = vector.load %arg4[%c2, %c0_259, %c0_260] : memref<3x1x128xf32, #tpu.memory_space<vmem>>, vector<1x1x128xf32>
    %482 = vector.shape_cast %481 : vector<1x1x128xf32> to vector<1x128xf32>
    %483 = vector.broadcast %482 : vector<1x128xf32> to vector<64x128xf32>
    %484 = arith.addf %480, %483 : vector<64x128xf32>
    %c0_261 = arith.constant 0 : index
    %c0_262 = arith.constant 0 : index
    %485 = vector.load %arg11[%c0_261, %c0_262] : memref<64x128xf32, #tpu.memory_space<vmem>>, vector<64x128xf32>
    tpu.vector_store %arg11[%c0_261, %c0_262], %484 {strides = array<i32>} : memref<64x128xf32, #tpu.memory_space<vmem>>, vector<64x128xf32>,
    %cst_263 = arith.constant 0.000000e+00 : f32
    %486 = vector.broadcast %cst_263 : f32 to vector<8x32xf32>
    %c0_264 = arith.constant 0 : index
    %c0_265 = arith.constant 0 : index
    %487 = vector.load %arg12[%c0_264, %c0_265] : memref<8x32xf32, #tpu.memory_space<vmem>>, vector<8x32xf32>
    tpu.vector_store %arg12[%c0_264, %c0_265], %486 {strides = array<i32>} : memref<8x32xf32, #tpu.memory_space<vmem>>, vector<8x32xf32>,
    %cst_266 = arith.constant 0.000000e+00 : f32
    %488 = vector.broadcast %cst_266 : f32 to vector<8x32xf32>
    %c0_267 = arith.constant 0 : index
    %c0_268 = arith.constant 0 : index
    %489 = vector.load %arg13[%c0_267, %c0_268] : memref<8x32xf32, #tpu.memory_space<vmem>>, vector<8x32xf32>
    tpu.vector_store %arg13[%c0_267, %c0_268], %488 {strides = array<i32>} : memref<8x32xf32, #tpu.memory_space<vmem>>, vector<8x32xf32>,
    %c2_269 = arith.constant 2 : index
    %c0_270 = arith.constant 0 : index
    %c0_271 = arith.constant 0 : index
    %490 = vector.load %arg3[%c2_269, %c0_270, %c0_271] : memref<3x32x128xf32, #tpu.memory_space<vmem>>, vector<1x32x128xf32>
    %491 = vector.shape_cast %490 : vector<1x32x128xf32> to vector<32x128xf32>
    %c0_i32_272 = arith.constant 0 : i32
    %c8_i32_273 = arith.constant 8 : i32
    %492 = arith.muli %c0_i32_272, %c8_i32_273 : i32
    %493 = tpu.assume_multiple %492, 8 : i32
    %494 = arith.index_cast %493 : i32 to index
    %c0_274 = arith.constant 0 : index
    %495 = vector.load %arg11[%494, %c0_274] : memref<64x128xf32, #tpu.memory_space<vmem>>, vector<8x128xf32>
    %c0_275 = arith.constant 0 : index
    %c0_276 = arith.constant 0 : index
    %496 = vector.load %arg12[%c0_275, %c0_276] : memref<8x32xf32, #tpu.memory_space<vmem>>, vector<8x32xf32>
    %cst_277 = arith.constant dense<0.000000e+00> : vector<8x128xf32>
    %497 = tpu.matmul %496, %491, %cst_277 {dimension_numbers = #tpu.dot_dimension_numbers<[1], [0], [0], [1], [0, 0, 1, 1], [], []>} : vector<8x32xf32>, vector<32x128xf32>, vector<8x128xf32> -> vector<8x128xf32>
    %498 = arith.addf %495, %497 : vector<8x128xf32>
    %499 = vector.extract_strided_slice %498 {offsets = [0, 0], sizes = [8, 96], strides = [1, 1]} : vector<8x128xf32> to vector<8x96xf32>
    %500 = arith.negf %499 : vector<8x96xf32>
    %501 = math.exp %500 : vector<8x96xf32>
    %cst_278 = arith.constant 1.000000e+00 : f32
    %502 = vector.broadcast %cst_278 : f32 to vector<8x96xf32>
    %503 = arith.addf %502, %501 : vector<8x96xf32>
    %504 = arith.divf %502, %503 : vector<8x96xf32>
    %505 = vector.extract_strided_slice %498 {offsets = [0, 96], sizes = [8, 32], strides = [1, 1]} : vector<8x128xf32> to vector<8x32xf32>
    %506 = math.tanh %505 : vector<8x32xf32>
    %507 = vector.extract_strided_slice %504 {offsets = [0, 0], sizes = [8, 32], strides = [1, 1]} : vector<8x96xf32> to vector<8x32xf32>
    %508 = vector.extract_strided_slice %504 {offsets = [0, 32], sizes = [8, 32], strides = [1, 1]} : vector<8x96xf32> to vector<8x32xf32>
    %509 = vector.extract_strided_slice %504 {offsets = [0, 64], sizes = [8, 32], strides = [1, 1]} : vector<8x96xf32> to vector<8x32xf32>
    %c0_279 = arith.constant 0 : index
    %c0_280 = arith.constant 0 : index
    %510 = vector.load %arg13[%c0_279, %c0_280] : memref<8x32xf32, #tpu.memory_space<vmem>>, vector<8x32xf32>
    %511 = arith.mulf %508, %510 : vector<8x32xf32>
    %512 = arith.mulf %507, %506 : vector<8x32xf32>
    %513 = arith.addf %511, %512 : vector<8x32xf32>
    %514 = math.tanh %513 : vector<8x32xf32>
    %515 = arith.mulf %509, %514 : vector<8x32xf32>
    %c0_281 = arith.constant 0 : index
    %c0_282 = arith.constant 0 : index
    %516 = vector.load %arg13[%c0_281, %c0_282] : memref<8x32xf32, #tpu.memory_space<vmem>>, vector<8x32xf32>
    tpu.vector_store %arg13[%c0_281, %c0_282], %513 {strides = array<i32>} : memref<8x32xf32, #tpu.memory_space<vmem>>, vector<8x32xf32>,
    %c0_283 = arith.constant 0 : index
    %c0_284 = arith.constant 0 : index
    %517 = vector.load %arg12[%c0_283, %c0_284] : memref<8x32xf32, #tpu.memory_space<vmem>>, vector<8x32xf32>
    tpu.vector_store %arg12[%c0_283, %c0_284], %515 {strides = array<i32>} : memref<8x32xf32, #tpu.memory_space<vmem>>, vector<8x32xf32>,
    %c1_i32_285 = arith.constant 1 : i32
    %c8_i32_286 = arith.constant 8 : i32
    %518 = arith.muli %c1_i32_285, %c8_i32_286 : i32
    %519 = tpu.assume_multiple %518, 8 : i32
    %520 = arith.index_cast %519 : i32 to index
    %c0_287 = arith.constant 0 : index
    %521 = vector.load %arg11[%520, %c0_287] : memref<64x128xf32, #tpu.memory_space<vmem>>, vector<8x128xf32>
    %c0_288 = arith.constant 0 : index
    %c0_289 = arith.constant 0 : index
    %522 = vector.load %arg12[%c0_288, %c0_289] : memref<8x32xf32, #tpu.memory_space<vmem>>, vector<8x32xf32>
    %cst_290 = arith.constant dense<0.000000e+00> : vector<8x128xf32>
    %523 = tpu.matmul %522, %491, %cst_290 {dimension_numbers = #tpu.dot_dimension_numbers<[1], [0], [0], [1], [0, 0, 1, 1], [], []>} : vector<8x32xf32>, vector<32x128xf32>, vector<8x128xf32> -> vector<8x128xf32>
    %524 = arith.addf %521, %523 : vector<8x128xf32>
    %525 = vector.extract_strided_slice %524 {offsets = [0, 0], sizes = [8, 96], strides = [1, 1]} : vector<8x128xf32> to vector<8x96xf32>
    %526 = arith.negf %525 : vector<8x96xf32>
    %527 = math.exp %526 : vector<8x96xf32>
    %cst_291 = arith.constant 1.000000e+00 : f32
    %528 = vector.broadcast %cst_291 : f32 to vector<8x96xf32>
    %529 = arith.addf %528, %527 : vector<8x96xf32>
    %530 = arith.divf %528, %529 : vector<8x96xf32>
    %531 = vector.extract_strided_slice %524 {offsets = [0, 96], sizes = [8, 32], strides = [1, 1]} : vector<8x128xf32> to vector<8x32xf32>
    %532 = math.tanh %531 : vector<8x32xf32>
    %533 = vector.extract_strided_slice %530 {offsets = [0, 0], sizes = [8, 32], strides = [1, 1]} : vector<8x96xf32> to vector<8x32xf32>
    %534 = vector.extract_strided_slice %530 {offsets = [0, 32], sizes = [8, 32], strides = [1, 1]} : vector<8x96xf32> to vector<8x32xf32>
    %535 = vector.extract_strided_slice %530 {offsets = [0, 64], sizes = [8, 32], strides = [1, 1]} : vector<8x96xf32> to vector<8x32xf32>
    %c0_292 = arith.constant 0 : index
    %c0_293 = arith.constant 0 : index
    %536 = vector.load %arg13[%c0_292, %c0_293] : memref<8x32xf32, #tpu.memory_space<vmem>>, vector<8x32xf32>
    %537 = arith.mulf %534, %536 : vector<8x32xf32>
    %538 = arith.mulf %533, %532 : vector<8x32xf32>
    %539 = arith.addf %537, %538 : vector<8x32xf32>
    %540 = math.tanh %539 : vector<8x32xf32>
    %541 = arith.mulf %535, %540 : vector<8x32xf32>
    %c0_294 = arith.constant 0 : index
    %c0_295 = arith.constant 0 : index
    %542 = vector.load %arg13[%c0_294, %c0_295] : memref<8x32xf32, #tpu.memory_space<vmem>>, vector<8x32xf32>
    tpu.vector_store %arg13[%c0_294, %c0_295], %539 {strides = array<i32>} : memref<8x32xf32, #tpu.memory_space<vmem>>, vector<8x32xf32>,
    %c0_296 = arith.constant 0 : index
    %c0_297 = arith.constant 0 : index
    %543 = vector.load %arg12[%c0_296, %c0_297] : memref<8x32xf32, #tpu.memory_space<vmem>>, vector<8x32xf32>
    tpu.vector_store %arg12[%c0_296, %c0_297], %541 {strides = array<i32>} : memref<8x32xf32, #tpu.memory_space<vmem>>, vector<8x32xf32>,
    %c2_i32_298 = arith.constant 2 : i32
    %c8_i32_299 = arith.constant 8 : i32
    %544 = arith.muli %c2_i32_298, %c8_i32_299 : i32
    %545 = tpu.assume_multiple %544, 8 : i32
    %546 = arith.index_cast %545 : i32 to index
    %c0_300 = arith.constant 0 : index
    %547 = vector.load %arg11[%546, %c0_300] : memref<64x128xf32, #tpu.memory_space<vmem>>, vector<8x128xf32>
    %c0_301 = arith.constant 0 : index
    %c0_302 = arith.constant 0 : index
    %548 = vector.load %arg12[%c0_301, %c0_302] : memref<8x32xf32, #tpu.memory_space<vmem>>, vector<8x32xf32>
    %cst_303 = arith.constant dense<0.000000e+00> : vector<8x128xf32>
    %549 = tpu.matmul %548, %491, %cst_303 {dimension_numbers = #tpu.dot_dimension_numbers<[1], [0], [0], [1], [0, 0, 1, 1], [], []>} : vector<8x32xf32>, vector<32x128xf32>, vector<8x128xf32> -> vector<8x128xf32>
    %550 = arith.addf %547, %549 : vector<8x128xf32>
    %551 = vector.extract_strided_slice %550 {offsets = [0, 0], sizes = [8, 96], strides = [1, 1]} : vector<8x128xf32> to vector<8x96xf32>
    %552 = arith.negf %551 : vector<8x96xf32>
    %553 = math.exp %552 : vector<8x96xf32>
    %cst_304 = arith.constant 1.000000e+00 : f32
    %554 = vector.broadcast %cst_304 : f32 to vector<8x96xf32>
    %555 = arith.addf %554, %553 : vector<8x96xf32>
    %556 = arith.divf %554, %555 : vector<8x96xf32>
    %557 = vector.extract_strided_slice %550 {offsets = [0, 96], sizes = [8, 32], strides = [1, 1]} : vector<8x128xf32> to vector<8x32xf32>
    %558 = math.tanh %557 : vector<8x32xf32>
    %559 = vector.extract_strided_slice %556 {offsets = [0, 0], sizes = [8, 32], strides = [1, 1]} : vector<8x96xf32> to vector<8x32xf32>
    %560 = vector.extract_strided_slice %556 {offsets = [0, 32], sizes = [8, 32], strides = [1, 1]} : vector<8x96xf32> to vector<8x32xf32>
    %561 = vector.extract_strided_slice %556 {offsets = [0, 64], sizes = [8, 32], strides = [1, 1]} : vector<8x96xf32> to vector<8x32xf32>
    %c0_305 = arith.constant 0 : index
    %c0_306 = arith.constant 0 : index
    %562 = vector.load %arg13[%c0_305, %c0_306] : memref<8x32xf32, #tpu.memory_space<vmem>>, vector<8x32xf32>
    %563 = arith.mulf %560, %562 : vector<8x32xf32>
    %564 = arith.mulf %559, %558 : vector<8x32xf32>
    %565 = arith.addf %563, %564 : vector<8x32xf32>
    %566 = math.tanh %565 : vector<8x32xf32>
    %567 = arith.mulf %561, %566 : vector<8x32xf32>
    %c0_307 = arith.constant 0 : index
    %c0_308 = arith.constant 0 : index
    %568 = vector.load %arg13[%c0_307, %c0_308] : memref<8x32xf32, #tpu.memory_space<vmem>>, vector<8x32xf32>
    tpu.vector_store %arg13[%c0_307, %c0_308], %565 {strides = array<i32>} : memref<8x32xf32, #tpu.memory_space<vmem>>, vector<8x32xf32>,
    %c0_309 = arith.constant 0 : index
    %c0_310 = arith.constant 0 : index
    %569 = vector.load %arg12[%c0_309, %c0_310] : memref<8x32xf32, #tpu.memory_space<vmem>>, vector<8x32xf32>
    tpu.vector_store %arg12[%c0_309, %c0_310], %567 {strides = array<i32>} : memref<8x32xf32, #tpu.memory_space<vmem>>, vector<8x32xf32>,
    %c3_i32_311 = arith.constant 3 : i32
    %c8_i32_312 = arith.constant 8 : i32
    %570 = arith.muli %c3_i32_311, %c8_i32_312 : i32
    %571 = tpu.assume_multiple %570, 8 : i32
    %572 = arith.index_cast %571 : i32 to index
    %c0_313 = arith.constant 0 : index
    %573 = vector.load %arg11[%572, %c0_313] : memref<64x128xf32, #tpu.memory_space<vmem>>, vector<8x128xf32>
    %c0_314 = arith.constant 0 : index
    %c0_315 = arith.constant 0 : index
    %574 = vector.load %arg12[%c0_314, %c0_315] : memref<8x32xf32, #tpu.memory_space<vmem>>, vector<8x32xf32>
    %cst_316 = arith.constant dense<0.000000e+00> : vector<8x128xf32>
    %575 = tpu.matmul %574, %491, %cst_316 {dimension_numbers = #tpu.dot_dimension_numbers<[1], [0], [0], [1], [0, 0, 1, 1], [], []>} : vector<8x32xf32>, vector<32x128xf32>, vector<8x128xf32> -> vector<8x128xf32>
    %576 = arith.addf %573, %575 : vector<8x128xf32>
    %577 = vector.extract_strided_slice %576 {offsets = [0, 0], sizes = [8, 96], strides = [1, 1]} : vector<8x128xf32> to vector<8x96xf32>
    %578 = arith.negf %577 : vector<8x96xf32>
    %579 = math.exp %578 : vector<8x96xf32>
    %cst_317 = arith.constant 1.000000e+00 : f32
    %580 = vector.broadcast %cst_317 : f32 to vector<8x96xf32>
    %581 = arith.addf %580, %579 : vector<8x96xf32>
    %582 = arith.divf %580, %581 : vector<8x96xf32>
    %583 = vector.extract_strided_slice %576 {offsets = [0, 96], sizes = [8, 32], strides = [1, 1]} : vector<8x128xf32> to vector<8x32xf32>
    %584 = math.tanh %583 : vector<8x32xf32>
    %585 = vector.extract_strided_slice %582 {offsets = [0, 0], sizes = [8, 32], strides = [1, 1]} : vector<8x96xf32> to vector<8x32xf32>
    %586 = vector.extract_strided_slice %582 {offsets = [0, 32], sizes = [8, 32], strides = [1, 1]} : vector<8x96xf32> to vector<8x32xf32>
    %587 = vector.extract_strided_slice %582 {offsets = [0, 64], sizes = [8, 32], strides = [1, 1]} : vector<8x96xf32> to vector<8x32xf32>
    %c0_318 = arith.constant 0 : index
    %c0_319 = arith.constant 0 : index
    %588 = vector.load %arg13[%c0_318, %c0_319] : memref<8x32xf32, #tpu.memory_space<vmem>>, vector<8x32xf32>
    %589 = arith.mulf %586, %588 : vector<8x32xf32>
    %590 = arith.mulf %585, %584 : vector<8x32xf32>
    %591 = arith.addf %589, %590 : vector<8x32xf32>
    %592 = math.tanh %591 : vector<8x32xf32>
    %593 = arith.mulf %587, %592 : vector<8x32xf32>
    %c0_320 = arith.constant 0 : index
    %c0_321 = arith.constant 0 : index
    %594 = vector.load %arg13[%c0_320, %c0_321] : memref<8x32xf32, #tpu.memory_space<vmem>>, vector<8x32xf32>
    tpu.vector_store %arg13[%c0_320, %c0_321], %591 {strides = array<i32>} : memref<8x32xf32, #tpu.memory_space<vmem>>, vector<8x32xf32>,
    %c0_322 = arith.constant 0 : index
    %c0_323 = arith.constant 0 : index
    %595 = vector.load %arg12[%c0_322, %c0_323] : memref<8x32xf32, #tpu.memory_space<vmem>>, vector<8x32xf32>
    tpu.vector_store %arg12[%c0_322, %c0_323], %593 {strides = array<i32>} : memref<8x32xf32, #tpu.memory_space<vmem>>, vector<8x32xf32>,
    %c4_i32_324 = arith.constant 4 : i32
    %c8_i32_325 = arith.constant 8 : i32
    %596 = arith.muli %c4_i32_324, %c8_i32_325 : i32
    %597 = tpu.assume_multiple %596, 8 : i32
    %598 = arith.index_cast %597 : i32 to index
    %c0_326 = arith.constant 0 : index
    %599 = vector.load %arg11[%598, %c0_326] : memref<64x128xf32, #tpu.memory_space<vmem>>, vector<8x128xf32>
    %c0_327 = arith.constant 0 : index
    %c0_328 = arith.constant 0 : index
    %600 = vector.load %arg12[%c0_327, %c0_328] : memref<8x32xf32, #tpu.memory_space<vmem>>, vector<8x32xf32>
    %cst_329 = arith.constant dense<0.000000e+00> : vector<8x128xf32>
    %601 = tpu.matmul %600, %491, %cst_329 {dimension_numbers = #tpu.dot_dimension_numbers<[1], [0], [0], [1], [0, 0, 1, 1], [], []>} : vector<8x32xf32>, vector<32x128xf32>, vector<8x128xf32> -> vector<8x128xf32>
    %602 = arith.addf %599, %601 : vector<8x128xf32>
    %603 = vector.extract_strided_slice %602 {offsets = [0, 0], sizes = [8, 96], strides = [1, 1]} : vector<8x128xf32> to vector<8x96xf32>
    %604 = arith.negf %603 : vector<8x96xf32>
    %605 = math.exp %604 : vector<8x96xf32>
    %cst_330 = arith.constant 1.000000e+00 : f32
    %606 = vector.broadcast %cst_330 : f32 to vector<8x96xf32>
    %607 = arith.addf %606, %605 : vector<8x96xf32>
    %608 = arith.divf %606, %607 : vector<8x96xf32>
    %609 = vector.extract_strided_slice %602 {offsets = [0, 96], sizes = [8, 32], strides = [1, 1]} : vector<8x128xf32> to vector<8x32xf32>
    %610 = math.tanh %609 : vector<8x32xf32>
    %611 = vector.extract_strided_slice %608 {offsets = [0, 0], sizes = [8, 32], strides = [1, 1]} : vector<8x96xf32> to vector<8x32xf32>
    %612 = vector.extract_strided_slice %608 {offsets = [0, 32], sizes = [8, 32], strides = [1, 1]} : vector<8x96xf32> to vector<8x32xf32>
    %613 = vector.extract_strided_slice %608 {offsets = [0, 64], sizes = [8, 32], strides = [1, 1]} : vector<8x96xf32> to vector<8x32xf32>
    %c0_331 = arith.constant 0 : index
    %c0_332 = arith.constant 0 : index
    %614 = vector.load %arg13[%c0_331, %c0_332] : memref<8x32xf32, #tpu.memory_space<vmem>>, vector<8x32xf32>
    %615 = arith.mulf %612, %614 : vector<8x32xf32>
    %616 = arith.mulf %611, %610 : vector<8x32xf32>
    %617 = arith.addf %615, %616 : vector<8x32xf32>
    %618 = math.tanh %617 : vector<8x32xf32>
    %619 = arith.mulf %613, %618 : vector<8x32xf32>
    %c0_333 = arith.constant 0 : index
    %c0_334 = arith.constant 0 : index
    %620 = vector.load %arg13[%c0_333, %c0_334] : memref<8x32xf32, #tpu.memory_space<vmem>>, vector<8x32xf32>
    tpu.vector_store %arg13[%c0_333, %c0_334], %617 {strides = array<i32>} : memref<8x32xf32, #tpu.memory_space<vmem>>, vector<8x32xf32>,
    %c0_335 = arith.constant 0 : index
    %c0_336 = arith.constant 0 : index
    %621 = vector.load %arg12[%c0_335, %c0_336] : memref<8x32xf32, #tpu.memory_space<vmem>>, vector<8x32xf32>
    tpu.vector_store %arg12[%c0_335, %c0_336], %619 {strides = array<i32>} : memref<8x32xf32, #tpu.memory_space<vmem>>, vector<8x32xf32>,
    %c5_i32_337 = arith.constant 5 : i32
    %c8_i32_338 = arith.constant 8 : i32
    %622 = arith.muli %c5_i32_337, %c8_i32_338 : i32
    %623 = tpu.assume_multiple %622, 8 : i32
    %624 = arith.index_cast %623 : i32 to index
    %c0_339 = arith.constant 0 : index
    %625 = vector.load %arg11[%624, %c0_339] : memref<64x128xf32, #tpu.memory_space<vmem>>, vector<8x128xf32>
    %c0_340 = arith.constant 0 : index
    %c0_341 = arith.constant 0 : index
    %626 = vector.load %arg12[%c0_340, %c0_341] : memref<8x32xf32, #tpu.memory_space<vmem>>, vector<8x32xf32>
    %cst_342 = arith.constant dense<0.000000e+00> : vector<8x128xf32>
    %627 = tpu.matmul %626, %491, %cst_342 {dimension_numbers = #tpu.dot_dimension_numbers<[1], [0], [0], [1], [0, 0, 1, 1], [], []>} : vector<8x32xf32>, vector<32x128xf32>, vector<8x128xf32> -> vector<8x128xf32>
    %628 = arith.addf %625, %627 : vector<8x128xf32>
    %629 = vector.extract_strided_slice %628 {offsets = [0, 0], sizes = [8, 96], strides = [1, 1]} : vector<8x128xf32> to vector<8x96xf32>
    %630 = arith.negf %629 : vector<8x96xf32>
    %631 = math.exp %630 : vector<8x96xf32>
    %cst_343 = arith.constant 1.000000e+00 : f32
    %632 = vector.broadcast %cst_343 : f32 to vector<8x96xf32>
    %633 = arith.addf %632, %631 : vector<8x96xf32>
    %634 = arith.divf %632, %633 : vector<8x96xf32>
    %635 = vector.extract_strided_slice %628 {offsets = [0, 96], sizes = [8, 32], strides = [1, 1]} : vector<8x128xf32> to vector<8x32xf32>
    %636 = math.tanh %635 : vector<8x32xf32>
    %637 = vector.extract_strided_slice %634 {offsets = [0, 0], sizes = [8, 32], strides = [1, 1]} : vector<8x96xf32> to vector<8x32xf32>
    %638 = vector.extract_strided_slice %634 {offsets = [0, 32], sizes = [8, 32], strides = [1, 1]} : vector<8x96xf32> to vector<8x32xf32>
    %639 = vector.extract_strided_slice %634 {offsets = [0, 64], sizes = [8, 32], strides = [1, 1]} : vector<8x96xf32> to vector<8x32xf32>
    %c0_344 = arith.constant 0 : index
    %c0_345 = arith.constant 0 : index
    %640 = vector.load %arg13[%c0_344, %c0_345] : memref<8x32xf32, #tpu.memory_space<vmem>>, vector<8x32xf32>
    %641 = arith.mulf %638, %640 : vector<8x32xf32>
    %642 = arith.mulf %637, %636 : vector<8x32xf32>
    %643 = arith.addf %641, %642 : vector<8x32xf32>
    %644 = math.tanh %643 : vector<8x32xf32>
    %645 = arith.mulf %639, %644 : vector<8x32xf32>
    %c0_346 = arith.constant 0 : index
    %c0_347 = arith.constant 0 : index
    %646 = vector.load %arg13[%c0_346, %c0_347] : memref<8x32xf32, #tpu.memory_space<vmem>>, vector<8x32xf32>
    tpu.vector_store %arg13[%c0_346, %c0_347], %643 {strides = array<i32>} : memref<8x32xf32, #tpu.memory_space<vmem>>, vector<8x32xf32>,
    %c0_348 = arith.constant 0 : index
    %c0_349 = arith.constant 0 : index
    %647 = vector.load %arg12[%c0_348, %c0_349] : memref<8x32xf32, #tpu.memory_space<vmem>>, vector<8x32xf32>
    tpu.vector_store %arg12[%c0_348, %c0_349], %645 {strides = array<i32>} : memref<8x32xf32, #tpu.memory_space<vmem>>, vector<8x32xf32>,
    %c6_i32_350 = arith.constant 6 : i32
    %c8_i32_351 = arith.constant 8 : i32
    %648 = arith.muli %c6_i32_350, %c8_i32_351 : i32
    %649 = tpu.assume_multiple %648, 8 : i32
    %650 = arith.index_cast %649 : i32 to index
    %c0_352 = arith.constant 0 : index
    %651 = vector.load %arg11[%650, %c0_352] : memref<64x128xf32, #tpu.memory_space<vmem>>, vector<8x128xf32>
    %c0_353 = arith.constant 0 : index
    %c0_354 = arith.constant 0 : index
    %652 = vector.load %arg12[%c0_353, %c0_354] : memref<8x32xf32, #tpu.memory_space<vmem>>, vector<8x32xf32>
    %cst_355 = arith.constant dense<0.000000e+00> : vector<8x128xf32>
    %653 = tpu.matmul %652, %491, %cst_355 {dimension_numbers = #tpu.dot_dimension_numbers<[1], [0], [0], [1], [0, 0, 1, 1], [], []>} : vector<8x32xf32>, vector<32x128xf32>, vector<8x128xf32> -> vector<8x128xf32>
    %654 = arith.addf %651, %653 : vector<8x128xf32>
    %655 = vector.extract_strided_slice %654 {offsets = [0, 0], sizes = [8, 96], strides = [1, 1]} : vector<8x128xf32> to vector<8x96xf32>
    %656 = arith.negf %655 : vector<8x96xf32>
    %657 = math.exp %656 : vector<8x96xf32>
    %cst_356 = arith.constant 1.000000e+00 : f32
    %658 = vector.broadcast %cst_356 : f32 to vector<8x96xf32>
    %659 = arith.addf %658, %657 : vector<8x96xf32>
    %660 = arith.divf %658, %659 : vector<8x96xf32>
    %661 = vector.extract_strided_slice %654 {offsets = [0, 96], sizes = [8, 32], strides = [1, 1]} : vector<8x128xf32> to vector<8x32xf32>
    %662 = math.tanh %661 : vector<8x32xf32>
    %663 = vector.extract_strided_slice %660 {offsets = [0, 0], sizes = [8, 32], strides = [1, 1]} : vector<8x96xf32> to vector<8x32xf32>
    %664 = vector.extract_strided_slice %660 {offsets = [0, 32], sizes = [8, 32], strides = [1, 1]} : vector<8x96xf32> to vector<8x32xf32>
    %665 = vector.extract_strided_slice %660 {offsets = [0, 64], sizes = [8, 32], strides = [1, 1]} : vector<8x96xf32> to vector<8x32xf32>
    %c0_357 = arith.constant 0 : index
    %c0_358 = arith.constant 0 : index
    %666 = vector.load %arg13[%c0_357, %c0_358] : memref<8x32xf32, #tpu.memory_space<vmem>>, vector<8x32xf32>
    %667 = arith.mulf %664, %666 : vector<8x32xf32>
    %668 = arith.mulf %663, %662 : vector<8x32xf32>
    %669 = arith.addf %667, %668 : vector<8x32xf32>
    %670 = math.tanh %669 : vector<8x32xf32>
    %671 = arith.mulf %665, %670 : vector<8x32xf32>
    %c0_359 = arith.constant 0 : index
    %c0_360 = arith.constant 0 : index
    %672 = vector.load %arg13[%c0_359, %c0_360] : memref<8x32xf32, #tpu.memory_space<vmem>>, vector<8x32xf32>
    tpu.vector_store %arg13[%c0_359, %c0_360], %669 {strides = array<i32>} : memref<8x32xf32, #tpu.memory_space<vmem>>, vector<8x32xf32>,
    %c0_361 = arith.constant 0 : index
    %c0_362 = arith.constant 0 : index
    %673 = vector.load %arg12[%c0_361, %c0_362] : memref<8x32xf32, #tpu.memory_space<vmem>>, vector<8x32xf32>
    tpu.vector_store %arg12[%c0_361, %c0_362], %671 {strides = array<i32>} : memref<8x32xf32, #tpu.memory_space<vmem>>, vector<8x32xf32>,
    %c7_i32_363 = arith.constant 7 : i32
    %c8_i32_364 = arith.constant 8 : i32
    %674 = arith.muli %c7_i32_363, %c8_i32_364 : i32
    %675 = tpu.assume_multiple %674, 8 : i32
    %676 = arith.index_cast %675 : i32 to index
    %c0_365 = arith.constant 0 : index
    %677 = vector.load %arg11[%676, %c0_365] : memref<64x128xf32, #tpu.memory_space<vmem>>, vector<8x128xf32>
    %c0_366 = arith.constant 0 : index
    %c0_367 = arith.constant 0 : index
    %678 = vector.load %arg12[%c0_366, %c0_367] : memref<8x32xf32, #tpu.memory_space<vmem>>, vector<8x32xf32>
    %cst_368 = arith.constant dense<0.000000e+00> : vector<8x128xf32>
    %679 = tpu.matmul %678, %491, %cst_368 {dimension_numbers = #tpu.dot_dimension_numbers<[1], [0], [0], [1], [0, 0, 1, 1], [], []>} : vector<8x32xf32>, vector<32x128xf32>, vector<8x128xf32> -> vector<8x128xf32>
    %680 = arith.addf %677, %679 : vector<8x128xf32>
    %681 = vector.extract_strided_slice %680 {offsets = [0, 0], sizes = [8, 96], strides = [1, 1]} : vector<8x128xf32> to vector<8x96xf32>
    %682 = arith.negf %681 : vector<8x96xf32>
    %683 = math.exp %682 : vector<8x96xf32>
    %cst_369 = arith.constant 1.000000e+00 : f32
    %684 = vector.broadcast %cst_369 : f32 to vector<8x96xf32>
    %685 = arith.addf %684, %683 : vector<8x96xf32>
    %686 = arith.divf %684, %685 : vector<8x96xf32>
    %687 = vector.extract_strided_slice %680 {offsets = [0, 96], sizes = [8, 32], strides = [1, 1]} : vector<8x128xf32> to vector<8x32xf32>
    %688 = math.tanh %687 : vector<8x32xf32>
    %689 = vector.extract_strided_slice %686 {offsets = [0, 0], sizes = [8, 32], strides = [1, 1]} : vector<8x96xf32> to vector<8x32xf32>
    %690 = vector.extract_strided_slice %686 {offsets = [0, 32], sizes = [8, 32], strides = [1, 1]} : vector<8x96xf32> to vector<8x32xf32>
    %691 = vector.extract_strided_slice %686 {offsets = [0, 64], sizes = [8, 32], strides = [1, 1]} : vector<8x96xf32> to vector<8x32xf32>
    %c0_370 = arith.constant 0 : index
    %c0_371 = arith.constant 0 : index
    %692 = vector.load %arg13[%c0_370, %c0_371] : memref<8x32xf32, #tpu.memory_space<vmem>>, vector<8x32xf32>
    %693 = arith.mulf %690, %692 : vector<8x32xf32>
    %694 = arith.mulf %689, %688 : vector<8x32xf32>
    %695 = arith.addf %693, %694 : vector<8x32xf32>
    %696 = math.tanh %695 : vector<8x32xf32>
    %697 = arith.mulf %691, %696 : vector<8x32xf32>
    %c0_372 = arith.constant 0 : index
    %c0_373 = arith.constant 0 : index
    %698 = vector.load %arg13[%c0_372, %c0_373] : memref<8x32xf32, #tpu.memory_space<vmem>>, vector<8x32xf32>
    tpu.vector_store %arg13[%c0_372, %c0_373], %695 {strides = array<i32>} : memref<8x32xf32, #tpu.memory_space<vmem>>, vector<8x32xf32>,
    %c0_374 = arith.constant 0 : index
    %c0_375 = arith.constant 0 : index
    %699 = vector.load %arg12[%c0_374, %c0_375] : memref<8x32xf32, #tpu.memory_space<vmem>>, vector<8x32xf32>
    tpu.vector_store %arg12[%c0_374, %c0_375], %697 {strides = array<i32>} : memref<8x32xf32, #tpu.memory_space<vmem>>, vector<8x32xf32>,
    %c8_i32_376 = arith.constant 8 : i32
    %c0_377 = arith.constant 0 : index
    %c0_378 = arith.constant 0 : index
    %700 = vector.load %arg12[%c0_377, %c0_378] : memref<8x32xf32, #tpu.memory_space<vmem>>, vector<8x32xf32>
    %c0_379 = arith.constant 0 : index
    %c0_380 = arith.constant 0 : index
    %701 = vector.load %arg5[%c0_379, %c0_380] : memref<32x128xf32, #tpu.memory_space<vmem>>, vector<32x128xf32>
    %cst_381 = arith.constant dense<0.000000e+00> : vector<8x128xf32>
    %702 = tpu.matmul %700, %701, %cst_381 {dimension_numbers = #tpu.dot_dimension_numbers<[1], [0], [0], [1], [0, 0, 1, 1], [], []>} : vector<8x32xf32>, vector<32x128xf32>, vector<8x128xf32> -> vector<8x128xf32>
    %c0_382 = arith.constant 0 : index
    %c0_383 = arith.constant 0 : index
    %703 = vector.load %arg6[%c0_382, %c0_383] : memref<1x128xf32, #tpu.memory_space<vmem>>, vector<1x128xf32>
    %704 = vector.broadcast %703 : vector<1x128xf32> to vector<8x128xf32>
    %705 = arith.addf %702, %704 : vector<8x128xf32>
    %cst_384 = arith.constant 0.000000e+00 : f32
    %706 = vector.broadcast %cst_384 : f32 to vector<8x128xf32>
    %707 = arith.maximumf %705, %706 : vector<8x128xf32>
    %c0_385 = arith.constant 0 : index
    %c0_386 = arith.constant 0 : index
    %708 = vector.load %arg7[%c0_385, %c0_386] : memref<128x128xf32, #tpu.memory_space<vmem>>, vector<128x128xf32>
    %cst_387 = arith.constant dense<0.000000e+00> : vector<8x128xf32>
    %709 = tpu.matmul %707, %708, %cst_387 {dimension_numbers = #tpu.dot_dimension_numbers<[1], [0], [0], [1], [0, 0, 1, 1], [], []>} : vector<8x128xf32>, vector<128x128xf32>, vector<8x128xf32> -> vector<8x128xf32>
    %c0_388 = arith.constant 0 : index
    %c0_389 = arith.constant 0 : index
    %710 = vector.load %arg8[%c0_388, %c0_389] : memref<1x128xf32, #tpu.memory_space<vmem>>, vector<1x128xf32>
    %711 = vector.broadcast %710 : vector<1x128xf32> to vector<8x128xf32>
    %712 = arith.addf %709, %711 : vector<8x128xf32>
    %c0_390 = arith.constant 0 : index
    %c0_391 = arith.constant 0 : index
    %713 = vector.load %arg9[%c0_390, %c0_391] : memref<8x128xf32, #tpu.memory_space<vmem>>, vector<8x128xf32>
    tpu.vector_store %arg9[%c0_390, %c0_391], %712 {strides = array<i32>} : memref<8x128xf32, #tpu.memory_space<vmem>>, vector<8x128xf32>,
    return
  }
}

</mosaic_0001>

<llo_original>
// kernel: lstm_model_forward.1
$region0: #{lstm_model_forward.1}
  #allocation0 [shape = 'u32[]', space=smem, size = 0x4, offset = 0x4, fixed_abs, tag = 'smem constant byte address 0x4 - core index']
  #allocation1 [shape = 'u32[72,128]{1,0:T(1,128)}', space=vmem, size = 0x9000, scoped, tag = 'internal scratch']
  #allocation2 [shape = 'f32[64,32]{1,0:T(8,128)}', space=vmem, size = 0x8000, scoped, tag = 'scratch operand']
  #allocation3 [shape = 'f32[64,128]{1,0:T(8,128)}', space=vmem, size = 0x8000, scoped, tag = 'scratch operand']
  #allocation4 [shape = 'f32[8,32]{1,0:T(8,128)}', space=vmem, size = 0x1000, scoped, tag = 'scratch operand']
  #allocation5 [shape = 'f32[8,32]{1,0:T(8,128)}', space=vmem, size = 0x1000, scoped, tag = 'scratch operand']
  %s0 = inlined_call_operand.vmem [shape: f32[64,8], index: 0, kind: input, shape index: {}]
  %s1 = inlined_call_operand.vmem [shape: f32[8,128], index: 1, kind: input, shape index: {}]
  %s2 = inlined_call_operand.hbm [shape: f32[2,32,128], index: 2, kind: input, shape index: {}]
  %s3 = inlined_call_operand.vmem [shape: f32[3,32,128], index: 3, kind: input, shape index: {}]
  %s4 = inlined_call_operand.vmem [shape: f32[3,1,128], index: 4, kind: input, shape index: {}]
  %s5 = inlined_call_operand.hbm [shape: f32[32,128], index: 5, kind: input, shape index: {}]
  %s6 = inlined_call_operand.vmem [shape: f32[1,128], index: 6, kind: input, shape index: {}]
  %s7 = inlined_call_operand.hbm [shape: f32[128,128], index: 7, kind: input, shape index: {}]
  %s8 = inlined_call_operand.vmem [shape: f32[1,128], index: 8, kind: input, shape index: {}]
  %s9 = inlined_call_operand.vmem [shape: f32[8,128], index: 9, kind: output, shape index: {}]
  %s10 = sld [smem:[#allocation0]]
  $region58: #{lstm_model_forward.1} parent=0
    _
  %s12 = ssub.s32 1, %s10
  %s13 = scalar_select 0, %s12, %s10
  $region1: #{lstm_model_forward.1} parent=0
    #allocation6 [shape = 'u8[32768]{0}', space=vmem, size = 0x8000, scoped, tag = 'input window, operand 2, single buffered']
    #allocation7 [shape = 's32[1]{0}', space=sflag, size = 0x4, scoped, tag = 'scoped memory for lstm_model_forward.1']
    #allocation8 [shape = 'u8[16384]{0}', space=vmem, size = 0x4000, scoped, tag = 'input window, operand 5, single buffered']
    #allocation9 [shape = 's32[1]{0}', space=sflag, size = 0x4, scoped, tag = 'scoped memory for lstm_model_forward.1']
    #allocation10 [shape = 'u8[65536]{0}', space=vmem, size = 0x10000, scoped, tag = 'input window, operand 7, single buffered']
    %14 = vsyncpa [#allocation7], 0
    %15 = vsyncpa [#allocation9], 0
    // Predicated region
    $region2: #{lstm_model_forward.1} parent=1 // pred_check
      _
    $region3: #{lstm_model_forward.1} parent=1 // pred_check_branch
      %17 = sbr.rel (0) target = $region5
    $region4: #{lstm_model_forward.1} parent=1 // pred_region
      _
    $region5: #{lstm_model_forward.1} parent=1 // pred_fallthru
      _
    // Predicated region
    $region6: #{lstm_model_forward.1} parent=1 // pred_check
      _
    $region7: #{lstm_model_forward.1} parent=1 // pred_check_branch
      %19 = sbr.rel (0) target = $region9
    $region8: #{lstm_model_forward.1} parent=1 // pred_region
      _
    $region9: #{lstm_model_forward.1} parent=1 // pred_fallthru
      _
    // Predicated region
    $region10: #{lstm_model_forward.1} parent=1 // pred_check
      _
    $region11: #{lstm_model_forward.1} parent=1 // pred_check_branch
      %21 = sbr.rel (0) target = $region13
    $region12: #{lstm_model_forward.1} parent=1 // pred_region
      %23 = vsyncadd [#allocation7], 0
      %s24 = sshll.u32 %s2, 4
      %s25 = int_to_ptr.hbm [resolvable:$true] %s24
      %s26 = sshll.u32 [#allocation6], 4
      %s27 = int_to_ptr.vmem [resolvable:$true] %s26
      %32 = dma.hbm_to_vmem [thread:$0]  %s25, 1024, %s27, [#allocation7], 128, 128, 8
    $region13: #{lstm_model_forward.1} parent=1 // pred_fallthru
      _
    // Predicated region
    $region14: #{lstm_model_forward.1} parent=1 // pred_check
      _
    $region15: #{lstm_model_forward.1} parent=1 // pred_check_branch
      %34 = sbr.rel (0) target = $region17
    $region16: #{lstm_model_forward.1} parent=1 // pred_region
      _
    $region17: #{lstm_model_forward.1} parent=1 // pred_fallthru
      _
    // Predicated region
    $region18: #{lstm_model_forward.1} parent=1 // pred_check
      _
    $region19: #{lstm_model_forward.1} parent=1 // pred_check_branch
      %36 = sbr.rel (0) target = $region21
    $region20: #{lstm_model_forward.1} parent=1 // pred_region
      _
    $region21: #{lstm_model_forward.1} parent=1 // pred_fallthru
      _
    // Predicated region
    $region22: #{lstm_model_forward.1} parent=1 // pred_check
      _
    $region23: #{lstm_model_forward.1} parent=1 // pred_check_branch
      %38 = sbr.rel (0) target = $region25
    $region24: #{lstm_model_forward.1} parent=1 // pred_region
      %40 = vsyncadd [#allocation9], 0
      %s41 = sshll.u32 %s5, 4
      %s42 = int_to_ptr.hbm [resolvable:$true] %s41
      %s43 = sshll.u32 [#allocation8], 4
      %s44 = int_to_ptr.vmem [resolvable:$true] %s43
      %49 = dma.hbm_to_vmem [thread:$0]  %s42, 512, %s44, [#allocation9], 128, 128, 8
    $region25: #{lstm_model_forward.1} parent=1 // pred_fallthru
      _
    // Predicated region
    $region26: #{lstm_model_forward.1} parent=1 // pred_check
      _
    $region27: #{lstm_model_forward.1} parent=1 // pred_check_branch
      %51 = sbr.rel (0) target = $region29
    $region28: #{lstm_model_forward.1} parent=1 // pred_region
      _
    $region29: #{lstm_model_forward.1} parent=1 // pred_fallthru
      _
    // Predicated region
    $region30: #{lstm_model_forward.1} parent=1 // pred_check
      _
    $region31: #{lstm_model_forward.1} parent=1 // pred_check_branch
      %53 = sbr.rel (0) target = $region33
    $region32: #{lstm_model_forward.1} parent=1 // pred_region
      %55 = vsyncadd [#allocation9], 0
      %s56 = sshll.u32 %s7, 4
      %s57 = int_to_ptr.hbm [resolvable:$true] %s56
      %s58 = sshll.u32 [#allocation10], 4
      %s59 = int_to_ptr.vmem [resolvable:$true] %s58
      %64 = dma.hbm_to_vmem [thread:$0]  %s57, 2048, %s59, [#allocation9], 128, 128, 8
    $region33: #{lstm_model_forward.1} parent=1 // pred_fallthru
      _
    // Predicated region
    $region34: #{lstm_model_forward.1} parent=1 // pred_check
      _
    $region35: #{lstm_model_forward.1} parent=1 // pred_check_branch
      %66 = sbr.rel (0) target = $region37
    $region36: #{lstm_model_forward.1} parent=1 // pred_region
      _
    $region37: #{lstm_model_forward.1} parent=1 // pred_fallthru
      _
    // Predicated region
    $region38: #{lstm_model_forward.1} parent=1 // pred_check
      _
    $region39: #{lstm_model_forward.1} parent=1 // pred_check_branch
      %68 = sbr.rel (0) target = $region41
    $region40: #{lstm_model_forward.1} parent=1 // pred_region
      %70 = dma.done [#allocation7], 1024
    $region41: #{lstm_model_forward.1} parent=1 // pred_fallthru
      _
    // Predicated region
    $region42: #{lstm_model_forward.1} parent=1 // pred_check
      _
    $region43: #{lstm_model_forward.1} parent=1 // pred_check_branch
      %72 = sbr.rel (0) target = $region45
    $region44: #{lstm_model_forward.1} parent=1 // pred_region
      %74 = dma.done [#allocation9], 512
    $region45: #{lstm_model_forward.1} parent=1 // pred_fallthru
      _
    // Predicated region
    $region46: #{lstm_model_forward.1} parent=1 // pred_check
      _
    $region47: #{lstm_model_forward.1} parent=1 // pred_check_branch
      %76 = sbr.rel (0) target = $region49
    $region48: #{lstm_model_forward.1} parent=1 // pred_region
      %78 = dma.done [#allocation9], 2048
    $region49: #{lstm_model_forward.1} parent=1 // pred_fallthru
      _
    %v79 = vld [vmem:[%s0] sm:$0xff]
    %v80 = vld [vmem:[%s0 + $0x8] sm:$0xff]
    %v81 = vld [vmem:[%s0 + $0x10] sm:$0xff]
    %v82 = vld [vmem:[%s0 + $0x18] sm:$0xff]
    %v83 = vld [vmem:[%s0 + $0x20] sm:$0xff]
    %v84 = vld [vmem:[%s0 + $0x28] sm:$0xff]
    %v85 = vld [vmem:[%s0 + $0x30] sm:$0xff]
    %v86 = vld [vmem:[%s0 + $0x38] sm:$0xff]
    %v87 = vld [vmem:[%s1] sm:$0xff]
    %v88 = vld [vmem:[%s4] sm:$0x1]
    %v90 = vperm.slane %v88, 0
    %vm92 = vcmask 64512
    %v94 = vsel %vm92, %v79, 0
    %v97 = vsel %vm92, %v80, 0
    %v100 = vsel %vm92, %v81, 0
    %v103 = vsel %vm92, %v82, 0
    %v106 = vsel %vm92, %v83, 0
    %v109 = vsel %vm92, %v84, 0
    %v112 = vsel %vm92, %v85, 0
    %v115 = vsel %vm92, %v86, 0
    %117 = vmatpush.msra.mxu0 0.0
    %118 = vmatpush.msra.mxu0 0.0
    %119 = vmatpush.msra.mxu0 0.0
    %120 = vmatpush.msra.mxu0 0.0
    %121 = vmatpush.msra.mxu0 0.0
    %122 = vmatpush.msra.mxu0 0.0
    %123 = vmatpush.msra.mxu0 0.0
    %124 = vmatpush.msra.mxu0 0.0
    %125 = vmatpush.msra.mxu0 0.0
    %126 = vmatpush.msra.mxu0 0.0
    %127 = vmatpush.msra.mxu0 0.0
    %128 = vmatpush.msra.mxu0 0.0
    %129 = vmatpush.msra.mxu0 0.0
    %130 = vmatpush.msra.mxu0 0.0
    %131 = vmatpush.msra.mxu0 0.0
    %132 = vmatpush.msra.mxu0 %v87
    %133 = vmatmul.f32.gmra.mxu0 %v94
    %v134 = vpop.f32.mrf.mxu0
    %v135 = vadd.f32 %v90, %v134
    %136 = vmatmul.f32.gmra.mxu0 %v97
    %v137 = vpop.f32.mrf.mxu0
    %v138 = vadd.f32 %v90, %v137
    %139 = vmatmul.f32.gmra.mxu0 %v100
    %v140 = vpop.f32.mrf.mxu0
    %v141 = vadd.f32 %v90, %v140
    %142 = vmatmul.f32.gmra.mxu0 %v103
    %v143 = vpop.f32.mrf.mxu0
    %v144 = vadd.f32 %v90, %v143
    %145 = vmatmul.f32.gmra.mxu0 %v106
    %v146 = vpop.f32.mrf.mxu0
    %v147 = vadd.f32 %v90, %v146
    %148 = vmatmul.f32.gmra.mxu0 %v109
    %v149 = vpop.f32.mrf.mxu0
    %v150 = vadd.f32 %v90, %v149
    %151 = vmatmul.f32.gmra.mxu0 %v112
    %v152 = vpop.f32.mrf.mxu0
    %v153 = vadd.f32 %v90, %v152
    %154 = vmatmul.f32.gmra.mxu0 %v115
    %v155 = vpop.f32.mrf.mxu0
    %v156 = vadd.f32 %v90, %v155
    %157 = vdwg.mxu0
    %158 = vst [vmem:[#allocation3] sm:$0xff] %v135
    %159 = vst [vmem:[#allocation3 + $0x8] sm:$0xff] %v138
    %160 = vst [vmem:[#allocation3 + $0x10] sm:$0xff] %v141
    %161 = vst [vmem:[#allocation3 + $0x18] sm:$0xff] %v144
    %162 = vst [vmem:[#allocation3 + $0x20] sm:$0xff] %v147
    %163 = vst [vmem:[#allocation3 + $0x28] sm:$0xff] %v150
    %164 = vst [vmem:[#allocation3 + $0x30] sm:$0xff] %v153
    %165 = vst [vmem:[#allocation3 + $0x38] sm:$0xff] %v156
    %vm166 = vcmask 261120
    %167 = vst.msk [vmem:[#allocation4] sm:$0xff] %vm166, 0.0
    %168 = vst.msk [vmem:[#allocation5] sm:$0xff] %vm166, 0.0
    %v169 = vld [vmem:[%s3] sm:$0xff]
    %v170 = vld [vmem:[%s3 + $0x8] sm:$0xff]
    %v171 = vld [vmem:[%s3 + $0x10] sm:$0xff]
    %v172 = vld [vmem:[%s3 + $0x18] sm:$0xff]
    %v173 = vld [vmem:[#allocation3] sm:$0xff]
    %v174 = vld [vmem:[#allocation4] sm:$0xff]
    %v176 = vsel %vm166, %v174, 0
    %178 = vmatpush.msra.mxu0 0.0
    %179 = vmatpush.msra.mxu0 0.0
    %180 = vmatpush.msra.mxu0 0.0
    %181 = vmatpush.msra.mxu0 0.0
    %182 = vmatpush.msra.mxu0 0.0
    %183 = vmatpush.msra.mxu0 0.0
    %184 = vmatpush.msra.mxu0 0.0
    %185 = vmatpush.msra.mxu0 0.0
    %186 = vmatpush.msra.mxu0 0.0
    %187 = vmatpush.msra.mxu0 0.0
    %188 = vmatpush.msra.mxu0 0.0
    %189 = vmatpush.msra.mxu0 0.0
    %190 = vmatpush.msra.mxu0 %v172
    %191 = vmatpush.msra.mxu0 %v171
    %192 = vmatpush.msra.mxu0 %v170
    %193 = vmatpush.msra.mxu0 %v169
    %194 = vmatmul.f32.gmra.mxu0 %v176
    %v195 = vpop.f32.mrf.mxu0
    %v196 = vadd.f32 0.0, %v195
    %197 = vdwg.mxu0
    %v198 = vadd.f32 %v173, %v196
    %v199 = vxor.u32 %v198, 2147483648
    %v200 = vmul.f32 %v199, 1.442695
    %v201 = vpow.pop %v200
    %v202 = vadd.f32 %v201, 1.0
    %v203 = vrcp.pop %v202
    %v204 = vmul.f32 %v202, %v203
    %v205 = vsub.f32 1.0, %v204
    %v206 = vmul.f32 %v203, %v205
    %v207 = vadd.f32 %v203, %v206
    %vm208 = vweird.f32 %v202
    %vm209 = vweird.f32 %v203
    %vm210 = vmor %vm208, %vm209
    %v211 = vsel %vm210, %v203, %v207
    %v212 = vand.u32 2147483647, %v202
    %vm213 = vcmp.eq.f32.partialorder %v212, 8.507059e+37
    %v214 = vand.u32 %v202, 2147483648
    %v215 = vor.u32 1.1754944e-38, %v214
    %v216 = vsel %vm213, %v215, %v211
    %v217 = vmul.f32 1.0, %v216
    %v218 = vtanh.pop %v198
    %v219 = vld [vmem:[#allocation5] sm:$0xff]
    %221 = vrot.lane.b32.xlu0 %v219, 32
    %v222 = vpop.permute.xlu0 %221
    %v224 = vmul.f32 %v217, %v222
    %226 = vrot.lane.b32.xlu0 %v218, 32
    %v227 = vpop.permute.xlu0 %226
    %v229 = vmul.f32 %v217, %v227
    %231 = vrot.lane.b32.xlu0 %v229, 32
    %v232 = vpop.permute.xlu0 %231
    %v234 = vadd.f32 %v224, %v232
    %v235 = vtanh.pop %v234
    %237 = vrot.lane.b32.xlu0 %v235, 32
    %v238 = vpop.permute.xlu0 %237
    %v240 = vmul.f32 %v217, %v238
    %242 = vrot.lane.b32.xlu0 %v234, 96
    %v243 = vpop.permute.xlu0 %242
    %245 = vst.msk [vmem:[#allocation5] sm:$0xff] %vm166, %v243
    %247 = vrot.lane.b32.xlu0 %v240, 64
    %v248 = vpop.permute.xlu0 %247
    %250 = vst.msk [vmem:[#allocation4] sm:$0xff] %vm166, %v248
    %251 = vst.msk [vmem:[#allocation2] sm:$0xff] %vm166, %v248
    %s252 = scalar_lea.vmem [#allocation3], 8
    %v253 = vld [vmem:[%s252] sm:$0xff]
    %v254 = vld [vmem:[#allocation4] sm:$0xff]
    %v256 = vsel %vm166, %v254, 0
    %258 = vmatpush.msra.mxu0 0.0
    %259 = vmatpush.msra.mxu0 0.0
    %260 = vmatpush.msra.mxu0 0.0
    %261 = vmatpush.msra.mxu0 0.0
    %262 = vmatpush.msra.mxu0 0.0
    %263 = vmatpush.msra.mxu0 0.0
    %264 = vmatpush.msra.mxu0 0.0
    %265 = vmatpush.msra.mxu0 0.0
    %266 = vmatpush.msra.mxu0 0.0
    %267 = vmatpush.msra.mxu0 0.0
    %268 = vmatpush.msra.mxu0 0.0
    %269 = vmatpush.msra.mxu0 0.0
    %270 = vmatpush.msra.mxu0 %v172
    %271 = vmatpush.msra.mxu0 %v171
    %272 = vmatpush.msra.mxu0 %v170
    %273 = vmatpush.msra.mxu0 %v169
    %274 = vmatmul.f32.gmra.mxu0 %v256
    %v275 = vpop.f32.mrf.mxu0
    %v276 = vadd.f32 0.0, %v275
    %277 = vdwg.mxu0
    %v278 = vadd.f32 %v253, %v276
    %v279 = vxor.u32 %v278, 2147483648
    %v280 = vmul.f32 %v279, 1.442695
    %v281 = vpow.pop %v280
    %v282 = vadd.f32 %v281, 1.0
    %v283 = vrcp.pop %v282
    %v284 = vmul.f32 %v282, %v283
    %v285 = vsub.f32 1.0, %v284
    %v286 = vmul.f32 %v283, %v285
    %v287 = vadd.f32 %v283, %v286
    %vm288 = vweird.f32 %v282
    %vm289 = vweird.f32 %v283
    %vm290 = vmor %vm288, %vm289
    %v291 = vsel %vm290, %v283, %v287
    %v292 = vand.u32 2147483647, %v282
    %vm293 = vcmp.eq.f32.partialorder %v292, 8.507059e+37
    %v294 = vand.u32 %v282, 2147483648
    %v295 = vor.u32 1.1754944e-38, %v294
    %v296 = vsel %vm293, %v295, %v291
    %v297 = vmul.f32 1.0, %v296
    %v298 = vtanh.pop %v278
    %v299 = vld [vmem:[#allocation5] sm:$0xff]
    %301 = vrot.lane.b32.xlu0 %v299, 32
    %v302 = vpop.permute.xlu0 %301
    %v304 = vmul.f32 %v297, %v302
    %306 = vrot.lane.b32.xlu0 %v298, 32
    %v307 = vpop.permute.xlu0 %306
    %v309 = vmul.f32 %v297, %v307
    %311 = vrot.lane.b32.xlu0 %v309, 32
    %v312 = vpop.permute.xlu0 %311
    %v314 = vadd.f32 %v304, %v312
    %v315 = vtanh.pop %v314
    %317 = vrot.lane.b32.xlu0 %v315, 32
    %v318 = vpop.permute.xlu0 %317
    %v320 = vmul.f32 %v297, %v318
    %322 = vrot.lane.b32.xlu0 %v314, 96
    %v323 = vpop.permute.xlu0 %322
    %325 = vst.msk [vmem:[#allocation5] sm:$0xff] %vm166, %v323
    %327 = vrot.lane.b32.xlu0 %v320, 64
    %v328 = vpop.permute.xlu0 %327
    %330 = vst.msk [vmem:[#allocation4] sm:$0xff] %vm166, %v328
    %s331 = scalar_lea.vmem [#allocation2], 8
    %332 = vst.msk [vmem:[%s331] sm:$0xff] %vm166, %v328
    %s333 = scalar_lea.vmem [#allocation3], 16
    %v334 = vld [vmem:[%s333] sm:$0xff]
    %v335 = vld [vmem:[#allocation4] sm:$0xff]
    %v337 = vsel %vm166, %v335, 0
    %339 = vmatpush.msra.mxu0 0.0
    %340 = vmatpush.msra.mxu0 0.0
    %341 = vmatpush.msra.mxu0 0.0
    %342 = vmatpush.msra.mxu0 0.0
    %343 = vmatpush.msra.mxu0 0.0
    %344 = vmatpush.msra.mxu0 0.0
    %345 = vmatpush.msra.mxu0 0.0
    %346 = vmatpush.msra.mxu0 0.0
    %347 = vmatpush.msra.mxu0 0.0
    %348 = vmatpush.msra.mxu0 0.0
    %349 = vmatpush.msra.mxu0 0.0
    %350 = vmatpush.msra.mxu0 0.0
    %351 = vmatpush.msra.mxu0 %v172
    %352 = vmatpush.msra.mxu0 %v171
    %353 = vmatpush.msra.mxu0 %v170
    %354 = vmatpush.msra.mxu0 %v169
    %355 = vmatmul.f32.gmra.mxu0 %v337
    %v356 = vpop.f32.mrf.mxu0
    %v357 = vadd.f32 0.0, %v356
    %358 = vdwg.mxu0
    %v359 = vadd.f32 %v334, %v357
    %v360 = vxor.u32 %v359, 2147483648
    %v361 = vmul.f32 %v360, 1.442695
    %v362 = vpow.pop %v361
    %v363 = vadd.f32 %v362, 1.0
    %v364 = vrcp.pop %v363
    %v365 = vmul.f32 %v363, %v364
    %v366 = vsub.f32 1.0, %v365
    %v367 = vmul.f32 %v364, %v366
    %v368 = vadd.f32 %v364, %v367
    %vm369 = vweird.f32 %v363
    %vm370 = vweird.f32 %v364
    %vm371 = vmor %vm369, %vm370
    %v372 = vsel %vm371, %v364, %v368
    %v373 = vand.u32 2147483647, %v363
    %vm374 = vcmp.eq.f32.partialorder %v373, 8.507059e+37
    %v375 = vand.u32 %v363, 2147483648
    %v376 = vor.u32 1.1754944e-38, %v375
    %v377 = vsel %vm374, %v376, %v372
    %v378 = vmul.f32 1.0, %v377
    %v379 = vtanh.pop %v359
    %v380 = vld [vmem:[#allocation5] sm:$0xff]
    %382 = vrot.lane.b32.xlu0 %v380, 32
    %v383 = vpop.permute.xlu0 %382
    %v385 = vmul.f32 %v378, %v383
    %387 = vrot.lane.b32.xlu0 %v379, 32
    %v388 = vpop.permute.xlu0 %387
    %v390 = vmul.f32 %v378, %v388
    %392 = vrot.lane.b32.xlu0 %v390, 32
    %v393 = vpop.permute.xlu0 %392
    %v395 = vadd.f32 %v385, %v393
    %v396 = vtanh.pop %v395
    %398 = vrot.lane.b32.xlu0 %v396, 32
    %v399 = vpop.permute.xlu0 %398
    %v401 = vmul.f32 %v378, %v399
    %403 = vrot.lane.b32.xlu0 %v395, 96
    %v404 = vpop.permute.xlu0 %403
    %406 = vst.msk [vmem:[#allocation5] sm:$0xff] %vm166, %v404
    %408 = vrot.lane.b32.xlu0 %v401, 64
    %v409 = vpop.permute.xlu0 %408
    %411 = vst.msk [vmem:[#allocation4] sm:$0xff] %vm166, %v409
    %s412 = scalar_lea.vmem [#allocation2], 16
    %413 = vst.msk [vmem:[%s412] sm:$0xff] %vm166, %v409
    %s414 = scalar_lea.vmem [#allocation3], 24
    %v415 = vld [vmem:[%s414] sm:$0xff]
    %v416 = vld [vmem:[#allocation4] sm:$0xff]
    %v418 = vsel %vm166, %v416, 0
    %420 = vmatpush.msra.mxu0 0.0
    %421 = vmatpush.msra.mxu0 0.0
    %422 = vmatpush.msra.mxu0 0.0
    %423 = vmatpush.msra.mxu0 0.0
    %424 = vmatpush.msra.mxu0 0.0
    %425 = vmatpush.msra.mxu0 0.0
    %426 = vmatpush.msra.mxu0 0.0
    %427 = vmatpush.msra.mxu0 0.0
    %428 = vmatpush.msra.mxu0 0.0
    %429 = vmatpush.msra.mxu0 0.0
    %430 = vmatpush.msra.mxu0 0.0
    %431 = vmatpush.msra.mxu0 0.0
    %432 = vmatpush.msra.mxu0 %v172
    %433 = vmatpush.msra.mxu0 %v171
    %434 = vmatpush.msra.mxu0 %v170
    %435 = vmatpush.msra.mxu0 %v169
    %436 = vmatmul.f32.gmra.mxu0 %v418
    %v437 = vpop.f32.mrf.mxu0
    %v438 = vadd.f32 0.0, %v437
    %439 = vdwg.mxu0
    %v440 = vadd.f32 %v415, %v438
    %v441 = vxor.u32 %v440, 2147483648
    %v442 = vmul.f32 %v441, 1.442695
    %v443 = vpow.pop %v442
    %v444 = vadd.f32 %v443, 1.0
    %v445 = vrcp.pop %v444
    %v446 = vmul.f32 %v444, %v445
    %v447 = vsub.f32 1.0, %v446
    %v448 = vmul.f32 %v445, %v447
    %v449 = vadd.f32 %v445, %v448
    %vm450 = vweird.f32 %v444
    %vm451 = vweird.f32 %v445
    %vm452 = vmor %vm450, %vm451
    %v453 = vsel %vm452, %v445, %v449
    %v454 = vand.u32 2147483647, %v444
    %vm455 = vcmp.eq.f32.partialorder %v454, 8.507059e+37
    %v456 = vand.u32 %v444, 2147483648
    %v457 = vor.u32 1.1754944e-38, %v456
    %v458 = vsel %vm455, %v457, %v453
    %v459 = vmul.f32 1.0, %v458
    %v460 = vtanh.pop %v440
    %v461 = vld [vmem:[#allocation5] sm:$0xff]
    %463 = vrot.lane.b32.xlu0 %v461, 32
    %v464 = vpop.permute.xlu0 %463
    %v466 = vmul.f32 %v459, %v464
    %468 = vrot.lane.b32.xlu0 %v460, 32
    %v469 = vpop.permute.xlu0 %468
    %v471 = vmul.f32 %v459, %v469
    %473 = vrot.lane.b32.xlu0 %v471, 32
    %v474 = vpop.permute.xlu0 %473
    %v476 = vadd.f32 %v466, %v474
    %v477 = vtanh.pop %v476
    %479 = vrot.lane.b32.xlu0 %v477, 32
    %v480 = vpop.permute.xlu0 %479
    %v482 = vmul.f32 %v459, %v480
    %484 = vrot.lane.b32.xlu0 %v476, 96
    %v485 = vpop.permute.xlu0 %484
    %487 = vst.msk [vmem:[#allocation5] sm:$0xff] %vm166, %v485
    %489 = vrot.lane.b32.xlu0 %v482, 64
    %v490 = vpop.permute.xlu0 %489
    %492 = vst.msk [vmem:[#allocation4] sm:$0xff] %vm166, %v490
    %s493 = scalar_lea.vmem [#allocation2], 24
    %494 = vst.msk [vmem:[%s493] sm:$0xff] %vm166, %v490
    %s495 = scalar_lea.vmem [#allocation3], 32
    %v496 = vld [vmem:[%s495] sm:$0xff]
    %v497 = vld [vmem:[#allocation4] sm:$0xff]
    %v499 = vsel %vm166, %v497, 0
    %501 = vmatpush.msra.mxu0 0.0
    %502 = vmatpush.msra.mxu0 0.0
    %503 = vmatpush.msra.mxu0 0.0
    %504 = vmatpush.msra.mxu0 0.0
    %505 = vmatpush.msra.mxu0 0.0
    %506 = vmatpush.msra.mxu0 0.0
    %507 = vmatpush.msra.mxu0 0.0
    %508 = vmatpush.msra.mxu0 0.0
    %509 = vmatpush.msra.mxu0 0.0
    %510 = vmatpush.msra.mxu0 0.0
    %511 = vmatpush.msra.mxu0 0.0
    %512 = vmatpush.msra.mxu0 0.0
    %513 = vmatpush.msra.mxu0 %v172
    %514 = vmatpush.msra.mxu0 %v171
    %515 = vmatpush.msra.mxu0 %v170
    %516 = vmatpush.msra.mxu0 %v169
    %517 = vmatmul.f32.gmra.mxu0 %v499
    %v518 = vpop.f32.mrf.mxu0
    %v519 = vadd.f32 0.0, %v518
    %520 = vdwg.mxu0
    %v521 = vadd.f32 %v496, %v519
    %v522 = vxor.u32 %v521, 2147483648
    %v523 = vmul.f32 %v522, 1.442695
    %v524 = vpow.pop %v523
    %v525 = vadd.f32 %v524, 1.0
    %v526 = vrcp.pop %v525
    %v527 = vmul.f32 %v525, %v526
    %v528 = vsub.f32 1.0, %v527
    %v529 = vmul.f32 %v526, %v528
    %v530 = vadd.f32 %v526, %v529
    %vm531 = vweird.f32 %v525
    %vm532 = vweird.f32 %v526
    %vm533 = vmor %vm531, %vm532
    %v534 = vsel %vm533, %v526, %v530
    %v535 = vand.u32 2147483647, %v525
    %vm536 = vcmp.eq.f32.partialorder %v535, 8.507059e+37
    %v537 = vand.u32 %v525, 2147483648
    %v538 = vor.u32 1.1754944e-38, %v537
    %v539 = vsel %vm536, %v538, %v534
    %v540 = vmul.f32 1.0, %v539
    %v541 = vtanh.pop %v521
    %v542 = vld [vmem:[#allocation5] sm:$0xff]
    %544 = vrot.lane.b32.xlu0 %v542, 32
    %v545 = vpop.permute.xlu0 %544
    %v547 = vmul.f32 %v540, %v545
    %549 = vrot.lane.b32.xlu0 %v541, 32
    %v550 = vpop.permute.xlu0 %549
    %v552 = vmul.f32 %v540, %v550
    %554 = vrot.lane.b32.xlu0 %v552, 32
    %v555 = vpop.permute.xlu0 %554
    %v557 = vadd.f32 %v547, %v555
    %v558 = vtanh.pop %v557
    %560 = vrot.lane.b32.xlu0 %v558, 32
    %v561 = vpop.permute.xlu0 %560
    %v563 = vmul.f32 %v540, %v561
    %565 = vrot.lane.b32.xlu0 %v557, 96
    %v566 = vpop.permute.xlu0 %565
    %568 = vst.msk [vmem:[#allocation5] sm:$0xff] %vm166, %v566
    %570 = vrot.lane.b32.xlu0 %v563, 64
    %v571 = vpop.permute.xlu0 %570
    %573 = vst.msk [vmem:[#allocation4] sm:$0xff] %vm166, %v571
    %s574 = scalar_lea.vmem [#allocation2], 32
    %575 = vst.msk [vmem:[%s574] sm:$0xff] %vm166, %v571
    %s576 = scalar_lea.vmem [#allocation3], 40
    %v577 = vld [vmem:[%s576] sm:$0xff]
    %v578 = vld [vmem:[#allocation4] sm:$0xff]
    %v580 = vsel %vm166, %v578, 0
    %582 = vmatpush.msra.mxu0 0.0
    %583 = vmatpush.msra.mxu0 0.0
    %584 = vmatpush.msra.mxu0 0.0
    %585 = vmatpush.msra.mxu0 0.0
    %586 = vmatpush.msra.mxu0 0.0
    %587 = vmatpush.msra.mxu0 0.0
    %588 = vmatpush.msra.mxu0 0.0
    %589 = vmatpush.msra.mxu0 0.0
    %590 = vmatpush.msra.mxu0 0.0
    %591 = vmatpush.msra.mxu0 0.0
    %592 = vmatpush.msra.mxu0 0.0
    %593 = vmatpush.msra.mxu0 0.0
    %594 = vmatpush.msra.mxu0 %v172
    %595 = vmatpush.msra.mxu0 %v171
    %596 = vmatpush.msra.mxu0 %v170
    %597 = vmatpush.msra.mxu0 %v169
    %598 = vmatmul.f32.gmra.mxu0 %v580
    %v599 = vpop.f32.mrf.mxu0
    %v600 = vadd.f32 0.0, %v599
    %601 = vdwg.mxu0
    %v602 = vadd.f32 %v577, %v600
    %v603 = vxor.u32 %v602, 2147483648
    %v604 = vmul.f32 %v603, 1.442695
    %v605 = vpow.pop %v604
    %v606 = vadd.f32 %v605, 1.0
    %v607 = vrcp.pop %v606
    %v608 = vmul.f32 %v606, %v607
    %v609 = vsub.f32 1.0, %v608
    %v610 = vmul.f32 %v607, %v609
    %v611 = vadd.f32 %v607, %v610
    %vm612 = vweird.f32 %v606
    %vm613 = vweird.f32 %v607
    %vm614 = vmor %vm612, %vm613
    %v615 = vsel %vm614, %v607, %v611
    %v616 = vand.u32 2147483647, %v606
    %vm617 = vcmp.eq.f32.partialorder %v616, 8.507059e+37
    %v618 = vand.u32 %v606, 2147483648
    %v619 = vor.u32 1.1754944e-38, %v618
    %v620 = vsel %vm617, %v619, %v615
    %v621 = vmul.f32 1.0, %v620
    %v622 = vtanh.pop %v602
    %v623 = vld [vmem:[#allocation5] sm:$0xff]
    %625 = vrot.lane.b32.xlu0 %v623, 32
    %v626 = vpop.permute.xlu0 %625
    %v628 = vmul.f32 %v621, %v626
    %630 = vrot.lane.b32.xlu0 %v622, 32
    %v631 = vpop.permute.xlu0 %630
    %v633 = vmul.f32 %v621, %v631
    %635 = vrot.lane.b32.xlu0 %v633, 32
    %v636 = vpop.permute.xlu0 %635
    %v638 = vadd.f32 %v628, %v636
    %v639 = vtanh.pop %v638
    %641 = vrot.lane.b32.xlu0 %v639, 32
    %v642 = vpop.permute.xlu0 %641
    %v644 = vmul.f32 %v621, %v642
    %646 = vrot.lane.b32.xlu0 %v638, 96
    %v647 = vpop.permute.xlu0 %646
    %649 = vst.msk [vmem:[#allocation5] sm:$0xff] %vm166, %v647
    %651 = vrot.lane.b32.xlu0 %v644, 64
    %v652 = vpop.permute.xlu0 %651
    %654 = vst.msk [vmem:[#allocation4] sm:$0xff] %vm166, %v652
    %s655 = scalar_lea.vmem [#allocation2], 40
    %656 = vst.msk [vmem:[%s655] sm:$0xff] %vm166, %v652
    %s657 = scalar_lea.vmem [#allocation3], 48
    %v658 = vld [vmem:[%s657] sm:$0xff]
    %v659 = vld [vmem:[#allocation4] sm:$0xff]
    %v661 = vsel %vm166, %v659, 0
    %663 = vmatpush.msra.mxu0 0.0
    %664 = vmatpush.msra.mxu0 0.0
    %665 = vmatpush.msra.mxu0 0.0
    %666 = vmatpush.msra.mxu0 0.0
    %667 = vmatpush.msra.mxu0 0.0
    %668 = vmatpush.msra.mxu0 0.0
    %669 = vmatpush.msra.mxu0 0.0
    %670 = vmatpush.msra.mxu0 0.0
    %671 = vmatpush.msra.mxu0 0.0
    %672 = vmatpush.msra.mxu0 0.0
    %673 = vmatpush.msra.mxu0 0.0
    %674 = vmatpush.msra.mxu0 0.0
    %675 = vmatpush.msra.mxu0 %v172
    %676 = vmatpush.msra.mxu0 %v171
    %677 = vmatpush.msra.mxu0 %v170
    %678 = vmatpush.msra.mxu0 %v169
    %679 = vmatmul.f32.gmra.mxu0 %v661
    %v680 = vpop.f32.mrf.mxu0
    %v681 = vadd.f32 0.0, %v680
    %682 = vdwg.mxu0
    %v683 = vadd.f32 %v658, %v681
    %v684 = vxor.u32 %v683, 2147483648
    %v685 = vmul.f32 %v684, 1.442695
    %v686 = vpow.pop %v685
    %v687 = vadd.f32 %v686, 1.0
    %v688 = vrcp.pop %v687
    %v689 = vmul.f32 %v687, %v688
    %v690 = vsub.f32 1.0, %v689
    %v691 = vmul.f32 %v688, %v690
    %v692 = vadd.f32 %v688, %v691
    %vm693 = vweird.f32 %v687
    %vm694 = vweird.f32 %v688
    %vm695 = vmor %vm693, %vm694
    %v696 = vsel %vm695, %v688, %v692
    %v697 = vand.u32 2147483647, %v687
    %vm698 = vcmp.eq.f32.partialorder %v697, 8.507059e+37
    %v699 = vand.u32 %v687, 2147483648
    %v700 = vor.u32 1.1754944e-38, %v699
    %v701 = vsel %vm698, %v700, %v696
    %v702 = vmul.f32 1.0, %v701
    %v703 = vtanh.pop %v683
    %v704 = vld [vmem:[#allocation5] sm:$0xff]
    %706 = vrot.lane.b32.xlu0 %v704, 32
    %v707 = vpop.permute.xlu0 %706
    %v709 = vmul.f32 %v702, %v707
    %711 = vrot.lane.b32.xlu0 %v703, 32
    %v712 = vpop.permute.xlu0 %711
    %v714 = vmul.f32 %v702, %v712
    %716 = vrot.lane.b32.xlu0 %v714, 32
    %v717 = vpop.permute.xlu0 %716
    %v719 = vadd.f32 %v709, %v717
    %v720 = vtanh.pop %v719
    %722 = vrot.lane.b32.xlu0 %v720, 32
    %v723 = vpop.permute.xlu0 %722
    %v725 = vmul.f32 %v702, %v723
    %727 = vrot.lane.b32.xlu0 %v719, 96
    %v728 = vpop.permute.xlu0 %727
    %730 = vst.msk [vmem:[#allocation5] sm:$0xff] %vm166, %v728
    %732 = vrot.lane.b32.xlu0 %v725, 64
    %v733 = vpop.permute.xlu0 %732
    %735 = vst.msk [vmem:[#allocation4] sm:$0xff] %vm166, %v733
    %s736 = scalar_lea.vmem [#allocation2], 48
    %737 = vst.msk [vmem:[%s736] sm:$0xff] %vm166, %v733
    %s738 = scalar_lea.vmem [#allocation3], 56
    %v739 = vld [vmem:[%s738] sm:$0xff]
    %v740 = vld [vmem:[#allocation4] sm:$0xff]
    %v742 = vsel %vm166, %v740, 0
    %744 = vmatpush.msra.mxu0 0.0
    %745 = vmatpush.msra.mxu0 0.0
    %746 = vmatpush.msra.mxu0 0.0
    %747 = vmatpush.msra.mxu0 0.0
    %748 = vmatpush.msra.mxu0 0.0
    %749 = vmatpush.msra.mxu0 0.0
    %750 = vmatpush.msra.mxu0 0.0
    %751 = vmatpush.msra.mxu0 0.0
    %752 = vmatpush.msra.mxu0 0.0
    %753 = vmatpush.msra.mxu0 0.0
    %754 = vmatpush.msra.mxu0 0.0
    %755 = vmatpush.msra.mxu0 0.0
    %756 = vmatpush.msra.mxu0 %v172
    %757 = vmatpush.msra.mxu0 %v171
    %758 = vmatpush.msra.mxu0 %v170
    %759 = vmatpush.msra.mxu0 %v169
    %760 = vmatmul.f32.gmra.mxu0 %v742
    %v761 = vpop.f32.mrf.mxu0
    %v762 = vadd.f32 0.0, %v761
    %763 = vdwg.mxu0
    %v764 = vadd.f32 %v739, %v762
    %v765 = vxor.u32 %v764, 2147483648
    %v766 = vmul.f32 %v765, 1.442695
    %v767 = vpow.pop %v766
    %v768 = vadd.f32 %v767, 1.0
    %v769 = vrcp.pop %v768
    %v770 = vmul.f32 %v768, %v769
    %v771 = vsub.f32 1.0, %v770
    %v772 = vmul.f32 %v769, %v771
    %v773 = vadd.f32 %v769, %v772
    %vm774 = vweird.f32 %v768
    %vm775 = vweird.f32 %v769
    %vm776 = vmor %vm774, %vm775
    %v777 = vsel %vm776, %v769, %v773
    %v778 = vand.u32 2147483647, %v768
    %vm779 = vcmp.eq.f32.partialorder %v778, 8.507059e+37
    %v780 = vand.u32 %v768, 2147483648
    %v781 = vor.u32 1.1754944e-38, %v780
    %v782 = vsel %vm779, %v781, %v777
    %v783 = vmul.f32 1.0, %v782
    %v784 = vtanh.pop %v764
    %v785 = vld [vmem:[#allocation5] sm:$0xff]
    %787 = vrot.lane.b32.xlu0 %v785, 32
    %v788 = vpop.permute.xlu0 %787
    %v790 = vmul.f32 %v783, %v788
    %792 = vrot.lane.b32.xlu0 %v784, 32
    %v793 = vpop.permute.xlu0 %792
    %v795 = vmul.f32 %v783, %v793
    %797 = vrot.lane.b32.xlu0 %v795, 32
    %v798 = vpop.permute.xlu0 %797
    %v800 = vadd.f32 %v790, %v798
    %v801 = vtanh.pop %v800
    %803 = vrot.lane.b32.xlu0 %v801, 32
    %v804 = vpop.permute.xlu0 %803
    %v806 = vmul.f32 %v783, %v804
    %808 = vrot.lane.b32.xlu0 %v800, 96
    %v809 = vpop.permute.xlu0 %808
    %811 = vst.msk [vmem:[#allocation5] sm:$0xff] %vm166, %v809
    %813 = vrot.lane.b32.xlu0 %v806, 64
    %v814 = vpop.permute.xlu0 %813
    %816 = vst.msk [vmem:[#allocation4] sm:$0xff] %vm166, %v814
    %s817 = scalar_lea.vmem [#allocation2], 56
    %818 = vst.msk [vmem:[%s817] sm:$0xff] %vm166, %v814
    %v819 = vld [vmem:[#allocation2] sm:$0xff]
    %v820 = vld [vmem:[#allocation2 + $0x8] sm:$0xff]
    %v821 = vld [vmem:[#allocation2 + $0x10] sm:$0xff]
    %v822 = vld [vmem:[#allocation2 + $0x18] sm:$0xff]
    %v823 = vld [vmem:[#allocation2 + $0x20] sm:$0xff]
    %v824 = vld [vmem:[#allocation2 + $0x28] sm:$0xff]
    %v825 = vld [vmem:[#allocation2 + $0x30] sm:$0xff]
    %v826 = vld [vmem:[#allocation2 + $0x38] sm:$0xff]
    %v827 = vld [vmem:[#allocation6] sm:$0xff]
    %v828 = vld [vmem:[#allocation6 + $0x8] sm:$0xff]
    %v829 = vld [vmem:[#allocation6 + $0x10] sm:$0xff]
    %v830 = vld [vmem:[#allocation6 + $0x18] sm:$0xff]
    %s831 = scalar_lea.vmem %s4, 1
    %v832 = vld [vmem:[%s831] sm:$0x1]
    %v834 = vperm.slane %v832, 0
    %v837 = vsel %vm166, %v819, 0
    %v840 = vsel %vm166, %v820, 0
    %v843 = vsel %vm166, %v821, 0
    %v846 = vsel %vm166, %v822, 0
    %v849 = vsel %vm166, %v823, 0
    %v852 = vsel %vm166, %v824, 0
    %v855 = vsel %vm166, %v825, 0
    %v858 = vsel %vm166, %v826, 0
    %860 = vmatpush.msra.mxu0 0.0
    %861 = vmatpush.msra.mxu0 0.0
    %862 = vmatpush.msra.mxu0 0.0
    %863 = vmatpush.msra.mxu0 0.0
    %864 = vmatpush.msra.mxu0 0.0
    %865 = vmatpush.msra.mxu0 0.0
    %866 = vmatpush.msra.mxu0 0.0
    %867 = vmatpush.msra.mxu0 0.0
    %868 = vmatpush.msra.mxu0 0.0
    %869 = vmatpush.msra.mxu0 0.0
    %870 = vmatpush.msra.mxu0 0.0
    %871 = vmatpush.msra.mxu0 0.0
    %872 = vmatpush.msra.mxu0 %v830
    %873 = vmatpush.msra.mxu0 %v829
    %874 = vmatpush.msra.mxu0 %v828
    %875 = vmatpush.msra.mxu0 %v827
    %876 = vmatmul.f32.gmra.mxu0 %v837
    %v877 = vpop.f32.mrf.mxu0
    %v878 = vadd.f32 %v834, %v877
    %879 = vmatmul.f32.gmra.mxu0 %v840
    %v880 = vpop.f32.mrf.mxu0
    %v881 = vadd.f32 %v834, %v880
    %882 = vmatmul.f32.gmra.mxu0 %v843
    %v883 = vpop.f32.mrf.mxu0
    %v884 = vadd.f32 %v834, %v883
    %885 = vmatmul.f32.gmra.mxu0 %v846
    %v886 = vpop.f32.mrf.mxu0
    %v887 = vadd.f32 %v834, %v886
    %888 = vmatmul.f32.gmra.mxu0 %v849
    %v889 = vpop.f32.mrf.mxu0
    %v890 = vadd.f32 %v834, %v889
    %891 = vmatmul.f32.gmra.mxu0 %v852
    %v892 = vpop.f32.mrf.mxu0
    %v893 = vadd.f32 %v834, %v892
    %894 = vmatmul.f32.gmra.mxu0 %v855
    %v895 = vpop.f32.mrf.mxu0
    %v896 = vadd.f32 %v834, %v895
    %897 = vmatmul.f32.gmra.mxu0 %v858
    %v898 = vpop.f32.mrf.mxu0
    %v899 = vadd.f32 %v834, %v898
    %900 = vdwg.mxu0
    %901 = vst [vmem:[#allocation3] sm:$0xff] %v878
    %902 = vst [vmem:[#allocation3 + $0x8] sm:$0xff] %v881
    %903 = vst [vmem:[#allocation3 + $0x10] sm:$0xff] %v884
    %904 = vst [vmem:[#allocation3 + $0x18] sm:$0xff] %v887
    %905 = vst [vmem:[#allocation3 + $0x20] sm:$0xff] %v890
    %906 = vst [vmem:[#allocation3 + $0x28] sm:$0xff] %v893
    %907 = vst [vmem:[#allocation3 + $0x30] sm:$0xff] %v896
    %908 = vst [vmem:[#allocation3 + $0x38] sm:$0xff] %v899
    %909 = vst.msk [vmem:[#allocation4] sm:$0xff] %vm166, 0.0
    %910 = vst.msk [vmem:[#allocation5] sm:$0xff] %vm166, 0.0
    %s911 = scalar_lea.vmem %s3, 32
    %v912 = vld [vmem:[%s911] sm:$0xff]
    %v913 = vld [vmem:[%s911 + $0x8] sm:$0xff]
    %v914 = vld [vmem:[%s911 + $0x10] sm:$0xff]
    %v915 = vld [vmem:[%s911 + $0x18] sm:$0xff]
    %v916 = vld [vmem:[#allocation3] sm:$0xff]
    %v917 = vld [vmem:[#allocation4] sm:$0xff]
    %v919 = vsel %vm166, %v917, 0
    %921 = vmatpush.msra.mxu0 0.0
    %922 = vmatpush.msra.mxu0 0.0
    %923 = vmatpush.msra.mxu0 0.0
    %924 = vmatpush.msra.mxu0 0.0
    %925 = vmatpush.msra.mxu0 0.0
    %926 = vmatpush.msra.mxu0 0.0
    %927 = vmatpush.msra.mxu0 0.0
    %928 = vmatpush.msra.mxu0 0.0
    %929 = vmatpush.msra.mxu0 0.0
    %930 = vmatpush.msra.mxu0 0.0
    %931 = vmatpush.msra.mxu0 0.0
    %932 = vmatpush.msra.mxu0 0.0
    %933 = vmatpush.msra.mxu0 %v915
    %934 = vmatpush.msra.mxu0 %v914
    %935 = vmatpush.msra.mxu0 %v913
    %936 = vmatpush.msra.mxu0 %v912
    %937 = vmatmul.f32.gmra.mxu0 %v919
    %v938 = vpop.f32.mrf.mxu0
    %v939 = vadd.f32 0.0, %v938
    %940 = vdwg.mxu0
    %v941 = vadd.f32 %v916, %v939
    %v942 = vxor.u32 %v941, 2147483648
    %v943 = vmul.f32 %v942, 1.442695
    %v944 = vpow.pop %v943
    %v945 = vadd.f32 %v944, 1.0
    %v946 = vrcp.pop %v945
    %v947 = vmul.f32 %v945, %v946
    %v948 = vsub.f32 1.0, %v947
    %v949 = vmul.f32 %v946, %v948
    %v950 = vadd.f32 %v946, %v949
    %vm951 = vweird.f32 %v945
    %vm952 = vweird.f32 %v946
    %vm953 = vmor %vm951, %vm952
    %v954 = vsel %vm953, %v946, %v950
    %v955 = vand.u32 2147483647, %v945
    %vm956 = vcmp.eq.f32.partialorder %v955, 8.507059e+37
    %v957 = vand.u32 %v945, 2147483648
    %v958 = vor.u32 1.1754944e-38, %v957
    %v959 = vsel %vm956, %v958, %v954
    %v960 = vmul.f32 1.0, %v959
    %v961 = vtanh.pop %v941
    %v962 = vld [vmem:[#allocation5] sm:$0xff]
    %964 = vrot.lane.b32.xlu0 %v962, 32
    %v965 = vpop.permute.xlu0 %964
    %v967 = vmul.f32 %v960, %v965
    %969 = vrot.lane.b32.xlu0 %v961, 32
    %v970 = vpop.permute.xlu0 %969
    %v972 = vmul.f32 %v960, %v970
    %974 = vrot.lane.b32.xlu0 %v972, 32
    %v975 = vpop.permute.xlu0 %974
    %v977 = vadd.f32 %v967, %v975
    %v978 = vtanh.pop %v977
    %980 = vrot.lane.b32.xlu0 %v978, 32
    %v981 = vpop.permute.xlu0 %980
    %v983 = vmul.f32 %v960, %v981
    %985 = vrot.lane.b32.xlu0 %v977, 96
    %v986 = vpop.permute.xlu0 %985
    %988 = vst.msk [vmem:[#allocation5] sm:$0xff] %vm166, %v986
    %990 = vrot.lane.b32.xlu0 %v983, 64
    %v991 = vpop.permute.xlu0 %990
    %993 = vst.msk [vmem:[#allocation4] sm:$0xff] %vm166, %v991
    %994 = vst.msk [vmem:[#allocation2] sm:$0xff] %vm166, %v991
    %v995 = vld [vmem:[%s252] sm:$0xff]
    %v996 = vld [vmem:[#allocation4] sm:$0xff]
    %v998 = vsel %vm166, %v996, 0
    %1000 = vmatpush.msra.mxu0 0.0
    %1001 = vmatpush.msra.mxu0 0.0
    %1002 = vmatpush.msra.mxu0 0.0
    %1003 = vmatpush.msra.mxu0 0.0
    %1004 = vmatpush.msra.mxu0 0.0
    %1005 = vmatpush.msra.mxu0 0.0
    %1006 = vmatpush.msra.mxu0 0.0
    %1007 = vmatpush.msra.mxu0 0.0
    %1008 = vmatpush.msra.mxu0 0.0
    %1009 = vmatpush.msra.mxu0 0.0
    %1010 = vmatpush.msra.mxu0 0.0
    %1011 = vmatpush.msra.mxu0 0.0
    %1012 = vmatpush.msra.mxu0 %v915
    %1013 = vmatpush.msra.mxu0 %v914
    %1014 = vmatpush.msra.mxu0 %v913
    %1015 = vmatpush.msra.mxu0 %v912
    %1016 = vmatmul.f32.gmra.mxu0 %v998
    %v1017 = vpop.f32.mrf.mxu0
    %v1018 = vadd.f32 0.0, %v1017
    %1019 = vdwg.mxu0
    %v1020 = vadd.f32 %v995, %v1018
    %v1021 = vxor.u32 %v1020, 2147483648
    %v1022 = vmul.f32 %v1021, 1.442695
    %v1023 = vpow.pop %v1022
    %v1024 = vadd.f32 %v1023, 1.0
    %v1025 = vrcp.pop %v1024
    %v1026 = vmul.f32 %v1024, %v1025
    %v1027 = vsub.f32 1.0, %v1026
    %v1028 = vmul.f32 %v1025, %v1027
    %v1029 = vadd.f32 %v1025, %v1028
    %vm1030 = vweird.f32 %v1024
    %vm1031 = vweird.f32 %v1025
    %vm1032 = vmor %vm1030, %vm1031
    %v1033 = vsel %vm1032, %v1025, %v1029
    %v1034 = vand.u32 2147483647, %v1024
    %vm1035 = vcmp.eq.f32.partialorder %v1034, 8.507059e+37
    %v1036 = vand.u32 %v1024, 2147483648
    %v1037 = vor.u32 1.1754944e-38, %v1036
    %v1038 = vsel %vm1035, %v1037, %v1033
    %v1039 = vmul.f32 1.0, %v1038
    %v1040 = vtanh.pop %v1020
    %v1041 = vld [vmem:[#allocation5] sm:$0xff]
    %1043 = vrot.lane.b32.xlu0 %v1041, 32
    %v1044 = vpop.permute.xlu0 %1043
    %v1046 = vmul.f32 %v1039, %v1044
    %1048 = vrot.lane.b32.xlu0 %v1040, 32
    %v1049 = vpop.permute.xlu0 %1048
    %v1051 = vmul.f32 %v1039, %v1049
    %1053 = vrot.lane.b32.xlu0 %v1051, 32
    %v1054 = vpop.permute.xlu0 %1053
    %v1056 = vadd.f32 %v1046, %v1054
    %v1057 = vtanh.pop %v1056
    %1059 = vrot.lane.b32.xlu0 %v1057, 32
    %v1060 = vpop.permute.xlu0 %1059
    %v1062 = vmul.f32 %v1039, %v1060
    %1064 = vrot.lane.b32.xlu0 %v1056, 96
    %v1065 = vpop.permute.xlu0 %1064
    %1067 = vst.msk [vmem:[#allocation5] sm:$0xff] %vm166, %v1065
    %1069 = vrot.lane.b32.xlu0 %v1062, 64
    %v1070 = vpop.permute.xlu0 %1069
    %1072 = vst.msk [vmem:[#allocation4] sm:$0xff] %vm166, %v1070
    %1073 = vst.msk [vmem:[%s331] sm:$0xff] %vm166, %v1070
    %v1074 = vld [vmem:[%s333] sm:$0xff]
    %v1075 = vld [vmem:[#allocation4] sm:$0xff]
    %v1077 = vsel %vm166, %v1075, 0
    %1079 = vmatpush.msra.mxu0 0.0
    %1080 = vmatpush.msra.mxu0 0.0
    %1081 = vmatpush.msra.mxu0 0.0
    %1082 = vmatpush.msra.mxu0 0.0
    %1083 = vmatpush.msra.mxu0 0.0
    %1084 = vmatpush.msra.mxu0 0.0
    %1085 = vmatpush.msra.mxu0 0.0
    %1086 = vmatpush.msra.mxu0 0.0
    %1087 = vmatpush.msra.mxu0 0.0
    %1088 = vmatpush.msra.mxu0 0.0
    %1089 = vmatpush.msra.mxu0 0.0
    %1090 = vmatpush.msra.mxu0 0.0
    %1091 = vmatpush.msra.mxu0 %v915
    %1092 = vmatpush.msra.mxu0 %v914
    %1093 = vmatpush.msra.mxu0 %v913
    %1094 = vmatpush.msra.mxu0 %v912
    %1095 = vmatmul.f32.gmra.mxu0 %v1077
    %v1096 = vpop.f32.mrf.mxu0
    %v1097 = vadd.f32 0.0, %v1096
    %1098 = vdwg.mxu0
    %v1099 = vadd.f32 %v1074, %v1097
    %v1100 = vxor.u32 %v1099, 2147483648
    %v1101 = vmul.f32 %v1100, 1.442695
    %v1102 = vpow.pop %v1101
    %v1103 = vadd.f32 %v1102, 1.0
    %v1104 = vrcp.pop %v1103
    %v1105 = vmul.f32 %v1103, %v1104
    %v1106 = vsub.f32 1.0, %v1105
    %v1107 = vmul.f32 %v1104, %v1106
    %v1108 = vadd.f32 %v1104, %v1107
    %vm1109 = vweird.f32 %v1103
    %vm1110 = vweird.f32 %v1104
    %vm1111 = vmor %vm1109, %vm1110
    %v1112 = vsel %vm1111, %v1104, %v1108
    %v1113 = vand.u32 2147483647, %v1103
    %vm1114 = vcmp.eq.f32.partialorder %v1113, 8.507059e+37
    %v1115 = vand.u32 %v1103, 2147483648
    %v1116 = vor.u32 1.1754944e-38, %v1115
    %v1117 = vsel %vm1114, %v1116, %v1112
    %v1118 = vmul.f32 1.0, %v1117
    %v1119 = vtanh.pop %v1099
    %v1120 = vld [vmem:[#allocation5] sm:$0xff]
    %1122 = vrot.lane.b32.xlu0 %v1120, 32
    %v1123 = vpop.permute.xlu0 %1122
    %v1125 = vmul.f32 %v1118, %v1123
    %1127 = vrot.lane.b32.xlu0 %v1119, 32
    %v1128 = vpop.permute.xlu0 %1127
    %v1130 = vmul.f32 %v1118, %v1128
    %1132 = vrot.lane.b32.xlu0 %v1130, 32
    %v1133 = vpop.permute.xlu0 %1132
    %v1135 = vadd.f32 %v1125, %v1133
    %v1136 = vtanh.pop %v1135
    %1138 = vrot.lane.b32.xlu0 %v1136, 32
    %v1139 = vpop.permute.xlu0 %1138
    %v1141 = vmul.f32 %v1118, %v1139
    %1143 = vrot.lane.b32.xlu0 %v1135, 96
    %v1144 = vpop.permute.xlu0 %1143
    %1146 = vst.msk [vmem:[#allocation5] sm:$0xff] %vm166, %v1144
    %1148 = vrot.lane.b32.xlu0 %v1141, 64
    %v1149 = vpop.permute.xlu0 %1148
    %1151 = vst.msk [vmem:[#allocation4] sm:$0xff] %vm166, %v1149
    %1152 = vst.msk [vmem:[%s412] sm:$0xff] %vm166, %v1149
    %v1153 = vld [vmem:[%s414] sm:$0xff]
    %v1154 = vld [vmem:[#allocation4] sm:$0xff]
    %v1156 = vsel %vm166, %v1154, 0
    %1158 = vmatpush.msra.mxu0 0.0
    %1159 = vmatpush.msra.mxu0 0.0
    %1160 = vmatpush.msra.mxu0 0.0
    %1161 = vmatpush.msra.mxu0 0.0
    %1162 = vmatpush.msra.mxu0 0.0
    %1163 = vmatpush.msra.mxu0 0.0
    %1164 = vmatpush.msra.mxu0 0.0
    %1165 = vmatpush.msra.mxu0 0.0
    %1166 = vmatpush.msra.mxu0 0.0
    %1167 = vmatpush.msra.mxu0 0.0
    %1168 = vmatpush.msra.mxu0 0.0
    %1169 = vmatpush.msra.mxu0 0.0
    %1170 = vmatpush.msra.mxu0 %v915
    %1171 = vmatpush.msra.mxu0 %v914
    %1172 = vmatpush.msra.mxu0 %v913
    %1173 = vmatpush.msra.mxu0 %v912
    %1174 = vmatmul.f32.gmra.mxu0 %v1156
    %v1175 = vpop.f32.mrf.mxu0
    %v1176 = vadd.f32 0.0, %v1175
    %1177 = vdwg.mxu0
    %v1178 = vadd.f32 %v1153, %v1176
    %v1179 = vxor.u32 %v1178, 2147483648
    %v1180 = vmul.f32 %v1179, 1.442695
    %v1181 = vpow.pop %v1180
    %v1182 = vadd.f32 %v1181, 1.0
    %v1183 = vrcp.pop %v1182
    %v1184 = vmul.f32 %v1182, %v1183
    %v1185 = vsub.f32 1.0, %v1184
    %v1186 = vmul.f32 %v1183, %v1185
    %v1187 = vadd.f32 %v1183, %v1186
    %vm1188 = vweird.f32 %v1182
    %vm1189 = vweird.f32 %v1183
    %vm1190 = vmor %vm1188, %vm1189
    %v1191 = vsel %vm1190, %v1183, %v1187
    %v1192 = vand.u32 2147483647, %v1182
    %vm1193 = vcmp.eq.f32.partialorder %v1192, 8.507059e+37
    %v1194 = vand.u32 %v1182, 2147483648
    %v1195 = vor.u32 1.1754944e-38, %v1194
    %v1196 = vsel %vm1193, %v1195, %v1191
    %v1197 = vmul.f32 1.0, %v1196
    %v1198 = vtanh.pop %v1178
    %v1199 = vld [vmem:[#allocation5] sm:$0xff]
    %1201 = vrot.lane.b32.xlu0 %v1199, 32
    %v1202 = vpop.permute.xlu0 %1201
    %v1204 = vmul.f32 %v1197, %v1202
    %1206 = vrot.lane.b32.xlu0 %v1198, 32
    %v1207 = vpop.permute.xlu0 %1206
    %v1209 = vmul.f32 %v1197, %v1207
    %1211 = vrot.lane.b32.xlu0 %v1209, 32
    %v1212 = vpop.permute.xlu0 %1211
    %v1214 = vadd.f32 %v1204, %v1212
    %v1215 = vtanh.pop %v1214
    %1217 = vrot.lane.b32.xlu0 %v1215, 32
    %v1218 = vpop.permute.xlu0 %1217
    %v1220 = vmul.f32 %v1197, %v1218
    %1222 = vrot.lane.b32.xlu0 %v1214, 96
    %v1223 = vpop.permute.xlu0 %1222
    %1225 = vst.msk [vmem:[#allocation5] sm:$0xff] %vm166, %v1223
    %1227 = vrot.lane.b32.xlu0 %v1220, 64
    %v1228 = vpop.permute.xlu0 %1227
    %1230 = vst.msk [vmem:[#allocation4] sm:$0xff] %vm166, %v1228
    %1231 = vst.msk [vmem:[%s493] sm:$0xff] %vm166, %v1228
    %v1232 = vld [vmem:[%s495] sm:$0xff]
    %v1233 = vld [vmem:[#allocation4] sm:$0xff]
    %v1235 = vsel %vm166, %v1233, 0
    %1237 = vmatpush.msra.mxu0 0.0
    %1238 = vmatpush.msra.mxu0 0.0
    %1239 = vmatpush.msra.mxu0 0.0
    %1240 = vmatpush.msra.mxu0 0.0
    %1241 = vmatpush.msra.mxu0 0.0
    %1242 = vmatpush.msra.mxu0 0.0
    %1243 = vmatpush.msra.mxu0 0.0
    %1244 = vmatpush.msra.mxu0 0.0
    %1245 = vmatpush.msra.mxu0 0.0
    %1246 = vmatpush.msra.mxu0 0.0
    %1247 = vmatpush.msra.mxu0 0.0
    %1248 = vmatpush.msra.mxu0 0.0
    %1249 = vmatpush.msra.mxu0 %v915
    %1250 = vmatpush.msra.mxu0 %v914
    %1251 = vmatpush.msra.mxu0 %v913
    %1252 = vmatpush.msra.mxu0 %v912
    %1253 = vmatmul.f32.gmra.mxu0 %v1235
    %v1254 = vpop.f32.mrf.mxu0
    %v1255 = vadd.f32 0.0, %v1254
    %1256 = vdwg.mxu0
    %v1257 = vadd.f32 %v1232, %v1255
    %v1258 = vxor.u32 %v1257, 2147483648
    %v1259 = vmul.f32 %v1258, 1.442695
    %v1260 = vpow.pop %v1259
    %v1261 = vadd.f32 %v1260, 1.0
    %v1262 = vrcp.pop %v1261
    %v1263 = vmul.f32 %v1261, %v1262
    %v1264 = vsub.f32 1.0, %v1263
    %v1265 = vmul.f32 %v1262, %v1264
    %v1266 = vadd.f32 %v1262, %v1265
    %vm1267 = vweird.f32 %v1261
    %vm1268 = vweird.f32 %v1262
    %vm1269 = vmor %vm1267, %vm1268
    %v1270 = vsel %vm1269, %v1262, %v1266
    %v1271 = vand.u32 2147483647, %v1261
    %vm1272 = vcmp.eq.f32.partialorder %v1271, 8.507059e+37
    %v1273 = vand.u32 %v1261, 2147483648
    %v1274 = vor.u32 1.1754944e-38, %v1273
    %v1275 = vsel %vm1272, %v1274, %v1270
    %v1276 = vmul.f32 1.0, %v1275
    %v1277 = vtanh.pop %v1257
    %v1278 = vld [vmem:[#allocation5] sm:$0xff]
    %1280 = vrot.lane.b32.xlu0 %v1278, 32
    %v1281 = vpop.permute.xlu0 %1280
    %v1283 = vmul.f32 %v1276, %v1281
    %1285 = vrot.lane.b32.xlu0 %v1277, 32
    %v1286 = vpop.permute.xlu0 %1285
    %v1288 = vmul.f32 %v1276, %v1286
    %1290 = vrot.lane.b32.xlu0 %v1288, 32
    %v1291 = vpop.permute.xlu0 %1290
    %v1293 = vadd.f32 %v1283, %v1291
    %v1294 = vtanh.pop %v1293
    %1296 = vrot.lane.b32.xlu0 %v1294, 32
    %v1297 = vpop.permute.xlu0 %1296
    %v1299 = vmul.f32 %v1276, %v1297
    %1301 = vrot.lane.b32.xlu0 %v1293, 96
    %v1302 = vpop.permute.xlu0 %1301
    %1304 = vst.msk [vmem:[#allocation5] sm:$0xff] %vm166, %v1302
    %1306 = vrot.lane.b32.xlu0 %v1299, 64
    %v1307 = vpop.permute.xlu0 %1306
    %1309 = vst.msk [vmem:[#allocation4] sm:$0xff] %vm166, %v1307
    %1310 = vst.msk [vmem:[%s574] sm:$0xff] %vm166, %v1307
    %v1311 = vld [vmem:[%s576] sm:$0xff]
    %v1312 = vld [vmem:[#allocation4] sm:$0xff]
    %v1314 = vsel %vm166, %v1312, 0
    %1316 = vmatpush.msra.mxu0 0.0
    %1317 = vmatpush.msra.mxu0 0.0
    %1318 = vmatpush.msra.mxu0 0.0
    %1319 = vmatpush.msra.mxu0 0.0
    %1320 = vmatpush.msra.mxu0 0.0
    %1321 = vmatpush.msra.mxu0 0.0
    %1322 = vmatpush.msra.mxu0 0.0
    %1323 = vmatpush.msra.mxu0 0.0
    %1324 = vmatpush.msra.mxu0 0.0
    %1325 = vmatpush.msra.mxu0 0.0
    %1326 = vmatpush.msra.mxu0 0.0
    %1327 = vmatpush.msra.mxu0 0.0
    %1328 = vmatpush.msra.mxu0 %v915
    %1329 = vmatpush.msra.mxu0 %v914
    %1330 = vmatpush.msra.mxu0 %v913
    %1331 = vmatpush.msra.mxu0 %v912
    %1332 = vmatmul.f32.gmra.mxu0 %v1314
    %v1333 = vpop.f32.mrf.mxu0
    %v1334 = vadd.f32 0.0, %v1333
    %1335 = vdwg.mxu0
    %v1336 = vadd.f32 %v1311, %v1334
    %v1337 = vxor.u32 %v1336, 2147483648
    %v1338 = vmul.f32 %v1337, 1.442695
    %v1339 = vpow.pop %v1338
    %v1340 = vadd.f32 %v1339, 1.0
    %v1341 = vrcp.pop %v1340
    %v1342 = vmul.f32 %v1340, %v1341
    %v1343 = vsub.f32 1.0, %v1342
    %v1344 = vmul.f32 %v1341, %v1343
    %v1345 = vadd.f32 %v1341, %v1344
    %vm1346 = vweird.f32 %v1340
    %vm1347 = vweird.f32 %v1341
    %vm1348 = vmor %vm1346, %vm1347
    %v1349 = vsel %vm1348, %v1341, %v1345
    %v1350 = vand.u32 2147483647, %v1340
    %vm1351 = vcmp.eq.f32.partialorder %v1350, 8.507059e+37
    %v1352 = vand.u32 %v1340, 2147483648
    %v1353 = vor.u32 1.1754944e-38, %v1352
    %v1354 = vsel %vm1351, %v1353, %v1349
    %v1355 = vmul.f32 1.0, %v1354
    %v1356 = vtanh.pop %v1336
    %v1357 = vld [vmem:[#allocation5] sm:$0xff]
    %1359 = vrot.lane.b32.xlu0 %v1357, 32
    %v1360 = vpop.permute.xlu0 %1359
    %v1362 = vmul.f32 %v1355, %v1360
    %1364 = vrot.lane.b32.xlu0 %v1356, 32
    %v1365 = vpop.permute.xlu0 %1364
    %v1367 = vmul.f32 %v1355, %v1365
    %1369 = vrot.lane.b32.xlu0 %v1367, 32
    %v1370 = vpop.permute.xlu0 %1369
    %v1372 = vadd.f32 %v1362, %v1370
    %v1373 = vtanh.pop %v1372
    %1375 = vrot.lane.b32.xlu0 %v1373, 32
    %v1376 = vpop.permute.xlu0 %1375
    %v1378 = vmul.f32 %v1355, %v1376
    %1380 = vrot.lane.b32.xlu0 %v1372, 96
    %v1381 = vpop.permute.xlu0 %1380
    %1383 = vst.msk [vmem:[#allocation5] sm:$0xff] %vm166, %v1381
    %1385 = vrot.lane.b32.xlu0 %v1378, 64
    %v1386 = vpop.permute.xlu0 %1385
    %1388 = vst.msk [vmem:[#allocation4] sm:$0xff] %vm166, %v1386
    %1389 = vst.msk [vmem:[%s655] sm:$0xff] %vm166, %v1386
    %v1390 = vld [vmem:[%s657] sm:$0xff]
    %v1391 = vld [vmem:[#allocation4] sm:$0xff]
    %v1393 = vsel %vm166, %v1391, 0
    %1395 = vmatpush.msra.mxu0 0.0
    %1396 = vmatpush.msra.mxu0 0.0
    %1397 = vmatpush.msra.mxu0 0.0
    %1398 = vmatpush.msra.mxu0 0.0
    %1399 = vmatpush.msra.mxu0 0.0
    %1400 = vmatpush.msra.mxu0 0.0
    %1401 = vmatpush.msra.mxu0 0.0
    %1402 = vmatpush.msra.mxu0 0.0
    %1403 = vmatpush.msra.mxu0 0.0
    %1404 = vmatpush.msra.mxu0 0.0
    %1405 = vmatpush.msra.mxu0 0.0
    %1406 = vmatpush.msra.mxu0 0.0
    %1407 = vmatpush.msra.mxu0 %v915
    %1408 = vmatpush.msra.mxu0 %v914
    %1409 = vmatpush.msra.mxu0 %v913
    %1410 = vmatpush.msra.mxu0 %v912
    %1411 = vmatmul.f32.gmra.mxu0 %v1393
    %v1412 = vpop.f32.mrf.mxu0
    %v1413 = vadd.f32 0.0, %v1412
    %1414 = vdwg.mxu0
    %v1415 = vadd.f32 %v1390, %v1413
    %v1416 = vxor.u32 %v1415, 2147483648
    %v1417 = vmul.f32 %v1416, 1.442695
    %v1418 = vpow.pop %v1417
    %v1419 = vadd.f32 %v1418, 1.0
    %v1420 = vrcp.pop %v1419
    %v1421 = vmul.f32 %v1419, %v1420
    %v1422 = vsub.f32 1.0, %v1421
    %v1423 = vmul.f32 %v1420, %v1422
    %v1424 = vadd.f32 %v1420, %v1423
    %vm1425 = vweird.f32 %v1419
    %vm1426 = vweird.f32 %v1420
    %vm1427 = vmor %vm1425, %vm1426
    %v1428 = vsel %vm1427, %v1420, %v1424
    %v1429 = vand.u32 2147483647, %v1419
    %vm1430 = vcmp.eq.f32.partialorder %v1429, 8.507059e+37
    %v1431 = vand.u32 %v1419, 2147483648
    %v1432 = vor.u32 1.1754944e-38, %v1431
    %v1433 = vsel %vm1430, %v1432, %v1428
    %v1434 = vmul.f32 1.0, %v1433
    %v1435 = vtanh.pop %v1415
    %v1436 = vld [vmem:[#allocation5] sm:$0xff]
    %1438 = vrot.lane.b32.xlu0 %v1436, 32
    %v1439 = vpop.permute.xlu0 %1438
    %v1441 = vmul.f32 %v1434, %v1439
    %1443 = vrot.lane.b32.xlu0 %v1435, 32
    %v1444 = vpop.permute.xlu0 %1443
    %v1446 = vmul.f32 %v1434, %v1444
    %1448 = vrot.lane.b32.xlu0 %v1446, 32
    %v1449 = vpop.permute.xlu0 %1448
    %v1451 = vadd.f32 %v1441, %v1449
    %v1452 = vtanh.pop %v1451
    %1454 = vrot.lane.b32.xlu0 %v1452, 32
    %v1455 = vpop.permute.xlu0 %1454
    %v1457 = vmul.f32 %v1434, %v1455
    %1459 = vrot.lane.b32.xlu0 %v1451, 96
    %v1460 = vpop.permute.xlu0 %1459
    %1462 = vst.msk [vmem:[#allocation5] sm:$0xff] %vm166, %v1460
    %1464 = vrot.lane.b32.xlu0 %v1457, 64
    %v1465 = vpop.permute.xlu0 %1464
    %1467 = vst.msk [vmem:[#allocation4] sm:$0xff] %vm166, %v1465
    %1468 = vst.msk [vmem:[%s736] sm:$0xff] %vm166, %v1465
    %v1469 = vld [vmem:[%s738] sm:$0xff]
    %v1470 = vld [vmem:[#allocation4] sm:$0xff]
    %v1472 = vsel %vm166, %v1470, 0
    %1474 = vmatpush.msra.mxu0 0.0
    %1475 = vmatpush.msra.mxu0 0.0
    %1476 = vmatpush.msra.mxu0 0.0
    %1477 = vmatpush.msra.mxu0 0.0
    %1478 = vmatpush.msra.mxu0 0.0
    %1479 = vmatpush.msra.mxu0 0.0
    %1480 = vmatpush.msra.mxu0 0.0
    %1481 = vmatpush.msra.mxu0 0.0
    %1482 = vmatpush.msra.mxu0 0.0
    %1483 = vmatpush.msra.mxu0 0.0
    %1484 = vmatpush.msra.mxu0 0.0
    %1485 = vmatpush.msra.mxu0 0.0
    %1486 = vmatpush.msra.mxu0 %v915
    %1487 = vmatpush.msra.mxu0 %v914
    %1488 = vmatpush.msra.mxu0 %v913
    %1489 = vmatpush.msra.mxu0 %v912
    %1490 = vmatmul.f32.gmra.mxu0 %v1472
    %v1491 = vpop.f32.mrf.mxu0
    %v1492 = vadd.f32 0.0, %v1491
    %1493 = vdwg.mxu0
    %v1494 = vadd.f32 %v1469, %v1492
    %v1495 = vxor.u32 %v1494, 2147483648
    %v1496 = vmul.f32 %v1495, 1.442695
    %v1497 = vpow.pop %v1496
    %v1498 = vadd.f32 %v1497, 1.0
    %v1499 = vrcp.pop %v1498
    %v1500 = vmul.f32 %v1498, %v1499
    %v1501 = vsub.f32 1.0, %v1500
    %v1502 = vmul.f32 %v1499, %v1501
    %v1503 = vadd.f32 %v1499, %v1502
    %vm1504 = vweird.f32 %v1498
    %vm1505 = vweird.f32 %v1499
    %vm1506 = vmor %vm1504, %vm1505
    %v1507 = vsel %vm1506, %v1499, %v1503
    %v1508 = vand.u32 2147483647, %v1498
    %vm1509 = vcmp.eq.f32.partialorder %v1508, 8.507059e+37
    %v1510 = vand.u32 %v1498, 2147483648
    %v1511 = vor.u32 1.1754944e-38, %v1510
    %v1512 = vsel %vm1509, %v1511, %v1507
    %v1513 = vmul.f32 1.0, %v1512
    %v1514 = vtanh.pop %v1494
    %v1515 = vld [vmem:[#allocation5] sm:$0xff]
    %1517 = vrot.lane.b32.xlu0 %v1515, 32
    %v1518 = vpop.permute.xlu0 %1517
    %v1520 = vmul.f32 %v1513, %v1518
    %1522 = vrot.lane.b32.xlu0 %v1514, 32
    %v1523 = vpop.permute.xlu0 %1522
    %v1525 = vmul.f32 %v1513, %v1523
    %1527 = vrot.lane.b32.xlu0 %v1525, 32
    %v1528 = vpop.permute.xlu0 %1527
    %v1530 = vadd.f32 %v1520, %v1528
    %v1531 = vtanh.pop %v1530
    %1533 = vrot.lane.b32.xlu0 %v1531, 32
    %v1534 = vpop.permute.xlu0 %1533
    %v1536 = vmul.f32 %v1513, %v1534
    %1538 = vrot.lane.b32.xlu0 %v1530, 96
    %v1539 = vpop.permute.xlu0 %1538
    %1541 = vst.msk [vmem:[#allocation5] sm:$0xff] %vm166, %v1539
    %1543 = vrot.lane.b32.xlu0 %v1536, 64
    %v1544 = vpop.permute.xlu0 %1543
    %1546 = vst.msk [vmem:[#allocation4] sm:$0xff] %vm166, %v1544
    %1547 = vst.msk [vmem:[%s817] sm:$0xff] %vm166, %v1544
    %v1548 = vld [vmem:[#allocation2] sm:$0xff]
    %v1549 = vld [vmem:[#allocation2 + $0x8] sm:$0xff]
    %v1550 = vld [vmem:[#allocation2 + $0x10] sm:$0xff]
    %v1551 = vld [vmem:[#allocation2 + $0x18] sm:$0xff]
    %v1552 = vld [vmem:[#allocation2 + $0x20] sm:$0xff]
    %v1553 = vld [vmem:[#allocation2 + $0x28] sm:$0xff]
    %v1554 = vld [vmem:[#allocation2 + $0x30] sm:$0xff]
    %v1555 = vld [vmem:[#allocation2 + $0x38] sm:$0xff]
    %s1556 = scalar_lea.vmem [#allocation6], 32
    %v1557 = vld [vmem:[%s1556] sm:$0xff]
    %v1558 = vld [vmem:[%s1556 + $0x8] sm:$0xff]
    %v1559 = vld [vmem:[%s1556 + $0x10] sm:$0xff]
    %v1560 = vld [vmem:[%s1556 + $0x18] sm:$0xff]
    %s1561 = scalar_lea.vmem %s4, 2
    %v1562 = vld [vmem:[%s1561] sm:$0x1]
    %v1564 = vperm.slane %v1562, 0
    %v1567 = vsel %vm166, %v1548, 0
    %v1570 = vsel %vm166, %v1549, 0
    %v1573 = vsel %vm166, %v1550, 0
    %v1576 = vsel %vm166, %v1551, 0
    %v1579 = vsel %vm166, %v1552, 0
    %v1582 = vsel %vm166, %v1553, 0
    %v1585 = vsel %vm166, %v1554, 0
    %v1588 = vsel %vm166, %v1555, 0
    %1590 = vmatpush.msra.mxu0 0.0
    %1591 = vmatpush.msra.mxu0 0.0
    %1592 = vmatpush.msra.mxu0 0.0
    %1593 = vmatpush.msra.mxu0 0.0
    %1594 = vmatpush.msra.mxu0 0.0
    %1595 = vmatpush.msra.mxu0 0.0
    %1596 = vmatpush.msra.mxu0 0.0
    %1597 = vmatpush.msra.mxu0 0.0
    %1598 = vmatpush.msra.mxu0 0.0
    %1599 = vmatpush.msra.mxu0 0.0
    %1600 = vmatpush.msra.mxu0 0.0
    %1601 = vmatpush.msra.mxu0 0.0
    %1602 = vmatpush.msra.mxu0 %v1560
    %1603 = vmatpush.msra.mxu0 %v1559
    %1604 = vmatpush.msra.mxu0 %v1558
    %1605 = vmatpush.msra.mxu0 %v1557
    %1606 = vmatmul.f32.gmra.mxu0 %v1567
    %v1607 = vpop.f32.mrf.mxu0
    %v1608 = vadd.f32 %v1564, %v1607
    %1609 = vmatmul.f32.gmra.mxu0 %v1570
    %v1610 = vpop.f32.mrf.mxu0
    %v1611 = vadd.f32 %v1564, %v1610
    %1612 = vmatmul.f32.gmra.mxu0 %v1573
    %v1613 = vpop.f32.mrf.mxu0
    %v1614 = vadd.f32 %v1564, %v1613
    %1615 = vmatmul.f32.gmra.mxu0 %v1576
    %v1616 = vpop.f32.mrf.mxu0
    %v1617 = vadd.f32 %v1564, %v1616
    %1618 = vmatmul.f32.gmra.mxu0 %v1579
    %v1619 = vpop.f32.mrf.mxu0
    %v1620 = vadd.f32 %v1564, %v1619
    %1621 = vmatmul.f32.gmra.mxu0 %v1582
    %v1622 = vpop.f32.mrf.mxu0
    %v1623 = vadd.f32 %v1564, %v1622
    %1624 = vmatmul.f32.gmra.mxu0 %v1585
    %v1625 = vpop.f32.mrf.mxu0
    %v1626 = vadd.f32 %v1564, %v1625
    %1627 = vmatmul.f32.gmra.mxu0 %v1588
    %v1628 = vpop.f32.mrf.mxu0
    %v1629 = vadd.f32 %v1564, %v1628
    %1630 = vdwg.mxu0
    %1631 = vst [vmem:[#allocation3] sm:$0xff] %v1608
    %1632 = vst [vmem:[#allocation3 + $0x8] sm:$0xff] %v1611
    %1633 = vst [vmem:[#allocation3 + $0x10] sm:$0xff] %v1614
    %1634 = vst [vmem:[#allocation3 + $0x18] sm:$0xff] %v1617
    %1635 = vst [vmem:[#allocation3 + $0x20] sm:$0xff] %v1620
    %1636 = vst [vmem:[#allocation3 + $0x28] sm:$0xff] %v1623
    %1637 = vst [vmem:[#allocation3 + $0x30] sm:$0xff] %v1626
    %1638 = vst [vmem:[#allocation3 + $0x38] sm:$0xff] %v1629
    %1639 = vst.msk [vmem:[#allocation4] sm:$0xff] %vm166, 0.0
    %1640 = vst.msk [vmem:[#allocation5] sm:$0xff] %vm166, 0.0
    %s1641 = scalar_lea.vmem %s3, 64
    %v1642 = vld [vmem:[%s1641] sm:$0xff]
    %v1643 = vld [vmem:[%s1641 + $0x8] sm:$0xff]
    %v1644 = vld [vmem:[%s1641 + $0x10] sm:$0xff]
    %v1645 = vld [vmem:[%s1641 + $0x18] sm:$0xff]
    %v1646 = vld [vmem:[#allocation3] sm:$0xff]
    %v1647 = vld [vmem:[#allocation4] sm:$0xff]
    %v1649 = vsel %vm166, %v1647, 0
    %1651 = vmatpush.msra.mxu0 0.0
    %1652 = vmatpush.msra.mxu0 0.0
    %1653 = vmatpush.msra.mxu0 0.0
    %1654 = vmatpush.msra.mxu0 0.0
    %1655 = vmatpush.msra.mxu0 0.0
    %1656 = vmatpush.msra.mxu0 0.0
    %1657 = vmatpush.msra.mxu0 0.0
    %1658 = vmatpush.msra.mxu0 0.0
    %1659 = vmatpush.msra.mxu0 0.0
    %1660 = vmatpush.msra.mxu0 0.0
    %1661 = vmatpush.msra.mxu0 0.0
    %1662 = vmatpush.msra.mxu0 0.0
    %1663 = vmatpush.msra.mxu0 %v1645
    %1664 = vmatpush.msra.mxu0 %v1644
    %1665 = vmatpush.msra.mxu0 %v1643
    %1666 = vmatpush.msra.mxu0 %v1642
    %1667 = vmatmul.f32.gmra.mxu0 %v1649
    %v1668 = vpop.f32.mrf.mxu0
    %v1669 = vadd.f32 0.0, %v1668
    %1670 = vdwg.mxu0
    %v1671 = vadd.f32 %v1646, %v1669
    %v1672 = vxor.u32 %v1671, 2147483648
    %v1673 = vmul.f32 %v1672, 1.442695
    %v1674 = vpow.pop %v1673
    %v1675 = vadd.f32 %v1674, 1.0
    %v1676 = vrcp.pop %v1675
    %v1677 = vmul.f32 %v1675, %v1676
    %v1678 = vsub.f32 1.0, %v1677
    %v1679 = vmul.f32 %v1676, %v1678
    %v1680 = vadd.f32 %v1676, %v1679
    %vm1681 = vweird.f32 %v1675
    %vm1682 = vweird.f32 %v1676
    %vm1683 = vmor %vm1681, %vm1682
    %v1684 = vsel %vm1683, %v1676, %v1680
    %v1685 = vand.u32 2147483647, %v1675
    %vm1686 = vcmp.eq.f32.partialorder %v1685, 8.507059e+37
    %v1687 = vand.u32 %v1675, 2147483648
    %v1688 = vor.u32 1.1754944e-38, %v1687
    %v1689 = vsel %vm1686, %v1688, %v1684
    %v1690 = vmul.f32 1.0, %v1689
    %v1691 = vtanh.pop %v1671
    %v1692 = vld [vmem:[#allocation5] sm:$0xff]
    %1694 = vrot.lane.b32.xlu0 %v1692, 32
    %v1695 = vpop.permute.xlu0 %1694
    %v1697 = vmul.f32 %v1690, %v1695
    %1699 = vrot.lane.b32.xlu0 %v1691, 32
    %v1700 = vpop.permute.xlu0 %1699
    %v1702 = vmul.f32 %v1690, %v1700
    %1704 = vrot.lane.b32.xlu0 %v1702, 32
    %v1705 = vpop.permute.xlu0 %1704
    %v1707 = vadd.f32 %v1697, %v1705
    %v1708 = vtanh.pop %v1707
    %1710 = vrot.lane.b32.xlu0 %v1708, 32
    %v1711 = vpop.permute.xlu0 %1710
    %v1713 = vmul.f32 %v1690, %v1711
    %1715 = vrot.lane.b32.xlu0 %v1707, 96
    %v1716 = vpop.permute.xlu0 %1715
    %1718 = vst.msk [vmem:[#allocation5] sm:$0xff] %vm166, %v1716
    %1720 = vrot.lane.b32.xlu0 %v1713, 64
    %v1721 = vpop.permute.xlu0 %1720
    %1723 = vst.msk [vmem:[#allocation4] sm:$0xff] %vm166, %v1721
    %v1724 = vld [vmem:[%s252] sm:$0xff]
    %v1725 = vld [vmem:[#allocation4] sm:$0xff]
    %v1727 = vsel %vm166, %v1725, 0
    %1729 = vmatpush.msra.mxu0 0.0
    %1730 = vmatpush.msra.mxu0 0.0
    %1731 = vmatpush.msra.mxu0 0.0
    %1732 = vmatpush.msra.mxu0 0.0
    %1733 = vmatpush.msra.mxu0 0.0
    %1734 = vmatpush.msra.mxu0 0.0
    %1735 = vmatpush.msra.mxu0 0.0
    %1736 = vmatpush.msra.mxu0 0.0
    %1737 = vmatpush.msra.mxu0 0.0
    %1738 = vmatpush.msra.mxu0 0.0
    %1739 = vmatpush.msra.mxu0 0.0
    %1740 = vmatpush.msra.mxu0 0.0
    %1741 = vmatpush.msra.mxu0 %v1645
    %1742 = vmatpush.msra.mxu0 %v1644
    %1743 = vmatpush.msra.mxu0 %v1643
    %1744 = vmatpush.msra.mxu0 %v1642
    %1745 = vmatmul.f32.gmra.mxu0 %v1727
    %v1746 = vpop.f32.mrf.mxu0
    %v1747 = vadd.f32 0.0, %v1746
    %1748 = vdwg.mxu0
    %v1749 = vadd.f32 %v1724, %v1747
    %v1750 = vxor.u32 %v1749, 2147483648
    %v1751 = vmul.f32 %v1750, 1.442695
    %v1752 = vpow.pop %v1751
    %v1753 = vadd.f32 %v1752, 1.0
    %v1754 = vrcp.pop %v1753
    %v1755 = vmul.f32 %v1753, %v1754
    %v1756 = vsub.f32 1.0, %v1755
    %v1757 = vmul.f32 %v1754, %v1756
    %v1758 = vadd.f32 %v1754, %v1757
    %vm1759 = vweird.f32 %v1753
    %vm1760 = vweird.f32 %v1754
    %vm1761 = vmor %vm1759, %vm1760
    %v1762 = vsel %vm1761, %v1754, %v1758
    %v1763 = vand.u32 2147483647, %v1753
    %vm1764 = vcmp.eq.f32.partialorder %v1763, 8.507059e+37
    %v1765 = vand.u32 %v1753, 2147483648
    %v1766 = vor.u32 1.1754944e-38, %v1765
    %v1767 = vsel %vm1764, %v1766, %v1762
    %v1768 = vmul.f32 1.0, %v1767
    %v1769 = vtanh.pop %v1749
    %v1770 = vld [vmem:[#allocation5] sm:$0xff]
    %1772 = vrot.lane.b32.xlu0 %v1770, 32
    %v1773 = vpop.permute.xlu0 %1772
    %v1775 = vmul.f32 %v1768, %v1773
    %1777 = vrot.lane.b32.xlu0 %v1769, 32
    %v1778 = vpop.permute.xlu0 %1777
    %v1780 = vmul.f32 %v1768, %v1778
    %1782 = vrot.lane.b32.xlu0 %v1780, 32
    %v1783 = vpop.permute.xlu0 %1782
    %v1785 = vadd.f32 %v1775, %v1783
    %v1786 = vtanh.pop %v1785
    %1788 = vrot.lane.b32.xlu0 %v1786, 32
    %v1789 = vpop.permute.xlu0 %1788
    %v1791 = vmul.f32 %v1768, %v1789
    %1793 = vrot.lane.b32.xlu0 %v1785, 96
    %v1794 = vpop.permute.xlu0 %1793
    %1796 = vst.msk [vmem:[#allocation5] sm:$0xff] %vm166, %v1794
    %1798 = vrot.lane.b32.xlu0 %v1791, 64
    %v1799 = vpop.permute.xlu0 %1798
    %1801 = vst.msk [vmem:[#allocation4] sm:$0xff] %vm166, %v1799
    %v1802 = vld [vmem:[%s333] sm:$0xff]
    %v1803 = vld [vmem:[#allocation4] sm:$0xff]
    %v1805 = vsel %vm166, %v1803, 0
    %1807 = vmatpush.msra.mxu0 0.0
    %1808 = vmatpush.msra.mxu0 0.0
    %1809 = vmatpush.msra.mxu0 0.0
    %1810 = vmatpush.msra.mxu0 0.0
    %1811 = vmatpush.msra.mxu0 0.0
    %1812 = vmatpush.msra.mxu0 0.0
    %1813 = vmatpush.msra.mxu0 0.0
    %1814 = vmatpush.msra.mxu0 0.0
    %1815 = vmatpush.msra.mxu0 0.0
    %1816 = vmatpush.msra.mxu0 0.0
    %1817 = vmatpush.msra.mxu0 0.0
    %1818 = vmatpush.msra.mxu0 0.0
    %1819 = vmatpush.msra.mxu0 %v1645
    %1820 = vmatpush.msra.mxu0 %v1644
    %1821 = vmatpush.msra.mxu0 %v1643
    %1822 = vmatpush.msra.mxu0 %v1642
    %1823 = vmatmul.f32.gmra.mxu0 %v1805
    %v1824 = vpop.f32.mrf.mxu0
    %v1825 = vadd.f32 0.0, %v1824
    %1826 = vdwg.mxu0
    %v1827 = vadd.f32 %v1802, %v1825
    %v1828 = vxor.u32 %v1827, 2147483648
    %v1829 = vmul.f32 %v1828, 1.442695
    %v1830 = vpow.pop %v1829
    %v1831 = vadd.f32 %v1830, 1.0
    %v1832 = vrcp.pop %v1831
    %v1833 = vmul.f32 %v1831, %v1832
    %v1834 = vsub.f32 1.0, %v1833
    %v1835 = vmul.f32 %v1832, %v1834
    %v1836 = vadd.f32 %v1832, %v1835
    %vm1837 = vweird.f32 %v1831
    %vm1838 = vweird.f32 %v1832
    %vm1839 = vmor %vm1837, %vm1838
    %v1840 = vsel %vm1839, %v1832, %v1836
    %v1841 = vand.u32 2147483647, %v1831
    %vm1842 = vcmp.eq.f32.partialorder %v1841, 8.507059e+37
    %v1843 = vand.u32 %v1831, 2147483648
    %v1844 = vor.u32 1.1754944e-38, %v1843
    %v1845 = vsel %vm1842, %v1844, %v1840
    %v1846 = vmul.f32 1.0, %v1845
    %v1847 = vtanh.pop %v1827
    %v1848 = vld [vmem:[#allocation5] sm:$0xff]
    %1850 = vrot.lane.b32.xlu0 %v1848, 32
    %v1851 = vpop.permute.xlu0 %1850
    %v1853 = vmul.f32 %v1846, %v1851
    %1855 = vrot.lane.b32.xlu0 %v1847, 32
    %v1856 = vpop.permute.xlu0 %1855
    %v1858 = vmul.f32 %v1846, %v1856
    %1860 = vrot.lane.b32.xlu0 %v1858, 32
    %v1861 = vpop.permute.xlu0 %1860
    %v1863 = vadd.f32 %v1853, %v1861
    %v1864 = vtanh.pop %v1863
    %1866 = vrot.lane.b32.xlu0 %v1864, 32
    %v1867 = vpop.permute.xlu0 %1866
    %v1869 = vmul.f32 %v1846, %v1867
    %1871 = vrot.lane.b32.xlu0 %v1863, 96
    %v1872 = vpop.permute.xlu0 %1871
    %1874 = vst.msk [vmem:[#allocation5] sm:$0xff] %vm166, %v1872
    %1876 = vrot.lane.b32.xlu0 %v1869, 64
    %v1877 = vpop.permute.xlu0 %1876
    %1879 = vst.msk [vmem:[#allocation4] sm:$0xff] %vm166, %v1877
    %v1880 = vld [vmem:[%s414] sm:$0xff]
    %v1881 = vld [vmem:[#allocation4] sm:$0xff]
    %v1883 = vsel %vm166, %v1881, 0
    %1885 = vmatpush.msra.mxu0 0.0
    %1886 = vmatpush.msra.mxu0 0.0
    %1887 = vmatpush.msra.mxu0 0.0
    %1888 = vmatpush.msra.mxu0 0.0
    %1889 = vmatpush.msra.mxu0 0.0
    %1890 = vmatpush.msra.mxu0 0.0
    %1891 = vmatpush.msra.mxu0 0.0
    %1892 = vmatpush.msra.mxu0 0.0
    %1893 = vmatpush.msra.mxu0 0.0
    %1894 = vmatpush.msra.mxu0 0.0
    %1895 = vmatpush.msra.mxu0 0.0
    %1896 = vmatpush.msra.mxu0 0.0
    %1897 = vmatpush.msra.mxu0 %v1645
    %1898 = vmatpush.msra.mxu0 %v1644
    %1899 = vmatpush.msra.mxu0 %v1643
    %1900 = vmatpush.msra.mxu0 %v1642
    %1901 = vmatmul.f32.gmra.mxu0 %v1883
    %v1902 = vpop.f32.mrf.mxu0
    %v1903 = vadd.f32 0.0, %v1902
    %1904 = vdwg.mxu0
    %v1905 = vadd.f32 %v1880, %v1903
    %v1906 = vxor.u32 %v1905, 2147483648
    %v1907 = vmul.f32 %v1906, 1.442695
    %v1908 = vpow.pop %v1907
    %v1909 = vadd.f32 %v1908, 1.0
    %v1910 = vrcp.pop %v1909
    %v1911 = vmul.f32 %v1909, %v1910
    %v1912 = vsub.f32 1.0, %v1911
    %v1913 = vmul.f32 %v1910, %v1912
    %v1914 = vadd.f32 %v1910, %v1913
    %vm1915 = vweird.f32 %v1909
    %vm1916 = vweird.f32 %v1910
    %vm1917 = vmor %vm1915, %vm1916
    %v1918 = vsel %vm1917, %v1910, %v1914
    %v1919 = vand.u32 2147483647, %v1909
    %vm1920 = vcmp.eq.f32.partialorder %v1919, 8.507059e+37
    %v1921 = vand.u32 %v1909, 2147483648
    %v1922 = vor.u32 1.1754944e-38, %v1921
    %v1923 = vsel %vm1920, %v1922, %v1918
    %v1924 = vmul.f32 1.0, %v1923
    %v1925 = vtanh.pop %v1905
    %v1926 = vld [vmem:[#allocation5] sm:$0xff]
    %1928 = vrot.lane.b32.xlu0 %v1926, 32
    %v1929 = vpop.permute.xlu0 %1928
    %v1931 = vmul.f32 %v1924, %v1929
    %1933 = vrot.lane.b32.xlu0 %v1925, 32
    %v1934 = vpop.permute.xlu0 %1933
    %v1936 = vmul.f32 %v1924, %v1934
    %1938 = vrot.lane.b32.xlu0 %v1936, 32
    %v1939 = vpop.permute.xlu0 %1938
    %v1941 = vadd.f32 %v1931, %v1939
    %v1942 = vtanh.pop %v1941
    %1944 = vrot.lane.b32.xlu0 %v1942, 32
    %v1945 = vpop.permute.xlu0 %1944
    %v1947 = vmul.f32 %v1924, %v1945
    %1949 = vrot.lane.b32.xlu0 %v1941, 96
    %v1950 = vpop.permute.xlu0 %1949
    %1952 = vst.msk [vmem:[#allocation5] sm:$0xff] %vm166, %v1950
    %1954 = vrot.lane.b32.xlu0 %v1947, 64
    %v1955 = vpop.permute.xlu0 %1954
    %1957 = vst.msk [vmem:[#allocation4] sm:$0xff] %vm166, %v1955
    %v1958 = vld [vmem:[%s495] sm:$0xff]
    %v1959 = vld [vmem:[#allocation4] sm:$0xff]
    %v1961 = vsel %vm166, %v1959, 0
    %1963 = vmatpush.msra.mxu0 0.0
    %1964 = vmatpush.msra.mxu0 0.0
    %1965 = vmatpush.msra.mxu0 0.0
    %1966 = vmatpush.msra.mxu0 0.0
    %1967 = vmatpush.msra.mxu0 0.0
    %1968 = vmatpush.msra.mxu0 0.0
    %1969 = vmatpush.msra.mxu0 0.0
    %1970 = vmatpush.msra.mxu0 0.0
    %1971 = vmatpush.msra.mxu0 0.0
    %1972 = vmatpush.msra.mxu0 0.0
    %1973 = vmatpush.msra.mxu0 0.0
    %1974 = vmatpush.msra.mxu0 0.0
    %1975 = vmatpush.msra.mxu0 %v1645
    %1976 = vmatpush.msra.mxu0 %v1644
    %1977 = vmatpush.msra.mxu0 %v1643
    %1978 = vmatpush.msra.mxu0 %v1642
    %1979 = vmatmul.f32.gmra.mxu0 %v1961
    %v1980 = vpop.f32.mrf.mxu0
    %v1981 = vadd.f32 0.0, %v1980
    %1982 = vdwg.mxu0
    %v1983 = vadd.f32 %v1958, %v1981
    %v1984 = vxor.u32 %v1983, 2147483648
    %v1985 = vmul.f32 %v1984, 1.442695
    %v1986 = vpow.pop %v1985
    %v1987 = vadd.f32 %v1986, 1.0
    %v1988 = vrcp.pop %v1987
    %v1989 = vmul.f32 %v1987, %v1988
    %v1990 = vsub.f32 1.0, %v1989
    %v1991 = vmul.f32 %v1988, %v1990
    %v1992 = vadd.f32 %v1988, %v1991
    %vm1993 = vweird.f32 %v1987
    %vm1994 = vweird.f32 %v1988
    %vm1995 = vmor %vm1993, %vm1994
    %v1996 = vsel %vm1995, %v1988, %v1992
    %v1997 = vand.u32 2147483647, %v1987
    %vm1998 = vcmp.eq.f32.partialorder %v1997, 8.507059e+37
    %v1999 = vand.u32 %v1987, 2147483648
    %v2000 = vor.u32 1.1754944e-38, %v1999
    %v2001 = vsel %vm1998, %v2000, %v1996
    %v2002 = vmul.f32 1.0, %v2001
    %v2003 = vtanh.pop %v1983
    %v2004 = vld [vmem:[#allocation5] sm:$0xff]
    %2006 = vrot.lane.b32.xlu0 %v2004, 32
    %v2007 = vpop.permute.xlu0 %2006
    %v2009 = vmul.f32 %v2002, %v2007
    %2011 = vrot.lane.b32.xlu0 %v2003, 32
    %v2012 = vpop.permute.xlu0 %2011
    %v2014 = vmul.f32 %v2002, %v2012
    %2016 = vrot.lane.b32.xlu0 %v2014, 32
    %v2017 = vpop.permute.xlu0 %2016
    %v2019 = vadd.f32 %v2009, %v2017
    %v2020 = vtanh.pop %v2019
    %2022 = vrot.lane.b32.xlu0 %v2020, 32
    %v2023 = vpop.permute.xlu0 %2022
    %v2025 = vmul.f32 %v2002, %v2023
    %2027 = vrot.lane.b32.xlu0 %v2019, 96
    %v2028 = vpop.permute.xlu0 %2027
    %2030 = vst.msk [vmem:[#allocation5] sm:$0xff] %vm166, %v2028
    %2032 = vrot.lane.b32.xlu0 %v2025, 64
    %v2033 = vpop.permute.xlu0 %2032
    %2035 = vst.msk [vmem:[#allocation4] sm:$0xff] %vm166, %v2033
    %v2036 = vld [vmem:[%s576] sm:$0xff]
    %v2037 = vld [vmem:[#allocation4] sm:$0xff]
    %v2039 = vsel %vm166, %v2037, 0
    %2041 = vmatpush.msra.mxu0 0.0
    %2042 = vmatpush.msra.mxu0 0.0
    %2043 = vmatpush.msra.mxu0 0.0
    %2044 = vmatpush.msra.mxu0 0.0
    %2045 = vmatpush.msra.mxu0 0.0
    %2046 = vmatpush.msra.mxu0 0.0
    %2047 = vmatpush.msra.mxu0 0.0
    %2048 = vmatpush.msra.mxu0 0.0
    %2049 = vmatpush.msra.mxu0 0.0
    %2050 = vmatpush.msra.mxu0 0.0
    %2051 = vmatpush.msra.mxu0 0.0
    %2052 = vmatpush.msra.mxu0 0.0
    %2053 = vmatpush.msra.mxu0 %v1645
    %2054 = vmatpush.msra.mxu0 %v1644
    %2055 = vmatpush.msra.mxu0 %v1643
    %2056 = vmatpush.msra.mxu0 %v1642
    %2057 = vmatmul.f32.gmra.mxu0 %v2039
    %v2058 = vpop.f32.mrf.mxu0
    %v2059 = vadd.f32 0.0, %v2058
    %2060 = vdwg.mxu0
    %v2061 = vadd.f32 %v2036, %v2059
    %v2062 = vxor.u32 %v2061, 2147483648
    %v2063 = vmul.f32 %v2062, 1.442695
    %v2064 = vpow.pop %v2063
    %v2065 = vadd.f32 %v2064, 1.0
    %v2066 = vrcp.pop %v2065
    %v2067 = vmul.f32 %v2065, %v2066
    %v2068 = vsub.f32 1.0, %v2067
    %v2069 = vmul.f32 %v2066, %v2068
    %v2070 = vadd.f32 %v2066, %v2069
    %vm2071 = vweird.f32 %v2065
    %vm2072 = vweird.f32 %v2066
    %vm2073 = vmor %vm2071, %vm2072
    %v2074 = vsel %vm2073, %v2066, %v2070
    %v2075 = vand.u32 2147483647, %v2065
    %vm2076 = vcmp.eq.f32.partialorder %v2075, 8.507059e+37
    %v2077 = vand.u32 %v2065, 2147483648
    %v2078 = vor.u32 1.1754944e-38, %v2077
    %v2079 = vsel %vm2076, %v2078, %v2074
    %v2080 = vmul.f32 1.0, %v2079
    %v2081 = vtanh.pop %v2061
    %v2082 = vld [vmem:[#allocation5] sm:$0xff]
    %2084 = vrot.lane.b32.xlu0 %v2082, 32
    %v2085 = vpop.permute.xlu0 %2084
    %v2087 = vmul.f32 %v2080, %v2085
    %2089 = vrot.lane.b32.xlu0 %v2081, 32
    %v2090 = vpop.permute.xlu0 %2089
    %v2092 = vmul.f32 %v2080, %v2090
    %2094 = vrot.lane.b32.xlu0 %v2092, 32
    %v2095 = vpop.permute.xlu0 %2094
    %v2097 = vadd.f32 %v2087, %v2095
    %v2098 = vtanh.pop %v2097
    %2100 = vrot.lane.b32.xlu0 %v2098, 32
    %v2101 = vpop.permute.xlu0 %2100
    %v2103 = vmul.f32 %v2080, %v2101
    %2105 = vrot.lane.b32.xlu0 %v2097, 96
    %v2106 = vpop.permute.xlu0 %2105
    %2108 = vst.msk [vmem:[#allocation5] sm:$0xff] %vm166, %v2106
    %2110 = vrot.lane.b32.xlu0 %v2103, 64
    %v2111 = vpop.permute.xlu0 %2110
    %2113 = vst.msk [vmem:[#allocation4] sm:$0xff] %vm166, %v2111
    %v2114 = vld [vmem:[%s657] sm:$0xff]
    %v2115 = vld [vmem:[#allocation4] sm:$0xff]
    %v2117 = vsel %vm166, %v2115, 0
    %2119 = vmatpush.msra.mxu0 0.0
    %2120 = vmatpush.msra.mxu0 0.0
    %2121 = vmatpush.msra.mxu0 0.0
    %2122 = vmatpush.msra.mxu0 0.0
    %2123 = vmatpush.msra.mxu0 0.0
    %2124 = vmatpush.msra.mxu0 0.0
    %2125 = vmatpush.msra.mxu0 0.0
    %2126 = vmatpush.msra.mxu0 0.0
    %2127 = vmatpush.msra.mxu0 0.0
    %2128 = vmatpush.msra.mxu0 0.0
    %2129 = vmatpush.msra.mxu0 0.0
    %2130 = vmatpush.msra.mxu0 0.0
    %2131 = vmatpush.msra.mxu0 %v1645
    %2132 = vmatpush.msra.mxu0 %v1644
    %2133 = vmatpush.msra.mxu0 %v1643
    %2134 = vmatpush.msra.mxu0 %v1642
    %2135 = vmatmul.f32.gmra.mxu0 %v2117
    %v2136 = vpop.f32.mrf.mxu0
    %v2137 = vadd.f32 0.0, %v2136
    %2138 = vdwg.mxu0
    %v2139 = vadd.f32 %v2114, %v2137
    %v2140 = vxor.u32 %v2139, 2147483648
    %v2141 = vmul.f32 %v2140, 1.442695
    %v2142 = vpow.pop %v2141
    %v2143 = vadd.f32 %v2142, 1.0
    %v2144 = vrcp.pop %v2143
    %v2145 = vmul.f32 %v2143, %v2144
    %v2146 = vsub.f32 1.0, %v2145
    %v2147 = vmul.f32 %v2144, %v2146
    %v2148 = vadd.f32 %v2144, %v2147
    %vm2149 = vweird.f32 %v2143
    %vm2150 = vweird.f32 %v2144
    %vm2151 = vmor %vm2149, %vm2150
    %v2152 = vsel %vm2151, %v2144, %v2148
    %v2153 = vand.u32 2147483647, %v2143
    %vm2154 = vcmp.eq.f32.partialorder %v2153, 8.507059e+37
    %v2155 = vand.u32 %v2143, 2147483648
    %v2156 = vor.u32 1.1754944e-38, %v2155
    %v2157 = vsel %vm2154, %v2156, %v2152
    %v2158 = vmul.f32 1.0, %v2157
    %v2159 = vtanh.pop %v2139
    %v2160 = vld [vmem:[#allocation5] sm:$0xff]
    %2162 = vrot.lane.b32.xlu0 %v2160, 32
    %v2163 = vpop.permute.xlu0 %2162
    %v2165 = vmul.f32 %v2158, %v2163
    %2167 = vrot.lane.b32.xlu0 %v2159, 32
    %v2168 = vpop.permute.xlu0 %2167
    %v2170 = vmul.f32 %v2158, %v2168
    %2172 = vrot.lane.b32.xlu0 %v2170, 32
    %v2173 = vpop.permute.xlu0 %2172
    %v2175 = vadd.f32 %v2165, %v2173
    %v2176 = vtanh.pop %v2175
    %2178 = vrot.lane.b32.xlu0 %v2176, 32
    %v2179 = vpop.permute.xlu0 %2178
    %v2181 = vmul.f32 %v2158, %v2179
    %2183 = vrot.lane.b32.xlu0 %v2175, 96
    %v2184 = vpop.permute.xlu0 %2183
    %2186 = vst.msk [vmem:[#allocation5] sm:$0xff] %vm166, %v2184
    %2188 = vrot.lane.b32.xlu0 %v2181, 64
    %v2189 = vpop.permute.xlu0 %2188
    %2191 = vst.msk [vmem:[#allocation4] sm:$0xff] %vm166, %v2189
    %v2192 = vld [vmem:[%s738] sm:$0xff]
    %v2193 = vld [vmem:[#allocation4] sm:$0xff]
    %v2195 = vsel %vm166, %v2193, 0
    %2197 = vmatpush.msra.mxu0 0.0
    %2198 = vmatpush.msra.mxu0 0.0
    %2199 = vmatpush.msra.mxu0 0.0
    %2200 = vmatpush.msra.mxu0 0.0
    %2201 = vmatpush.msra.mxu0 0.0
    %2202 = vmatpush.msra.mxu0 0.0
    %2203 = vmatpush.msra.mxu0 0.0
    %2204 = vmatpush.msra.mxu0 0.0
    %2205 = vmatpush.msra.mxu0 0.0
    %2206 = vmatpush.msra.mxu0 0.0
    %2207 = vmatpush.msra.mxu0 0.0
    %2208 = vmatpush.msra.mxu0 0.0
    %2209 = vmatpush.msra.mxu0 %v1645
    %2210 = vmatpush.msra.mxu0 %v1644
    %2211 = vmatpush.msra.mxu0 %v1643
    %2212 = vmatpush.msra.mxu0 %v1642
    %2213 = vmatmul.f32.gmra.mxu0 %v2195
    %v2214 = vpop.f32.mrf.mxu0
    %v2215 = vadd.f32 0.0, %v2214
    %2216 = vdwg.mxu0
    %v2217 = vadd.f32 %v2192, %v2215
    %v2218 = vxor.u32 %v2217, 2147483648
    %v2219 = vmul.f32 %v2218, 1.442695
    %v2220 = vpow.pop %v2219
    %v2221 = vadd.f32 %v2220, 1.0
    %v2222 = vrcp.pop %v2221
    %v2223 = vmul.f32 %v2221, %v2222
    %v2224 = vsub.f32 1.0, %v2223
    %v2225 = vmul.f32 %v2222, %v2224
    %v2226 = vadd.f32 %v2222, %v2225
    %vm2227 = vweird.f32 %v2221
    %vm2228 = vweird.f32 %v2222
    %vm2229 = vmor %vm2227, %vm2228
    %v2230 = vsel %vm2229, %v2222, %v2226
    %v2231 = vand.u32 2147483647, %v2221
    %vm2232 = vcmp.eq.f32.partialorder %v2231, 8.507059e+37
    %v2233 = vand.u32 %v2221, 2147483648
    %v2234 = vor.u32 1.1754944e-38, %v2233
    %v2235 = vsel %vm2232, %v2234, %v2230
    %v2236 = vmul.f32 1.0, %v2235
    %v2237 = vtanh.pop %v2217
    %v2238 = vld [vmem:[#allocation5] sm:$0xff]
    %2240 = vrot.lane.b32.xlu0 %v2238, 32
    %v2241 = vpop.permute.xlu0 %2240
    %v2243 = vmul.f32 %v2236, %v2241
    %2245 = vrot.lane.b32.xlu0 %v2237, 32
    %v2246 = vpop.permute.xlu0 %2245
    %v2248 = vmul.f32 %v2236, %v2246
    %2250 = vrot.lane.b32.xlu0 %v2248, 32
    %v2251 = vpop.permute.xlu0 %2250
    %v2253 = vadd.f32 %v2243, %v2251
    %v2254 = vtanh.pop %v2253
    %2256 = vrot.lane.b32.xlu0 %v2254, 32
    %v2257 = vpop.permute.xlu0 %2256
    %v2259 = vmul.f32 %v2236, %v2257
    %2261 = vrot.lane.b32.xlu0 %v2253, 96
    %v2262 = vpop.permute.xlu0 %2261
    %2264 = vst.msk [vmem:[#allocation5] sm:$0xff] %vm166, %v2262
    %2266 = vrot.lane.b32.xlu0 %v2259, 64
    %v2267 = vpop.permute.xlu0 %2266
    %2269 = vst.msk [vmem:[#allocation4] sm:$0xff] %vm166, %v2267
    %v2270 = vld [vmem:[#allocation4] sm:$0xff]
    %v2271 = vld [vmem:[#allocation8] sm:$0xff]
    %v2272 = vld [vmem:[#allocation8 + $0x8] sm:$0xff]
    %v2273 = vld [vmem:[#allocation8 + $0x10] sm:$0xff]
    %v2274 = vld [vmem:[#allocation8 + $0x18] sm:$0xff]
    %v2275 = vld [vmem:[%s6] sm:$0x1]
    %v2277 = vperm.slane %v2275, 0
    %v2280 = vsel %vm166, %v2270, 0
    %2282 = vmatpush.msra.mxu0 0.0
    %2283 = vmatpush.msra.mxu0 0.0
    %2284 = vmatpush.msra.mxu0 0.0
    %2285 = vmatpush.msra.mxu0 0.0
    %2286 = vmatpush.msra.mxu0 0.0
    %2287 = vmatpush.msra.mxu0 0.0
    %2288 = vmatpush.msra.mxu0 0.0
    %2289 = vmatpush.msra.mxu0 0.0
    %2290 = vmatpush.msra.mxu0 0.0
    %2291 = vmatpush.msra.mxu0 0.0
    %2292 = vmatpush.msra.mxu0 0.0
    %2293 = vmatpush.msra.mxu0 0.0
    %2294 = vmatpush.msra.mxu0 %v2274
    %2295 = vmatpush.msra.mxu0 %v2273
    %2296 = vmatpush.msra.mxu0 %v2272
    %2297 = vmatpush.msra.mxu0 %v2271
    %2298 = vmatmul.f32.gmra.mxu0 %v2280
    %v2299 = vpop.f32.mrf.mxu0
    %v2300 = vadd.f32 %v2277, %v2299
    %2301 = vdwg.mxu0
    %v2302 = vmax.f32 %v2300, 0.0
    %v2303 = vld [vmem:[#allocation10] sm:$0xff]
    %v2304 = vld [vmem:[#allocation10 + $0x8] sm:$0xff]
    %v2305 = vld [vmem:[#allocation10 + $0x10] sm:$0xff]
    %v2306 = vld [vmem:[#allocation10 + $0x18] sm:$0xff]
    %v2307 = vld [vmem:[#allocation10 + $0x20] sm:$0xff]
    %v2308 = vld [vmem:[#allocation10 + $0x28] sm:$0xff]
    %v2309 = vld [vmem:[#allocation10 + $0x30] sm:$0xff]
    %v2310 = vld [vmem:[#allocation10 + $0x38] sm:$0xff]
    %v2311 = vld [vmem:[#allocation10 + $0x40] sm:$0xff]
    %v2312 = vld [vmem:[#allocation10 + $0x48] sm:$0xff]
    %v2313 = vld [vmem:[#allocation10 + $0x50] sm:$0xff]
    %v2314 = vld [vmem:[#allocation10 + $0x58] sm:$0xff]
    %v2315 = vld [vmem:[#allocation10 + $0x60] sm:$0xff]
    %v2316 = vld [vmem:[#allocation10 + $0x68] sm:$0xff]
    %v2317 = vld [vmem:[#allocation10 + $0x70] sm:$0xff]
    %v2318 = vld [vmem:[#allocation10 + $0x78] sm:$0xff]
    %v2319 = vld [vmem:[%s8] sm:$0x1]
    %v2321 = vperm.slane %v2319, 0
    %2323 = vmatpush.msra.mxu0 %v2318
    %2324 = vmatpush.msra.mxu0 %v2317
    %2325 = vmatpush.msra.mxu0 %v2316
    %2326 = vmatpush.msra.mxu0 %v2315
    %2327 = vmatpush.msra.mxu0 %v2314
    %2328 = vmatpush.msra.mxu0 %v2313
    %2329 = vmatpush.msra.mxu0 %v2312
    %2330 = vmatpush.msra.mxu0 %v2311
    %2331 = vmatpush.msra.mxu0 %v2310
    %2332 = vmatpush.msra.mxu0 %v2309
    %2333 = vmatpush.msra.mxu0 %v2308
    %2334 = vmatpush.msra.mxu0 %v2307
    %2335 = vmatpush.msra.mxu0 %v2306
    %2336 = vmatpush.msra.mxu0 %v2305
    %2337 = vmatpush.msra.mxu0 %v2304
    %2338 = vmatpush.msra.mxu0 %v2303
    %2339 = vmatmul.f32.gmra.mxu0 %v2302
    %v2340 = vpop.f32.mrf.mxu0
    %v2341 = vadd.f32 %v2321, %v2340
    %2342 = vdwg.mxu0
    %2343 = vst [vmem:[%s9] sm:$0xff] %v2341
    // Predicated region
    $region50: #{lstm_model_forward.1} parent=1 // pred_check
      _
    $region51: #{lstm_model_forward.1} parent=1 // pred_check_branch
      %2345 = sbr.rel (0) target = $region53
    $region52: #{lstm_model_forward.1} parent=1 // pred_region
      _
    $region53: #{lstm_model_forward.1} parent=1 // pred_fallthru
      _
    // Predicated region
    $region54: #{lstm_model_forward.1} parent=1 // pred_check
      _
    $region55: #{lstm_model_forward.1} parent=1 // pred_check_branch
      %2347 = sbr.rel (0) target = $region57
    $region56: #{lstm_model_forward.1} parent=1 // pred_region
      _
    $region57: #{lstm_model_forward.1} parent=1 // pred_fallthru
      _
    %2348 = vsyncpa [#allocation7], 1
    %2349 = vsyncpa [#allocation9], 1

</llo_original>
